<compile_context>
chip_gen: v6e
topology: v6e:2x2x1
jax: 0.10.0
libtpu: 0.0.40
codegen_flags: <defaults>
</compile_context>

<pallas_src>
import functools

import jax
import jax.numpy as jnp
from jax import lax
from jax.experimental import pallas as pl
from jax.experimental.pallas import tpu as pltpu

# Deliberate precision choice (see header comment).
_DOT_PRECISION = lax.Precision.DEFAULT


def rk4_kernel(t_ref,                            # scalar prefetch: [num_steps] in SMEM
               x0_ref, z_ref,                    # [B, D], [B, Z]
               w1_ref, wz_ref, b1_ref, w2_ref,   # MLP params
               xh_ref,                           # output: [num_steps, B, D]
               *, dt_scale, num_steps):
    # x_history[0] = x0
    x0 = x0_ref[...].astype(jnp.float32)
    xh_ref[0] = x0.astype(xh_ref.dtype)

    if num_steps == 1:       # trace-time guard: never read t_ref[1] OOB
        return

    # dt = (t[1] - t[0]) * self.dt ; reused for all steps like the reference
    # (uniform time-grid assumption, identical to the PyTorch forward).
    dt = (t_ref[1] - t_ref[0]) * dt_scale
    half_dt = dt * 0.5
    dt_over_6 = dt * (1.0 / 6.0)

    # Conditioning is step-invariant: hoist z @ Wz + b1 out of the time loop.
    cond = (jnp.dot(z_ref[...].astype(jnp.float32), wz_ref[...],
                    preferred_element_type=jnp.float32,
                    precision=_DOT_PRECISION)
            + b1_ref[...])

    # Weights resident in VMEM/vregs across all steps (loaded once).
    w1 = w1_ref[...]
    w2 = w2_ref[...]

    def ode_func(cond_t, x):
        # cond_t already holds (z@Wz + b1 + t_s); single EUP tanh per call.
        h = jnp.tanh(jnp.dot(x, w1, preferred_element_type=jnp.float32,
                             precision=_DOT_PRECISION) + cond_t)
        return jnp.dot(h, w2, preferred_element_type=jnp.float32,
                       precision=_DOT_PRECISION)

    def step(i, x):
        # SMEM scalar read + the three conditioning shifts happen up front,
        # before the serial matmul/tanh chain (k2 and k3 share t_i + dt/2).
        t_i = t_ref[i - 1]
        cond_t1 = cond + t_i
        cond_th = cond + (t_i + half_dt)
        cond_tf = cond + (t_i + dt)

        k1 = ode_func(cond_t1, x)
        k2 = ode_func(cond_th, x + half_dt * k1)
        k3 = ode_func(cond_th, x + half_dt * k2)
        k4 = ode_func(cond_tf, x + dt * k3)
        x_new = x + dt_over_6 * (k1 + 2.0 * k2 + 2.0 * k3 + k4)
        x_new = jnp.tanh(x_new)                  # post_fn
        xh_ref[i] = x_new.astype(xh_ref.dtype)   # lane-dense (B, 128) store
        return x_new

    # Full unroll only while the trip count is short (LLO scheduler
    # visibility); partial unroll otherwise to cap i-mem / vreg pressure.
    unroll = True if num_steps <= 16 else 4
    lax.fori_loop(1, num_steps, step, x0, unroll=unroll)


def rk4_pallas(x0, z, t, params, dt_scale):
    """Returns x_history: [num_steps, B, D]."""
    w1, wz, b1, w2 = params
    B, D = x0.shape
    Z = z.shape[1]
    H = w1.shape[1]
    num_steps = t.shape[0]

    kernel = functools.partial(rk4_kernel, dt_scale=float(dt_scale),
                               num_steps=int(num_steps))

    grid_spec = pltpu.PrefetchScalarGridSpec(
        num_scalar_prefetch=1,
        grid=(1,),                                  # whole solve in one invocation
        in_specs=[
            pl.BlockSpec((B, D), lambda i, t: (0, 0)),   # x0
            pl.BlockSpec((B, Z), lambda i, t: (0, 0)),   # z
            pl.BlockSpec((D, H), lambda i, t: (0, 0)),   # W1
            pl.BlockSpec((Z, H), lambda i, t: (0, 0)),   # Wz
            pl.BlockSpec((1, H), lambda i, t: (0, 0)),   # b1 (padded (8,128) tile; intentional)
            pl.BlockSpec((H, D), lambda i, t: (0, 0)),   # W2
        ],
        out_specs=pl.BlockSpec((num_steps, B, D), lambda i, t: (0, 0, 0)),
    )

    return pl.pallas_call(
        kernel,
        out_shape=jax.ShapeDtypeStruct((num_steps, B, D), x0.dtype),
        grid_spec=grid_spec,
        compiler_params=pltpu.CompilerParams(
            dimension_semantics=("arbitrary",)),
    )(t, x0, z, w1, wz, b1, w2)


def rk4_reference(x0, z, t, params, dt_scale):
    """Pure-JAX reference mirroring the PyTorch forward semantics."""
    w1, wz, b1, w2 = params

    def ode_func(t_s, x):
        h = jnp.tanh(x @ w1 + z @ wz + b1 + t_s)
        return h @ w2

    num_steps = t.shape[0]
    dt = (t[1] - t[0]) * dt_scale
    hist = [x0]
    x = x0
    for i in range(1, num_steps):
        t_i = t[i - 1]
        k1 = ode_func(t_i, x)
        k2 = ode_func(t_i + dt / 2, x + dt * k1 / 2)
        k3 = ode_func(t_i + dt / 2, x + dt * k2 / 2)
        k4 = ode_func(t_i + dt, x + dt * k3)
        x = x + dt / 6 * (k1 + 2 * k2 + 2 * k3 + k4)
        x = jnp.tanh(x)
        hist.append(x)
    return jnp.stack(hist, axis=0)


if __name__ == "__main__":
    B, D, Z, H = 8, 128, 128, 128
    num_steps = 8
    dt_scale = 0.1

    key = jax.random.PRNGKey(0)
    k0, k1, k2, k3, k4, k5 = jax.random.split(key, 6)
    x0 = jax.random.normal(k0, (B, D), dtype=jnp.float32)
    z = jax.random.normal(k1, (B, Z), dtype=jnp.float32)
    t = jnp.linspace(0.0, 1.0, num_steps, dtype=jnp.float32)

    w1 = jax.random.normal(k2, (D, H), dtype=jnp.float32) * 0.05
    wz = jax.random.normal(k3, (Z, H), dtype=jnp.float32) * 0.05
    b1 = jax.random.normal(k4, (1, H), dtype=jnp.float32) * 0.05
    w2 = jax.random.normal(k5, (H, D), dtype=jnp.float32) * 0.05
    params = (w1, wz, b1, w2)

    out = rk4_pallas(x0, z, t, params, dt_scale)
    out = jax.block_until_ready(out)

    ref = rk4_reference(x0, z, t, params, dt_scale)
    assert out.shape == (num_steps, B, D)
    assert jnp.allclose(out, ref, atol=1e-4, rtol=1e-4), "mismatch vs reference"

    print("KERNEL_OK")
</pallas_src>

<mosaic_0001>
module attributes {stable_mosaic.version = 11 : i64} {
  func.func @rk4_kernel(%arg0: i32, %arg1: memref<8xf32, #tpu.memory_space<smem>>, %arg2: memref<8x128xf32, #tpu.memory_space<vmem>>, %arg3: memref<8x128xf32, #tpu.memory_space<vmem>>, %arg4: memref<128x128xf32, #tpu.memory_space<vmem>>, %arg5: memref<128x128xf32, #tpu.memory_space<vmem>>, %arg6: memref<1x128xf32, #tpu.memory_space<vmem>>, %arg7: memref<128x128xf32, #tpu.memory_space<vmem>>, %arg8: memref<8x8x128xf32, #tpu.memory_space<vmem>>) attributes {dimension_semantics = [#tpu.dimension_semantics<arbitrary>], iteration_bounds = array<i64: 1>, scalar_prefetch = 1 : i64, scratch_operands = 0 : i64, tpu.core_type = #tpu.core_type<tc>, window_params = [{pipeline_mode = #tpu.pipeline_mode<synchronous>, transform_indices = @transform_0, window_bounds = array<i64: 8, 128>}, {pipeline_mode = #tpu.pipeline_mode<synchronous>, transform_indices = @transform_1, window_bounds = array<i64: 8, 128>}, {pipeline_mode = #tpu.pipeline_mode<synchronous>, transform_indices = @transform_2, window_bounds = array<i64: 128, 128>}, {pipeline_mode = #tpu.pipeline_mode<synchronous>, transform_indices = @transform_3, window_bounds = array<i64: 128, 128>}, {pipeline_mode = #tpu.pipeline_mode<synchronous>, transform_indices = @transform_4, window_bounds = array<i64: 1, 128>}, {pipeline_mode = #tpu.pipeline_mode<synchronous>, transform_indices = @transform_5, window_bounds = array<i64: 128, 128>}, {pipeline_mode = #tpu.pipeline_mode<synchronous>, transform_indices = @transform_6, window_bounds = array<i64: 8, 8, 128>}]} {
    %c0 = arith.constant 0 : index
    %c0_0 = arith.constant 0 : index
    %0 = vector.load %arg2[%c0, %c0_0] : memref<8x128xf32, #tpu.memory_space<vmem>>, vector<8x128xf32>
    %c0_1 = arith.constant 0 : index
    %c0_2 = arith.constant 0 : index
    %c0_3 = arith.constant 0 : index
    %1 = vector.load %arg8[%c0_1, %c0_2, %c0_3] : memref<8x8x128xf32, #tpu.memory_space<vmem>>, vector<1x8x128xf32>
    %2 = vector.shape_cast %1 : vector<1x8x128xf32> to vector<8x128xf32>
    %3 = vector.shape_cast %0 : vector<8x128xf32> to vector<1x8x128xf32>
    tpu.vector_store %arg8[%c0_1, %c0_2, %c0_3], %3 {strides = array<i32>} : memref<8x8x128xf32, #tpu.memory_space<vmem>>, vector<1x8x128xf32>,
    %c1 = arith.constant 1 : index
    %4 = memref.load %arg1[%c1] : memref<8xf32, #tpu.memory_space<smem>>
    %c0_4 = arith.constant 0 : index
    %5 = memref.load %arg1[%c0_4] : memref<8xf32, #tpu.memory_space<smem>>
    %6 = arith.subf %4, %5 : f32
    %cst = arith.constant 1.000000e-01 : f32
    %7 = arith.mulf %6, %cst : f32
    %cst_5 = arith.constant 5.000000e-01 : f32
    %8 = arith.mulf %7, %cst_5 : f32
    %cst_6 = arith.constant 0.166666672 : f32
    %9 = arith.mulf %7, %cst_6 : f32
    %c0_7 = arith.constant 0 : index
    %c0_8 = arith.constant 0 : index
    %10 = vector.load %arg3[%c0_7, %c0_8] : memref<8x128xf32, #tpu.memory_space<vmem>>, vector<8x128xf32>
    %c0_9 = arith.constant 0 : index
    %c0_10 = arith.constant 0 : index
    %11 = vector.load %arg5[%c0_9, %c0_10] : memref<128x128xf32, #tpu.memory_space<vmem>>, vector<128x128xf32>
    %cst_11 = arith.constant dense<0.000000e+00> : vector<8x128xf32>
    %12 = tpu.matmul %10, %11, %cst_11 {dimension_numbers = #tpu.dot_dimension_numbers<[1], [0], [0], [1], [0, 0, 1, 1], [], []>} : vector<8x128xf32>, vector<128x128xf32>, vector<8x128xf32> -> vector<8x128xf32>
    %c0_12 = arith.constant 0 : index
    %c0_13 = arith.constant 0 : index
    %13 = vector.load %arg6[%c0_12, %c0_13] : memref<1x128xf32, #tpu.memory_space<vmem>>, vector<1x128xf32>
    %14 = vector.broadcast %13 : vector<1x128xf32> to vector<8x128xf32>
    %15 = arith.addf %12, %14 : vector<8x128xf32>
    %c0_14 = arith.constant 0 : index
    %c0_15 = arith.constant 0 : index
    %16 = vector.load %arg4[%c0_14, %c0_15] : memref<128x128xf32, #tpu.memory_space<vmem>>, vector<128x128xf32>
    %c0_16 = arith.constant 0 : index
    %c0_17 = arith.constant 0 : index
    %17 = vector.load %arg7[%c0_16, %c0_17] : memref<128x128xf32, #tpu.memory_space<vmem>>, vector<128x128xf32>
    %c1_i32 = arith.constant 1 : i32
    %c1_i32_18 = arith.constant 1 : i32
    %18 = arith.subi %c1_i32, %c1_i32_18 : i32
    %19 = arith.index_cast %18 : i32 to index
    %20 = memref.load %arg1[%19] : memref<8xf32, #tpu.memory_space<smem>>
    %21 = vector.broadcast %20 : f32 to vector<8x128xf32>
    %22 = arith.addf %15, %21 : vector<8x128xf32>
    %23 = arith.addf %20, %8 : f32
    %24 = vector.broadcast %23 : f32 to vector<8x128xf32>
    %25 = arith.addf %15, %24 : vector<8x128xf32>
    %26 = arith.addf %20, %7 : f32
    %27 = vector.broadcast %26 : f32 to vector<8x128xf32>
    %28 = arith.addf %15, %27 : vector<8x128xf32>
    %cst_19 = arith.constant dense<0.000000e+00> : vector<8x128xf32>
    %29 = tpu.matmul %0, %16, %cst_19 {dimension_numbers = #tpu.dot_dimension_numbers<[1], [0], [0], [1], [0, 0, 1, 1], [], []>} : vector<8x128xf32>, vector<128x128xf32>, vector<8x128xf32> -> vector<8x128xf32>
    %30 = arith.addf %29, %22 : vector<8x128xf32>
    %31 = math.tanh %30 : vector<8x128xf32>
    %cst_20 = arith.constant dense<0.000000e+00> : vector<8x128xf32>
    %32 = tpu.matmul %31, %17, %cst_20 {dimension_numbers = #tpu.dot_dimension_numbers<[1], [0], [0], [1], [0, 0, 1, 1], [], []>} : vector<8x128xf32>, vector<128x128xf32>, vector<8x128xf32> -> vector<8x128xf32>
    %33 = vector.broadcast %8 : f32 to vector<8x128xf32>
    %34 = arith.mulf %33, %32 : vector<8x128xf32>
    %35 = arith.addf %0, %34 : vector<8x128xf32>
    %cst_21 = arith.constant dense<0.000000e+00> : vector<8x128xf32>
    %36 = tpu.matmul %35, %16, %cst_21 {dimension_numbers = #tpu.dot_dimension_numbers<[1], [0], [0], [1], [0, 0, 1, 1], [], []>} : vector<8x128xf32>, vector<128x128xf32>, vector<8x128xf32> -> vector<8x128xf32>
    %37 = arith.addf %36, %25 : vector<8x128xf32>
    %38 = math.tanh %37 : vector<8x128xf32>
    %cst_22 = arith.constant dense<0.000000e+00> : vector<8x128xf32>
    %39 = tpu.matmul %38, %17, %cst_22 {dimension_numbers = #tpu.dot_dimension_numbers<[1], [0], [0], [1], [0, 0, 1, 1], [], []>} : vector<8x128xf32>, vector<128x128xf32>, vector<8x128xf32> -> vector<8x128xf32>
    %40 = vector.broadcast %8 : f32 to vector<8x128xf32>
    %41 = arith.mulf %40, %39 : vector<8x128xf32>
    %42 = arith.addf %0, %41 : vector<8x128xf32>
    %cst_23 = arith.constant dense<0.000000e+00> : vector<8x128xf32>
    %43 = tpu.matmul %42, %16, %cst_23 {dimension_numbers = #tpu.dot_dimension_numbers<[1], [0], [0], [1], [0, 0, 1, 1], [], []>} : vector<8x128xf32>, vector<128x128xf32>, vector<8x128xf32> -> vector<8x128xf32>
    %44 = arith.addf %43, %25 : vector<8x128xf32>
    %45 = math.tanh %44 : vector<8x128xf32>
    %cst_24 = arith.constant dense<0.000000e+00> : vector<8x128xf32>
    %46 = tpu.matmul %45, %17, %cst_24 {dimension_numbers = #tpu.dot_dimension_numbers<[1], [0], [0], [1], [0, 0, 1, 1], [], []>} : vector<8x128xf32>, vector<128x128xf32>, vector<8x128xf32> -> vector<8x128xf32>
    %47 = vector.broadcast %7 : f32 to vector<8x128xf32>
    %48 = arith.mulf %47, %46 : vector<8x128xf32>
    %49 = arith.addf %0, %48 : vector<8x128xf32>
    %cst_25 = arith.constant dense<0.000000e+00> : vector<8x128xf32>
    %50 = tpu.matmul %49, %16, %cst_25 {dimension_numbers = #tpu.dot_dimension_numbers<[1], [0], [0], [1], [0, 0, 1, 1], [], []>} : vector<8x128xf32>, vector<128x128xf32>, vector<8x128xf32> -> vector<8x128xf32>
    %51 = arith.addf %50, %28 : vector<8x128xf32>
    %52 = math.tanh %51 : vector<8x128xf32>
    %cst_26 = arith.constant dense<0.000000e+00> : vector<8x128xf32>
    %53 = tpu.matmul %52, %17, %cst_26 {dimension_numbers = #tpu.dot_dimension_numbers<[1], [0], [0], [1], [0, 0, 1, 1], [], []>} : vector<8x128xf32>, vector<128x128xf32>, vector<8x128xf32> -> vector<8x128xf32>
    %cst_27 = arith.constant 2.000000e+00 : f32
    %54 = vector.broadcast %cst_27 : f32 to vector<8x128xf32>
    %55 = arith.mulf %54, %39 : vector<8x128xf32>
    %56 = arith.addf %32, %55 : vector<8x128xf32>
    %cst_28 = arith.constant 2.000000e+00 : f32
    %57 = vector.broadcast %cst_28 : f32 to vector<8x128xf32>
    %58 = arith.mulf %57, %46 : vector<8x128xf32>
    %59 = arith.addf %56, %58 : vector<8x128xf32>
    %60 = arith.addf %59, %53 : vector<8x128xf32>
    %61 = vector.broadcast %9 : f32 to vector<8x128xf32>
    %62 = arith.mulf %61, %60 : vector<8x128xf32>
    %63 = arith.addf %0, %62 : vector<8x128xf32>
    %64 = math.tanh %63 : vector<8x128xf32>
    %65 = arith.index_cast %c1_i32 : i32 to index
    %c0_29 = arith.constant 0 : index
    %c0_30 = arith.constant 0 : index
    %66 = vector.load %arg8[%65, %c0_29, %c0_30] : memref<8x8x128xf32, #tpu.memory_space<vmem>>, vector<1x8x128xf32>
    %67 = vector.shape_cast %66 : vector<1x8x128xf32> to vector<8x128xf32>
    %68 = vector.shape_cast %64 : vector<8x128xf32> to vector<1x8x128xf32>
    tpu.vector_store %arg8[%65, %c0_29, %c0_30], %68 {strides = array<i32>} : memref<8x8x128xf32, #tpu.memory_space<vmem>>, vector<1x8x128xf32>,
    %c2_i32 = arith.constant 2 : i32
    %c1_i32_31 = arith.constant 1 : i32
    %69 = arith.subi %c2_i32, %c1_i32_31 : i32
    %70 = arith.index_cast %69 : i32 to index
    %71 = memref.load %arg1[%70] : memref<8xf32, #tpu.memory_space<smem>>
    %72 = vector.broadcast %71 : f32 to vector<8x128xf32>
    %73 = arith.addf %15, %72 : vector<8x128xf32>
    %74 = arith.addf %71, %8 : f32
    %75 = vector.broadcast %74 : f32 to vector<8x128xf32>
    %76 = arith.addf %15, %75 : vector<8x128xf32>
    %77 = arith.addf %71, %7 : f32
    %78 = vector.broadcast %77 : f32 to vector<8x128xf32>
    %79 = arith.addf %15, %78 : vector<8x128xf32>
    %cst_32 = arith.constant dense<0.000000e+00> : vector<8x128xf32>
    %80 = tpu.matmul %64, %16, %cst_32 {dimension_numbers = #tpu.dot_dimension_numbers<[1], [0], [0], [1], [0, 0, 1, 1], [], []>} : vector<8x128xf32>, vector<128x128xf32>, vector<8x128xf32> -> vector<8x128xf32>
    %81 = arith.addf %80, %73 : vector<8x128xf32>
    %82 = math.tanh %81 : vector<8x128xf32>
    %cst_33 = arith.constant dense<0.000000e+00> : vector<8x128xf32>
    %83 = tpu.matmul %82, %17, %cst_33 {dimension_numbers = #tpu.dot_dimension_numbers<[1], [0], [0], [1], [0, 0, 1, 1], [], []>} : vector<8x128xf32>, vector<128x128xf32>, vector<8x128xf32> -> vector<8x128xf32>
    %84 = vector.broadcast %8 : f32 to vector<8x128xf32>
    %85 = arith.mulf %84, %83 : vector<8x128xf32>
    %86 = arith.addf %64, %85 : vector<8x128xf32>
    %cst_34 = arith.constant dense<0.000000e+00> : vector<8x128xf32>
    %87 = tpu.matmul %86, %16, %cst_34 {dimension_numbers = #tpu.dot_dimension_numbers<[1], [0], [0], [1], [0, 0, 1, 1], [], []>} : vector<8x128xf32>, vector<128x128xf32>, vector<8x128xf32> -> vector<8x128xf32>
    %88 = arith.addf %87, %76 : vector<8x128xf32>
    %89 = math.tanh %88 : vector<8x128xf32>
    %cst_35 = arith.constant dense<0.000000e+00> : vector<8x128xf32>
    %90 = tpu.matmul %89, %17, %cst_35 {dimension_numbers = #tpu.dot_dimension_numbers<[1], [0], [0], [1], [0, 0, 1, 1], [], []>} : vector<8x128xf32>, vector<128x128xf32>, vector<8x128xf32> -> vector<8x128xf32>
    %91 = vector.broadcast %8 : f32 to vector<8x128xf32>
    %92 = arith.mulf %91, %90 : vector<8x128xf32>
    %93 = arith.addf %64, %92 : vector<8x128xf32>
    %cst_36 = arith.constant dense<0.000000e+00> : vector<8x128xf32>
    %94 = tpu.matmul %93, %16, %cst_36 {dimension_numbers = #tpu.dot_dimension_numbers<[1], [0], [0], [1], [0, 0, 1, 1], [], []>} : vector<8x128xf32>, vector<128x128xf32>, vector<8x128xf32> -> vector<8x128xf32>
    %95 = arith.addf %94, %76 : vector<8x128xf32>
    %96 = math.tanh %95 : vector<8x128xf32>
    %cst_37 = arith.constant dense<0.000000e+00> : vector<8x128xf32>
    %97 = tpu.matmul %96, %17, %cst_37 {dimension_numbers = #tpu.dot_dimension_numbers<[1], [0], [0], [1], [0, 0, 1, 1], [], []>} : vector<8x128xf32>, vector<128x128xf32>, vector<8x128xf32> -> vector<8x128xf32>
    %98 = vector.broadcast %7 : f32 to vector<8x128xf32>
    %99 = arith.mulf %98, %97 : vector<8x128xf32>
    %100 = arith.addf %64, %99 : vector<8x128xf32>
    %cst_38 = arith.constant dense<0.000000e+00> : vector<8x128xf32>
    %101 = tpu.matmul %100, %16, %cst_38 {dimension_numbers = #tpu.dot_dimension_numbers<[1], [0], [0], [1], [0, 0, 1, 1], [], []>} : vector<8x128xf32>, vector<128x128xf32>, vector<8x128xf32> -> vector<8x128xf32>
    %102 = arith.addf %101, %79 : vector<8x128xf32>
    %103 = math.tanh %102 : vector<8x128xf32>
    %cst_39 = arith.constant dense<0.000000e+00> : vector<8x128xf32>
    %104 = tpu.matmul %103, %17, %cst_39 {dimension_numbers = #tpu.dot_dimension_numbers<[1], [0], [0], [1], [0, 0, 1, 1], [], []>} : vector<8x128xf32>, vector<128x128xf32>, vector<8x128xf32> -> vector<8x128xf32>
    %cst_40 = arith.constant 2.000000e+00 : f32
    %105 = vector.broadcast %cst_40 : f32 to vector<8x128xf32>
    %106 = arith.mulf %105, %90 : vector<8x128xf32>
    %107 = arith.addf %83, %106 : vector<8x128xf32>
    %cst_41 = arith.constant 2.000000e+00 : f32
    %108 = vector.broadcast %cst_41 : f32 to vector<8x128xf32>
    %109 = arith.mulf %108, %97 : vector<8x128xf32>
    %110 = arith.addf %107, %109 : vector<8x128xf32>
    %111 = arith.addf %110, %104 : vector<8x128xf32>
    %112 = vector.broadcast %9 : f32 to vector<8x128xf32>
    %113 = arith.mulf %112, %111 : vector<8x128xf32>
    %114 = arith.addf %64, %113 : vector<8x128xf32>
    %115 = math.tanh %114 : vector<8x128xf32>
    %116 = arith.index_cast %c2_i32 : i32 to index
    %c0_42 = arith.constant 0 : index
    %c0_43 = arith.constant 0 : index
    %117 = vector.load %arg8[%116, %c0_42, %c0_43] : memref<8x8x128xf32, #tpu.memory_space<vmem>>, vector<1x8x128xf32>
    %118 = vector.shape_cast %117 : vector<1x8x128xf32> to vector<8x128xf32>
    %119 = vector.shape_cast %115 : vector<8x128xf32> to vector<1x8x128xf32>
    tpu.vector_store %arg8[%116, %c0_42, %c0_43], %119 {strides = array<i32>} : memref<8x8x128xf32, #tpu.memory_space<vmem>>, vector<1x8x128xf32>,
    %c3_i32 = arith.constant 3 : i32
    %c1_i32_44 = arith.constant 1 : i32
    %120 = arith.subi %c3_i32, %c1_i32_44 : i32
    %121 = arith.index_cast %120 : i32 to index
    %122 = memref.load %arg1[%121] : memref<8xf32, #tpu.memory_space<smem>>
    %123 = vector.broadcast %122 : f32 to vector<8x128xf32>
    %124 = arith.addf %15, %123 : vector<8x128xf32>
    %125 = arith.addf %122, %8 : f32
    %126 = vector.broadcast %125 : f32 to vector<8x128xf32>
    %127 = arith.addf %15, %126 : vector<8x128xf32>
    %128 = arith.addf %122, %7 : f32
    %129 = vector.broadcast %128 : f32 to vector<8x128xf32>
    %130 = arith.addf %15, %129 : vector<8x128xf32>
    %cst_45 = arith.constant dense<0.000000e+00> : vector<8x128xf32>
    %131 = tpu.matmul %115, %16, %cst_45 {dimension_numbers = #tpu.dot_dimension_numbers<[1], [0], [0], [1], [0, 0, 1, 1], [], []>} : vector<8x128xf32>, vector<128x128xf32>, vector<8x128xf32> -> vector<8x128xf32>
    %132 = arith.addf %131, %124 : vector<8x128xf32>
    %133 = math.tanh %132 : vector<8x128xf32>
    %cst_46 = arith.constant dense<0.000000e+00> : vector<8x128xf32>
    %134 = tpu.matmul %133, %17, %cst_46 {dimension_numbers = #tpu.dot_dimension_numbers<[1], [0], [0], [1], [0, 0, 1, 1], [], []>} : vector<8x128xf32>, vector<128x128xf32>, vector<8x128xf32> -> vector<8x128xf32>
    %135 = vector.broadcast %8 : f32 to vector<8x128xf32>
    %136 = arith.mulf %135, %134 : vector<8x128xf32>
    %137 = arith.addf %115, %136 : vector<8x128xf32>
    %cst_47 = arith.constant dense<0.000000e+00> : vector<8x128xf32>
    %138 = tpu.matmul %137, %16, %cst_47 {dimension_numbers = #tpu.dot_dimension_numbers<[1], [0], [0], [1], [0, 0, 1, 1], [], []>} : vector<8x128xf32>, vector<128x128xf32>, vector<8x128xf32> -> vector<8x128xf32>
    %139 = arith.addf %138, %127 : vector<8x128xf32>
    %140 = math.tanh %139 : vector<8x128xf32>
    %cst_48 = arith.constant dense<0.000000e+00> : vector<8x128xf32>
    %141 = tpu.matmul %140, %17, %cst_48 {dimension_numbers = #tpu.dot_dimension_numbers<[1], [0], [0], [1], [0, 0, 1, 1], [], []>} : vector<8x128xf32>, vector<128x128xf32>, vector<8x128xf32> -> vector<8x128xf32>
    %142 = vector.broadcast %8 : f32 to vector<8x128xf32>
    %143 = arith.mulf %142, %141 : vector<8x128xf32>
    %144 = arith.addf %115, %143 : vector<8x128xf32>
    %cst_49 = arith.constant dense<0.000000e+00> : vector<8x128xf32>
    %145 = tpu.matmul %144, %16, %cst_49 {dimension_numbers = #tpu.dot_dimension_numbers<[1], [0], [0], [1], [0, 0, 1, 1], [], []>} : vector<8x128xf32>, vector<128x128xf32>, vector<8x128xf32> -> vector<8x128xf32>
    %146 = arith.addf %145, %127 : vector<8x128xf32>
    %147 = math.tanh %146 : vector<8x128xf32>
    %cst_50 = arith.constant dense<0.000000e+00> : vector<8x128xf32>
    %148 = tpu.matmul %147, %17, %cst_50 {dimension_numbers = #tpu.dot_dimension_numbers<[1], [0], [0], [1], [0, 0, 1, 1], [], []>} : vector<8x128xf32>, vector<128x128xf32>, vector<8x128xf32> -> vector<8x128xf32>
    %149 = vector.broadcast %7 : f32 to vector<8x128xf32>
    %150 = arith.mulf %149, %148 : vector<8x128xf32>
    %151 = arith.addf %115, %150 : vector<8x128xf32>
    %cst_51 = arith.constant dense<0.000000e+00> : vector<8x128xf32>
    %152 = tpu.matmul %151, %16, %cst_51 {dimension_numbers = #tpu.dot_dimension_numbers<[1], [0], [0], [1], [0, 0, 1, 1], [], []>} : vector<8x128xf32>, vector<128x128xf32>, vector<8x128xf32> -> vector<8x128xf32>
    %153 = arith.addf %152, %130 : vector<8x128xf32>
    %154 = math.tanh %153 : vector<8x128xf32>
    %cst_52 = arith.constant dense<0.000000e+00> : vector<8x128xf32>
    %155 = tpu.matmul %154, %17, %cst_52 {dimension_numbers = #tpu.dot_dimension_numbers<[1], [0], [0], [1], [0, 0, 1, 1], [], []>} : vector<8x128xf32>, vector<128x128xf32>, vector<8x128xf32> -> vector<8x128xf32>
    %cst_53 = arith.constant 2.000000e+00 : f32
    %156 = vector.broadcast %cst_53 : f32 to vector<8x128xf32>
    %157 = arith.mulf %156, %141 : vector<8x128xf32>
    %158 = arith.addf %134, %157 : vector<8x128xf32>
    %cst_54 = arith.constant 2.000000e+00 : f32
    %159 = vector.broadcast %cst_54 : f32 to vector<8x128xf32>
    %160 = arith.mulf %159, %148 : vector<8x128xf32>
    %161 = arith.addf %158, %160 : vector<8x128xf32>
    %162 = arith.addf %161, %155 : vector<8x128xf32>
    %163 = vector.broadcast %9 : f32 to vector<8x128xf32>
    %164 = arith.mulf %163, %162 : vector<8x128xf32>
    %165 = arith.addf %115, %164 : vector<8x128xf32>
    %166 = math.tanh %165 : vector<8x128xf32>
    %167 = arith.index_cast %c3_i32 : i32 to index
    %c0_55 = arith.constant 0 : index
    %c0_56 = arith.constant 0 : index
    %168 = vector.load %arg8[%167, %c0_55, %c0_56] : memref<8x8x128xf32, #tpu.memory_space<vmem>>, vector<1x8x128xf32>
    %169 = vector.shape_cast %168 : vector<1x8x128xf32> to vector<8x128xf32>
    %170 = vector.shape_cast %166 : vector<8x128xf32> to vector<1x8x128xf32>
    tpu.vector_store %arg8[%167, %c0_55, %c0_56], %170 {strides = array<i32>} : memref<8x8x128xf32, #tpu.memory_space<vmem>>, vector<1x8x128xf32>,
    %c4_i32 = arith.constant 4 : i32
    %c1_i32_57 = arith.constant 1 : i32
    %171 = arith.subi %c4_i32, %c1_i32_57 : i32
    %172 = arith.index_cast %171 : i32 to index
    %173 = memref.load %arg1[%172] : memref<8xf32, #tpu.memory_space<smem>>
    %174 = vector.broadcast %173 : f32 to vector<8x128xf32>
    %175 = arith.addf %15, %174 : vector<8x128xf32>
    %176 = arith.addf %173, %8 : f32
    %177 = vector.broadcast %176 : f32 to vector<8x128xf32>
    %178 = arith.addf %15, %177 : vector<8x128xf32>
    %179 = arith.addf %173, %7 : f32
    %180 = vector.broadcast %179 : f32 to vector<8x128xf32>
    %181 = arith.addf %15, %180 : vector<8x128xf32>
    %cst_58 = arith.constant dense<0.000000e+00> : vector<8x128xf32>
    %182 = tpu.matmul %166, %16, %cst_58 {dimension_numbers = #tpu.dot_dimension_numbers<[1], [0], [0], [1], [0, 0, 1, 1], [], []>} : vector<8x128xf32>, vector<128x128xf32>, vector<8x128xf32> -> vector<8x128xf32>
    %183 = arith.addf %182, %175 : vector<8x128xf32>
    %184 = math.tanh %183 : vector<8x128xf32>
    %cst_59 = arith.constant dense<0.000000e+00> : vector<8x128xf32>
    %185 = tpu.matmul %184, %17, %cst_59 {dimension_numbers = #tpu.dot_dimension_numbers<[1], [0], [0], [1], [0, 0, 1, 1], [], []>} : vector<8x128xf32>, vector<128x128xf32>, vector<8x128xf32> -> vector<8x128xf32>
    %186 = vector.broadcast %8 : f32 to vector<8x128xf32>
    %187 = arith.mulf %186, %185 : vector<8x128xf32>
    %188 = arith.addf %166, %187 : vector<8x128xf32>
    %cst_60 = arith.constant dense<0.000000e+00> : vector<8x128xf32>
    %189 = tpu.matmul %188, %16, %cst_60 {dimension_numbers = #tpu.dot_dimension_numbers<[1], [0], [0], [1], [0, 0, 1, 1], [], []>} : vector<8x128xf32>, vector<128x128xf32>, vector<8x128xf32> -> vector<8x128xf32>
    %190 = arith.addf %189, %178 : vector<8x128xf32>
    %191 = math.tanh %190 : vector<8x128xf32>
    %cst_61 = arith.constant dense<0.000000e+00> : vector<8x128xf32>
    %192 = tpu.matmul %191, %17, %cst_61 {dimension_numbers = #tpu.dot_dimension_numbers<[1], [0], [0], [1], [0, 0, 1, 1], [], []>} : vector<8x128xf32>, vector<128x128xf32>, vector<8x128xf32> -> vector<8x128xf32>
    %193 = vector.broadcast %8 : f32 to vector<8x128xf32>
    %194 = arith.mulf %193, %192 : vector<8x128xf32>
    %195 = arith.addf %166, %194 : vector<8x128xf32>
    %cst_62 = arith.constant dense<0.000000e+00> : vector<8x128xf32>
    %196 = tpu.matmul %195, %16, %cst_62 {dimension_numbers = #tpu.dot_dimension_numbers<[1], [0], [0], [1], [0, 0, 1, 1], [], []>} : vector<8x128xf32>, vector<128x128xf32>, vector<8x128xf32> -> vector<8x128xf32>
    %197 = arith.addf %196, %178 : vector<8x128xf32>
    %198 = math.tanh %197 : vector<8x128xf32>
    %cst_63 = arith.constant dense<0.000000e+00> : vector<8x128xf32>
    %199 = tpu.matmul %198, %17, %cst_63 {dimension_numbers = #tpu.dot_dimension_numbers<[1], [0], [0], [1], [0, 0, 1, 1], [], []>} : vector<8x128xf32>, vector<128x128xf32>, vector<8x128xf32> -> vector<8x128xf32>
    %200 = vector.broadcast %7 : f32 to vector<8x128xf32>
    %201 = arith.mulf %200, %199 : vector<8x128xf32>
    %202 = arith.addf %166, %201 : vector<8x128xf32>
    %cst_64 = arith.constant dense<0.000000e+00> : vector<8x128xf32>
    %203 = tpu.matmul %202, %16, %cst_64 {dimension_numbers = #tpu.dot_dimension_numbers<[1], [0], [0], [1], [0, 0, 1, 1], [], []>} : vector<8x128xf32>, vector<128x128xf32>, vector<8x128xf32> -> vector<8x128xf32>
    %204 = arith.addf %203, %181 : vector<8x128xf32>
    %205 = math.tanh %204 : vector<8x128xf32>
    %cst_65 = arith.constant dense<0.000000e+00> : vector<8x128xf32>
    %206 = tpu.matmul %205, %17, %cst_65 {dimension_numbers = #tpu.dot_dimension_numbers<[1], [0], [0], [1], [0, 0, 1, 1], [], []>} : vector<8x128xf32>, vector<128x128xf32>, vector<8x128xf32> -> vector<8x128xf32>
    %cst_66 = arith.constant 2.000000e+00 : f32
    %207 = vector.broadcast %cst_66 : f32 to vector<8x128xf32>
    %208 = arith.mulf %207, %192 : vector<8x128xf32>
    %209 = arith.addf %185, %208 : vector<8x128xf32>
    %cst_67 = arith.constant 2.000000e+00 : f32
    %210 = vector.broadcast %cst_67 : f32 to vector<8x128xf32>
    %211 = arith.mulf %210, %199 : vector<8x128xf32>
    %212 = arith.addf %209, %211 : vector<8x128xf32>
    %213 = arith.addf %212, %206 : vector<8x128xf32>
    %214 = vector.broadcast %9 : f32 to vector<8x128xf32>
    %215 = arith.mulf %214, %213 : vector<8x128xf32>
    %216 = arith.addf %166, %215 : vector<8x128xf32>
    %217 = math.tanh %216 : vector<8x128xf32>
    %218 = arith.index_cast %c4_i32 : i32 to index
    %c0_68 = arith.constant 0 : index
    %c0_69 = arith.constant 0 : index
    %219 = vector.load %arg8[%218, %c0_68, %c0_69] : memref<8x8x128xf32, #tpu.memory_space<vmem>>, vector<1x8x128xf32>
    %220 = vector.shape_cast %219 : vector<1x8x128xf32> to vector<8x128xf32>
    %221 = vector.shape_cast %217 : vector<8x128xf32> to vector<1x8x128xf32>
    tpu.vector_store %arg8[%218, %c0_68, %c0_69], %221 {strides = array<i32>} : memref<8x8x128xf32, #tpu.memory_space<vmem>>, vector<1x8x128xf32>,
    %c5_i32 = arith.constant 5 : i32
    %c1_i32_70 = arith.constant 1 : i32
    %222 = arith.subi %c5_i32, %c1_i32_70 : i32
    %223 = arith.index_cast %222 : i32 to index
    %224 = memref.load %arg1[%223] : memref<8xf32, #tpu.memory_space<smem>>
    %225 = vector.broadcast %224 : f32 to vector<8x128xf32>
    %226 = arith.addf %15, %225 : vector<8x128xf32>
    %227 = arith.addf %224, %8 : f32
    %228 = vector.broadcast %227 : f32 to vector<8x128xf32>
    %229 = arith.addf %15, %228 : vector<8x128xf32>
    %230 = arith.addf %224, %7 : f32
    %231 = vector.broadcast %230 : f32 to vector<8x128xf32>
    %232 = arith.addf %15, %231 : vector<8x128xf32>
    %cst_71 = arith.constant dense<0.000000e+00> : vector<8x128xf32>
    %233 = tpu.matmul %217, %16, %cst_71 {dimension_numbers = #tpu.dot_dimension_numbers<[1], [0], [0], [1], [0, 0, 1, 1], [], []>} : vector<8x128xf32>, vector<128x128xf32>, vector<8x128xf32> -> vector<8x128xf32>
    %234 = arith.addf %233, %226 : vector<8x128xf32>
    %235 = math.tanh %234 : vector<8x128xf32>
    %cst_72 = arith.constant dense<0.000000e+00> : vector<8x128xf32>
    %236 = tpu.matmul %235, %17, %cst_72 {dimension_numbers = #tpu.dot_dimension_numbers<[1], [0], [0], [1], [0, 0, 1, 1], [], []>} : vector<8x128xf32>, vector<128x128xf32>, vector<8x128xf32> -> vector<8x128xf32>
    %237 = vector.broadcast %8 : f32 to vector<8x128xf32>
    %238 = arith.mulf %237, %236 : vector<8x128xf32>
    %239 = arith.addf %217, %238 : vector<8x128xf32>
    %cst_73 = arith.constant dense<0.000000e+00> : vector<8x128xf32>
    %240 = tpu.matmul %239, %16, %cst_73 {dimension_numbers = #tpu.dot_dimension_numbers<[1], [0], [0], [1], [0, 0, 1, 1], [], []>} : vector<8x128xf32>, vector<128x128xf32>, vector<8x128xf32> -> vector<8x128xf32>
    %241 = arith.addf %240, %229 : vector<8x128xf32>
    %242 = math.tanh %241 : vector<8x128xf32>
    %cst_74 = arith.constant dense<0.000000e+00> : vector<8x128xf32>
    %243 = tpu.matmul %242, %17, %cst_74 {dimension_numbers = #tpu.dot_dimension_numbers<[1], [0], [0], [1], [0, 0, 1, 1], [], []>} : vector<8x128xf32>, vector<128x128xf32>, vector<8x128xf32> -> vector<8x128xf32>
    %244 = vector.broadcast %8 : f32 to vector<8x128xf32>
    %245 = arith.mulf %244, %243 : vector<8x128xf32>
    %246 = arith.addf %217, %245 : vector<8x128xf32>
    %cst_75 = arith.constant dense<0.000000e+00> : vector<8x128xf32>
    %247 = tpu.matmul %246, %16, %cst_75 {dimension_numbers = #tpu.dot_dimension_numbers<[1], [0], [0], [1], [0, 0, 1, 1], [], []>} : vector<8x128xf32>, vector<128x128xf32>, vector<8x128xf32> -> vector<8x128xf32>
    %248 = arith.addf %247, %229 : vector<8x128xf32>
    %249 = math.tanh %248 : vector<8x128xf32>
    %cst_76 = arith.constant dense<0.000000e+00> : vector<8x128xf32>
    %250 = tpu.matmul %249, %17, %cst_76 {dimension_numbers = #tpu.dot_dimension_numbers<[1], [0], [0], [1], [0, 0, 1, 1], [], []>} : vector<8x128xf32>, vector<128x128xf32>, vector<8x128xf32> -> vector<8x128xf32>
    %251 = vector.broadcast %7 : f32 to vector<8x128xf32>
    %252 = arith.mulf %251, %250 : vector<8x128xf32>
    %253 = arith.addf %217, %252 : vector<8x128xf32>
    %cst_77 = arith.constant dense<0.000000e+00> : vector<8x128xf32>
    %254 = tpu.matmul %253, %16, %cst_77 {dimension_numbers = #tpu.dot_dimension_numbers<[1], [0], [0], [1], [0, 0, 1, 1], [], []>} : vector<8x128xf32>, vector<128x128xf32>, vector<8x128xf32> -> vector<8x128xf32>
    %255 = arith.addf %254, %232 : vector<8x128xf32>
    %256 = math.tanh %255 : vector<8x128xf32>
    %cst_78 = arith.constant dense<0.000000e+00> : vector<8x128xf32>
    %257 = tpu.matmul %256, %17, %cst_78 {dimension_numbers = #tpu.dot_dimension_numbers<[1], [0], [0], [1], [0, 0, 1, 1], [], []>} : vector<8x128xf32>, vector<128x128xf32>, vector<8x128xf32> -> vector<8x128xf32>
    %cst_79 = arith.constant 2.000000e+00 : f32
    %258 = vector.broadcast %cst_79 : f32 to vector<8x128xf32>
    %259 = arith.mulf %258, %243 : vector<8x128xf32>
    %260 = arith.addf %236, %259 : vector<8x128xf32>
    %cst_80 = arith.constant 2.000000e+00 : f32
    %261 = vector.broadcast %cst_80 : f32 to vector<8x128xf32>
    %262 = arith.mulf %261, %250 : vector<8x128xf32>
    %263 = arith.addf %260, %262 : vector<8x128xf32>
    %264 = arith.addf %263, %257 : vector<8x128xf32>
    %265 = vector.broadcast %9 : f32 to vector<8x128xf32>
    %266 = arith.mulf %265, %264 : vector<8x128xf32>
    %267 = arith.addf %217, %266 : vector<8x128xf32>
    %268 = math.tanh %267 : vector<8x128xf32>
    %269 = arith.index_cast %c5_i32 : i32 to index
    %c0_81 = arith.constant 0 : index
    %c0_82 = arith.constant 0 : index
    %270 = vector.load %arg8[%269, %c0_81, %c0_82] : memref<8x8x128xf32, #tpu.memory_space<vmem>>, vector<1x8x128xf32>
    %271 = vector.shape_cast %270 : vector<1x8x128xf32> to vector<8x128xf32>
    %272 = vector.shape_cast %268 : vector<8x128xf32> to vector<1x8x128xf32>
    tpu.vector_store %arg8[%269, %c0_81, %c0_82], %272 {strides = array<i32>} : memref<8x8x128xf32, #tpu.memory_space<vmem>>, vector<1x8x128xf32>,
    %c6_i32 = arith.constant 6 : i32
    %c1_i32_83 = arith.constant 1 : i32
    %273 = arith.subi %c6_i32, %c1_i32_83 : i32
    %274 = arith.index_cast %273 : i32 to index
    %275 = memref.load %arg1[%274] : memref<8xf32, #tpu.memory_space<smem>>
    %276 = vector.broadcast %275 : f32 to vector<8x128xf32>
    %277 = arith.addf %15, %276 : vector<8x128xf32>
    %278 = arith.addf %275, %8 : f32
    %279 = vector.broadcast %278 : f32 to vector<8x128xf32>
    %280 = arith.addf %15, %279 : vector<8x128xf32>
    %281 = arith.addf %275, %7 : f32
    %282 = vector.broadcast %281 : f32 to vector<8x128xf32>
    %283 = arith.addf %15, %282 : vector<8x128xf32>
    %cst_84 = arith.constant dense<0.000000e+00> : vector<8x128xf32>
    %284 = tpu.matmul %268, %16, %cst_84 {dimension_numbers = #tpu.dot_dimension_numbers<[1], [0], [0], [1], [0, 0, 1, 1], [], []>} : vector<8x128xf32>, vector<128x128xf32>, vector<8x128xf32> -> vector<8x128xf32>
    %285 = arith.addf %284, %277 : vector<8x128xf32>
    %286 = math.tanh %285 : vector<8x128xf32>
    %cst_85 = arith.constant dense<0.000000e+00> : vector<8x128xf32>
    %287 = tpu.matmul %286, %17, %cst_85 {dimension_numbers = #tpu.dot_dimension_numbers<[1], [0], [0], [1], [0, 0, 1, 1], [], []>} : vector<8x128xf32>, vector<128x128xf32>, vector<8x128xf32> -> vector<8x128xf32>
    %288 = vector.broadcast %8 : f32 to vector<8x128xf32>
    %289 = arith.mulf %288, %287 : vector<8x128xf32>
    %290 = arith.addf %268, %289 : vector<8x128xf32>
    %cst_86 = arith.constant dense<0.000000e+00> : vector<8x128xf32>
    %291 = tpu.matmul %290, %16, %cst_86 {dimension_numbers = #tpu.dot_dimension_numbers<[1], [0], [0], [1], [0, 0, 1, 1], [], []>} : vector<8x128xf32>, vector<128x128xf32>, vector<8x128xf32> -> vector<8x128xf32>
    %292 = arith.addf %291, %280 : vector<8x128xf32>
    %293 = math.tanh %292 : vector<8x128xf32>
    %cst_87 = arith.constant dense<0.000000e+00> : vector<8x128xf32>
    %294 = tpu.matmul %293, %17, %cst_87 {dimension_numbers = #tpu.dot_dimension_numbers<[1], [0], [0], [1], [0, 0, 1, 1], [], []>} : vector<8x128xf32>, vector<128x128xf32>, vector<8x128xf32> -> vector<8x128xf32>
    %295 = vector.broadcast %8 : f32 to vector<8x128xf32>
    %296 = arith.mulf %295, %294 : vector<8x128xf32>
    %297 = arith.addf %268, %296 : vector<8x128xf32>
    %cst_88 = arith.constant dense<0.000000e+00> : vector<8x128xf32>
    %298 = tpu.matmul %297, %16, %cst_88 {dimension_numbers = #tpu.dot_dimension_numbers<[1], [0], [0], [1], [0, 0, 1, 1], [], []>} : vector<8x128xf32>, vector<128x128xf32>, vector<8x128xf32> -> vector<8x128xf32>
    %299 = arith.addf %298, %280 : vector<8x128xf32>
    %300 = math.tanh %299 : vector<8x128xf32>
    %cst_89 = arith.constant dense<0.000000e+00> : vector<8x128xf32>
    %301 = tpu.matmul %300, %17, %cst_89 {dimension_numbers = #tpu.dot_dimension_numbers<[1], [0], [0], [1], [0, 0, 1, 1], [], []>} : vector<8x128xf32>, vector<128x128xf32>, vector<8x128xf32> -> vector<8x128xf32>
    %302 = vector.broadcast %7 : f32 to vector<8x128xf32>
    %303 = arith.mulf %302, %301 : vector<8x128xf32>
    %304 = arith.addf %268, %303 : vector<8x128xf32>
    %cst_90 = arith.constant dense<0.000000e+00> : vector<8x128xf32>
    %305 = tpu.matmul %304, %16, %cst_90 {dimension_numbers = #tpu.dot_dimension_numbers<[1], [0], [0], [1], [0, 0, 1, 1], [], []>} : vector<8x128xf32>, vector<128x128xf32>, vector<8x128xf32> -> vector<8x128xf32>
    %306 = arith.addf %305, %283 : vector<8x128xf32>
    %307 = math.tanh %306 : vector<8x128xf32>
    %cst_91 = arith.constant dense<0.000000e+00> : vector<8x128xf32>
    %308 = tpu.matmul %307, %17, %cst_91 {dimension_numbers = #tpu.dot_dimension_numbers<[1], [0], [0], [1], [0, 0, 1, 1], [], []>} : vector<8x128xf32>, vector<128x128xf32>, vector<8x128xf32> -> vector<8x128xf32>
    %cst_92 = arith.constant 2.000000e+00 : f32
    %309 = vector.broadcast %cst_92 : f32 to vector<8x128xf32>
    %310 = arith.mulf %309, %294 : vector<8x128xf32>
    %311 = arith.addf %287, %310 : vector<8x128xf32>
    %cst_93 = arith.constant 2.000000e+00 : f32
    %312 = vector.broadcast %cst_93 : f32 to vector<8x128xf32>
    %313 = arith.mulf %312, %301 : vector<8x128xf32>
    %314 = arith.addf %311, %313 : vector<8x128xf32>
    %315 = arith.addf %314, %308 : vector<8x128xf32>
    %316 = vector.broadcast %9 : f32 to vector<8x128xf32>
    %317 = arith.mulf %316, %315 : vector<8x128xf32>
    %318 = arith.addf %268, %317 : vector<8x128xf32>
    %319 = math.tanh %318 : vector<8x128xf32>
    %320 = arith.index_cast %c6_i32 : i32 to index
    %c0_94 = arith.constant 0 : index
    %c0_95 = arith.constant 0 : index
    %321 = vector.load %arg8[%320, %c0_94, %c0_95] : memref<8x8x128xf32, #tpu.memory_space<vmem>>, vector<1x8x128xf32>
    %322 = vector.shape_cast %321 : vector<1x8x128xf32> to vector<8x128xf32>
    %323 = vector.shape_cast %319 : vector<8x128xf32> to vector<1x8x128xf32>
    tpu.vector_store %arg8[%320, %c0_94, %c0_95], %323 {strides = array<i32>} : memref<8x8x128xf32, #tpu.memory_space<vmem>>, vector<1x8x128xf32>,
    %c7_i32 = arith.constant 7 : i32
    %c1_i32_96 = arith.constant 1 : i32
    %324 = arith.subi %c7_i32, %c1_i32_96 : i32
    %325 = arith.index_cast %324 : i32 to index
    %326 = memref.load %arg1[%325] : memref<8xf32, #tpu.memory_space<smem>>
    %327 = vector.broadcast %326 : f32 to vector<8x128xf32>
    %328 = arith.addf %15, %327 : vector<8x128xf32>
    %329 = arith.addf %326, %8 : f32
    %330 = vector.broadcast %329 : f32 to vector<8x128xf32>
    %331 = arith.addf %15, %330 : vector<8x128xf32>
    %332 = arith.addf %326, %7 : f32
    %333 = vector.broadcast %332 : f32 to vector<8x128xf32>
    %334 = arith.addf %15, %333 : vector<8x128xf32>
    %cst_97 = arith.constant dense<0.000000e+00> : vector<8x128xf32>
    %335 = tpu.matmul %319, %16, %cst_97 {dimension_numbers = #tpu.dot_dimension_numbers<[1], [0], [0], [1], [0, 0, 1, 1], [], []>} : vector<8x128xf32>, vector<128x128xf32>, vector<8x128xf32> -> vector<8x128xf32>
    %336 = arith.addf %335, %328 : vector<8x128xf32>
    %337 = math.tanh %336 : vector<8x128xf32>
    %cst_98 = arith.constant dense<0.000000e+00> : vector<8x128xf32>
    %338 = tpu.matmul %337, %17, %cst_98 {dimension_numbers = #tpu.dot_dimension_numbers<[1], [0], [0], [1], [0, 0, 1, 1], [], []>} : vector<8x128xf32>, vector<128x128xf32>, vector<8x128xf32> -> vector<8x128xf32>
    %339 = vector.broadcast %8 : f32 to vector<8x128xf32>
    %340 = arith.mulf %339, %338 : vector<8x128xf32>
    %341 = arith.addf %319, %340 : vector<8x128xf32>
    %cst_99 = arith.constant dense<0.000000e+00> : vector<8x128xf32>
    %342 = tpu.matmul %341, %16, %cst_99 {dimension_numbers = #tpu.dot_dimension_numbers<[1], [0], [0], [1], [0, 0, 1, 1], [], []>} : vector<8x128xf32>, vector<128x128xf32>, vector<8x128xf32> -> vector<8x128xf32>
    %343 = arith.addf %342, %331 : vector<8x128xf32>
    %344 = math.tanh %343 : vector<8x128xf32>
    %cst_100 = arith.constant dense<0.000000e+00> : vector<8x128xf32>
    %345 = tpu.matmul %344, %17, %cst_100 {dimension_numbers = #tpu.dot_dimension_numbers<[1], [0], [0], [1], [0, 0, 1, 1], [], []>} : vector<8x128xf32>, vector<128x128xf32>, vector<8x128xf32> -> vector<8x128xf32>
    %346 = vector.broadcast %8 : f32 to vector<8x128xf32>
    %347 = arith.mulf %346, %345 : vector<8x128xf32>
    %348 = arith.addf %319, %347 : vector<8x128xf32>
    %cst_101 = arith.constant dense<0.000000e+00> : vector<8x128xf32>
    %349 = tpu.matmul %348, %16, %cst_101 {dimension_numbers = #tpu.dot_dimension_numbers<[1], [0], [0], [1], [0, 0, 1, 1], [], []>} : vector<8x128xf32>, vector<128x128xf32>, vector<8x128xf32> -> vector<8x128xf32>
    %350 = arith.addf %349, %331 : vector<8x128xf32>
    %351 = math.tanh %350 : vector<8x128xf32>
    %cst_102 = arith.constant dense<0.000000e+00> : vector<8x128xf32>
    %352 = tpu.matmul %351, %17, %cst_102 {dimension_numbers = #tpu.dot_dimension_numbers<[1], [0], [0], [1], [0, 0, 1, 1], [], []>} : vector<8x128xf32>, vector<128x128xf32>, vector<8x128xf32> -> vector<8x128xf32>
    %353 = vector.broadcast %7 : f32 to vector<8x128xf32>
    %354 = arith.mulf %353, %352 : vector<8x128xf32>
    %355 = arith.addf %319, %354 : vector<8x128xf32>
    %cst_103 = arith.constant dense<0.000000e+00> : vector<8x128xf32>
    %356 = tpu.matmul %355, %16, %cst_103 {dimension_numbers = #tpu.dot_dimension_numbers<[1], [0], [0], [1], [0, 0, 1, 1], [], []>} : vector<8x128xf32>, vector<128x128xf32>, vector<8x128xf32> -> vector<8x128xf32>
    %357 = arith.addf %356, %334 : vector<8x128xf32>
    %358 = math.tanh %357 : vector<8x128xf32>
    %cst_104 = arith.constant dense<0.000000e+00> : vector<8x128xf32>
    %359 = tpu.matmul %358, %17, %cst_104 {dimension_numbers = #tpu.dot_dimension_numbers<[1], [0], [0], [1], [0, 0, 1, 1], [], []>} : vector<8x128xf32>, vector<128x128xf32>, vector<8x128xf32> -> vector<8x128xf32>
    %cst_105 = arith.constant 2.000000e+00 : f32
    %360 = vector.broadcast %cst_105 : f32 to vector<8x128xf32>
    %361 = arith.mulf %360, %345 : vector<8x128xf32>
    %362 = arith.addf %338, %361 : vector<8x128xf32>
    %cst_106 = arith.constant 2.000000e+00 : f32
    %363 = vector.broadcast %cst_106 : f32 to vector<8x128xf32>
    %364 = arith.mulf %363, %352 : vector<8x128xf32>
    %365 = arith.addf %362, %364 : vector<8x128xf32>
    %366 = arith.addf %365, %359 : vector<8x128xf32>
    %367 = vector.broadcast %9 : f32 to vector<8x128xf32>
    %368 = arith.mulf %367, %366 : vector<8x128xf32>
    %369 = arith.addf %319, %368 : vector<8x128xf32>
    %370 = math.tanh %369 : vector<8x128xf32>
    %371 = arith.index_cast %c7_i32 : i32 to index
    %c0_107 = arith.constant 0 : index
    %c0_108 = arith.constant 0 : index
    %372 = vector.load %arg8[%371, %c0_107, %c0_108] : memref<8x8x128xf32, #tpu.memory_space<vmem>>, vector<1x8x128xf32>
    %373 = vector.shape_cast %372 : vector<1x8x128xf32> to vector<8x128xf32>
    %374 = vector.shape_cast %370 : vector<8x128xf32> to vector<1x8x128xf32>
    tpu.vector_store %arg8[%371, %c0_107, %c0_108], %374 {strides = array<i32>} : memref<8x8x128xf32, #tpu.memory_space<vmem>>, vector<1x8x128xf32>,
    %c7_i32_109 = arith.constant 7 : i32
    return
  }
  func.func @transform_0(%arg0: i32, %arg1: memref<8xf32, #tpu.memory_space<smem>>) -> (i32, i32) {
    %c0_i32 = arith.constant 0 : i32
    %c0_i32_0 = arith.constant 0 : i32
    %c0_i32_1 = arith.constant 0 : i32
    return %c0_i32, %c0_i32_0 : i32, i32
  }
  func.func @transform_1(%arg0: i32, %arg1: memref<8xf32, #tpu.memory_space<smem>>) -> (i32, i32) {
    %c0_i32 = arith.constant 0 : i32
    %c0_i32_0 = arith.constant 0 : i32
    %c0_i32_1 = arith.constant 0 : i32
    return %c0_i32, %c0_i32_0 : i32, i32
  }
  func.func @transform_2(%arg0: i32, %arg1: memref<8xf32, #tpu.memory_space<smem>>) -> (i32, i32) {
    %c0_i32 = arith.constant 0 : i32
    %c0_i32_0 = arith.constant 0 : i32
    %c0_i32_1 = arith.constant 0 : i32
    return %c0_i32, %c0_i32_0 : i32, i32
  }
  func.func @transform_3(%arg0: i32, %arg1: memref<8xf32, #tpu.memory_space<smem>>) -> (i32, i32) {
    %c0_i32 = arith.constant 0 : i32
    %c0_i32_0 = arith.constant 0 : i32
    %c0_i32_1 = arith.constant 0 : i32
    return %c0_i32, %c0_i32_0 : i32, i32
  }
  func.func @transform_4(%arg0: i32, %arg1: memref<8xf32, #tpu.memory_space<smem>>) -> (i32, i32) {
    %c0_i32 = arith.constant 0 : i32
    %c0_i32_0 = arith.constant 0 : i32
    %c0_i32_1 = arith.constant 0 : i32
    return %c0_i32, %c0_i32_0 : i32, i32
  }
  func.func @transform_5(%arg0: i32, %arg1: memref<8xf32, #tpu.memory_space<smem>>) -> (i32, i32) {
    %c0_i32 = arith.constant 0 : i32
    %c0_i32_0 = arith.constant 0 : i32
    %c0_i32_1 = arith.constant 0 : i32
    return %c0_i32, %c0_i32_0 : i32, i32
  }
  func.func @transform_6(%arg0: i32, %arg1: memref<8xf32, #tpu.memory_space<smem>>) -> (i32, i32, i32) {
    %c0_i32 = arith.constant 0 : i32
    %c0_i32_0 = arith.constant 0 : i32
    %c0_i32_1 = arith.constant 0 : i32
    %c0_i32_2 = arith.constant 0 : i32
    return %c0_i32, %c0_i32_0, %c0_i32_1 : i32, i32, i32
  }
}

</mosaic_0001>

<llo_original>
// kernel: tpu_custom_call.1
$region0: #{tpu_custom_call.1}
  #allocation0 [shape = 'u32[]', space=smem, size = 0x4, offset = 0x4, fixed_abs, tag = 'smem constant byte address 0x4 - core index']
  #allocation1 [shape = 'u32[144,128]{1,0:T(1,128)}', space=vmem, size = 0x12000, scoped, tag = 'internal scratch']
  #allocation2 [shape = 's32[1]{0}', space=sflag, size = 0x4, scoped, tag = 'scoped memory for tpu_custom_call.1']
  #allocation3 [shape = 'u8[512]{0}', space=smem, size = 0x200, scoped, tag = 'prefetched SMEM operand 0']
  %s0 = inlined_call_operand.hbm [shape: f32[8], index: 0, kind: input, shape index: {}]
  %s1 = inlined_call_operand.hbm [shape: f32[8,128], index: 1, kind: input, shape index: {}]
  %s2 = inlined_call_operand.hbm [shape: f32[8,128], index: 2, kind: input, shape index: {}]
  %s3 = inlined_call_operand.hbm [shape: f32[128,128], index: 3, kind: input, shape index: {}]
  %s4 = inlined_call_operand.hbm [shape: f32[128,128], index: 4, kind: input, shape index: {}]
  %s5 = inlined_call_operand.vmem [shape: f32[1,128], index: 5, kind: input, shape index: {}]
  %s6 = inlined_call_operand.hbm [shape: f32[128,128], index: 6, kind: input, shape index: {}]
  %s7 = inlined_call_operand.hbm [shape: f32[8,8,128], index: 7, kind: output, shape index: {}]
  %s8 = sld [smem:[#allocation0]]
  $region54: #{tpu_custom_call.1} parent=0
    _
  %s10 = ssub.s32 1, %s8
  %s11 = scalar_select 0, %s10, %s8
  %13 = dma.hbm_to_smem %s0, 16, [#allocation3], [#allocation2]
  %14 = dma.done [#allocation2], 16
  %15 = sfence
  $region1: #{tpu_custom_call.1} parent=0
    #allocation4 [shape = 'u8[4096]{0}', space=vmem, size = 0x1000, scoped, tag = 'input window, operand 1, single buffered']
    #allocation5 [shape = 's32[1]{0}', space=sflag, size = 0x4, scoped, tag = 'scoped memory for tpu_custom_call.1']
    #allocation6 [shape = 's32[1]{0}', space=sflag, size = 0x4, scoped, tag = 'scoped memory for tpu_custom_call.1']
    #allocation7 [shape = 'u8[4096]{0}', space=vmem, size = 0x1000, scoped, tag = 'input window, operand 2, single buffered']
    #allocation8 [shape = 's32[1]{0}', space=sflag, size = 0x4, scoped, tag = 'scoped memory for tpu_custom_call.1']
    #allocation9 [shape = 'u8[65536]{0}', space=vmem, size = 0x10000, scoped, tag = 'input window, operand 3, single buffered']
    #allocation10 [shape = 'u8[65536]{0}', space=vmem, size = 0x10000, scoped, tag = 'input window, operand 4, single buffered']
    #allocation11 [shape = 's32[1]{0}', space=sflag, size = 0x4, scoped, tag = 'scoped memory for tpu_custom_call.1']
    #allocation12 [shape = 'u8[65536]{0}', space=vmem, size = 0x10000, scoped, tag = 'input window, operand 6, single buffered']
    #allocation13 [shape = 'u8[32768]{0}', space=vmem, size = 0x8000, scoped, tag = 'output window, operand 0, single buffered']
    %16 = vsyncpa [#allocation5], 0
    %17 = vsyncpa [#allocation8], 0
    %18 = vsyncpa [#allocation11], 0
    %19 = vsyncpa [#allocation6], 0
    // Predicated region
    $region2: #{tpu_custom_call.1} parent=1 // pred_check
      _
    $region3: #{tpu_custom_call.1} parent=1 // pred_check_branch
      %21 = sbr.rel (0) target = $region5
    $region4: #{tpu_custom_call.1} parent=1 // pred_region
      %s23 = ssub.s32 128, 128
      %24 = vsyncadd [#allocation5], %s23
      %s26 = sshll.u32 [#allocation4], 4
      %s27 = int_to_ptr.vmem [resolvable:$true] %s26
      %29 = dma.hbm_to_vmem [thread:$0]  %s1, 128, %s27, [#allocation5]
    $region5: #{tpu_custom_call.1} parent=1 // pred_fallthru
      _
    // Predicated region
    $region6: #{tpu_custom_call.1} parent=1 // pred_check
      _
    $region7: #{tpu_custom_call.1} parent=1 // pred_check_branch
      %31 = sbr.rel (0) target = $region9
    $region8: #{tpu_custom_call.1} parent=1 // pred_region
      %s33 = ssub.s32 128, 128
      %34 = vsyncadd [#allocation8], %s33
      %s36 = sshll.u32 [#allocation7], 4
      %s37 = int_to_ptr.vmem [resolvable:$true] %s36
      %39 = dma.hbm_to_vmem [thread:$0]  %s2, 128, %s37, [#allocation8]
    $region9: #{tpu_custom_call.1} parent=1 // pred_fallthru
      _
    // Predicated region
    $region10: #{tpu_custom_call.1} parent=1 // pred_check
      _
    $region11: #{tpu_custom_call.1} parent=1 // pred_check_branch
      %41 = sbr.rel (0) target = $region13
    $region12: #{tpu_custom_call.1} parent=1 // pred_region
      %s43 = ssub.s32 2048, 2048
      %44 = vsyncadd [#allocation8], %s43
      %s45 = sshll.u32 [#allocation9], 4
      %s46 = int_to_ptr.vmem [resolvable:$true] %s45
      %51 = dma.hbm_to_vmem [thread:$0]  %s3, 2048, %s46, [#allocation8], 128, 128, 8
    $region13: #{tpu_custom_call.1} parent=1 // pred_fallthru
      _
    // Predicated region
    $region14: #{tpu_custom_call.1} parent=1 // pred_check
      _
    $region15: #{tpu_custom_call.1} parent=1 // pred_check_branch
      %53 = sbr.rel (0) target = $region17
    $region16: #{tpu_custom_call.1} parent=1 // pred_region
      %s55 = ssub.s32 2048, 2048
      %56 = vsyncadd [#allocation11], %s55
      %s57 = sshll.u32 [#allocation10], 4
      %s58 = int_to_ptr.vmem [resolvable:$true] %s57
      %63 = dma.hbm_to_vmem [thread:$0]  %s4, 2048, %s58, [#allocation11], 128, 128, 8
    $region17: #{tpu_custom_call.1} parent=1 // pred_fallthru
      _
    // Predicated region
    $region18: #{tpu_custom_call.1} parent=1 // pred_check
      _
    $region19: #{tpu_custom_call.1} parent=1 // pred_check_branch
      %65 = sbr.rel (0) target = $region21
    $region20: #{tpu_custom_call.1} parent=1 // pred_region
      _
    $region21: #{tpu_custom_call.1} parent=1 // pred_fallthru
      _
    // Predicated region
    $region22: #{tpu_custom_call.1} parent=1 // pred_check
      _
    $region23: #{tpu_custom_call.1} parent=1 // pred_check_branch
      %67 = sbr.rel (0) target = $region25
    $region24: #{tpu_custom_call.1} parent=1 // pred_region
      %s69 = ssub.s32 2048, 2048
      %70 = vsyncadd [#allocation11], %s69
      %s71 = sshll.u32 [#allocation12], 4
      %s72 = int_to_ptr.vmem [resolvable:$true] %s71
      %77 = dma.hbm_to_vmem [thread:$0]  %s6, 2048, %s72, [#allocation11], 128, 128, 8
    $region25: #{tpu_custom_call.1} parent=1 // pred_fallthru
      _
    // Predicated region
    $region26: #{tpu_custom_call.1} parent=1 // pred_check
      _
    $region27: #{tpu_custom_call.1} parent=1 // pred_check_branch
      %79 = sbr.rel (0) target = $region29
    $region28: #{tpu_custom_call.1} parent=1 // pred_region
      %80 = dma.done [#allocation5], 128
    $region29: #{tpu_custom_call.1} parent=1 // pred_fallthru
      _
    // Predicated region
    $region30: #{tpu_custom_call.1} parent=1 // pred_check
      _
    $region31: #{tpu_custom_call.1} parent=1 // pred_check_branch
      %82 = sbr.rel (0) target = $region33
    $region32: #{tpu_custom_call.1} parent=1 // pred_region
      %83 = dma.done [#allocation8], 128
    $region33: #{tpu_custom_call.1} parent=1 // pred_fallthru
      _
    // Predicated region
    $region34: #{tpu_custom_call.1} parent=1 // pred_check
      _
    $region35: #{tpu_custom_call.1} parent=1 // pred_check_branch
      %85 = sbr.rel (0) target = $region37
    $region36: #{tpu_custom_call.1} parent=1 // pred_region
      %86 = dma.done [#allocation8], 2048
    $region37: #{tpu_custom_call.1} parent=1 // pred_fallthru
      _
    // Predicated region
    $region38: #{tpu_custom_call.1} parent=1 // pred_check
      _
    $region39: #{tpu_custom_call.1} parent=1 // pred_check_branch
      %88 = sbr.rel (0) target = $region41
    $region40: #{tpu_custom_call.1} parent=1 // pred_region
      %89 = dma.done [#allocation11], 2048
    $region41: #{tpu_custom_call.1} parent=1 // pred_fallthru
      _
    // Predicated region
    $region42: #{tpu_custom_call.1} parent=1 // pred_check
      _
    $region43: #{tpu_custom_call.1} parent=1 // pred_check_branch
      %91 = sbr.rel (0) target = $region45
    $region44: #{tpu_custom_call.1} parent=1 // pred_region
      %92 = dma.done [#allocation11], 2048
    $region45: #{tpu_custom_call.1} parent=1 // pred_fallthru
      _
    %v93 = vld [vmem:[#allocation4] sm:$0xff]
    %94 = vst [vmem:[#allocation13] sm:$0xff] %v93
    %s95 = sld [smem:[#allocation3 + $0x1]]
    %s96 = sld [smem:[#allocation3]]
    %s97 = ssub.f32 %s95, %s96
    %s98 = smul.f32 %s97, 0.1
    %s99 = smul.f32 %s98, 0.5
    %s100 = smul.f32 %s98, 0.16666667
    %v101 = vld [vmem:[#allocation7] sm:$0xff]
    %v102 = vld [vmem:[#allocation10] sm:$0xff]
    %v103 = vld [vmem:[#allocation10 + $0x8] sm:$0xff]
    %v104 = vld [vmem:[#allocation10 + $0x10] sm:$0xff]
    %v105 = vld [vmem:[#allocation10 + $0x18] sm:$0xff]
    %v106 = vld [vmem:[#allocation10 + $0x20] sm:$0xff]
    %v107 = vld [vmem:[#allocation10 + $0x28] sm:$0xff]
    %v108 = vld [vmem:[#allocation10 + $0x30] sm:$0xff]
    %v109 = vld [vmem:[#allocation10 + $0x38] sm:$0xff]
    %v110 = vld [vmem:[#allocation10 + $0x40] sm:$0xff]
    %v111 = vld [vmem:[#allocation10 + $0x48] sm:$0xff]
    %v112 = vld [vmem:[#allocation10 + $0x50] sm:$0xff]
    %v113 = vld [vmem:[#allocation10 + $0x58] sm:$0xff]
    %v114 = vld [vmem:[#allocation10 + $0x60] sm:$0xff]
    %v115 = vld [vmem:[#allocation10 + $0x68] sm:$0xff]
    %v116 = vld [vmem:[#allocation10 + $0x70] sm:$0xff]
    %v117 = vld [vmem:[#allocation10 + $0x78] sm:$0xff]
    %v118 = vld [vmem:[%s5] sm:$0x1]
    %v120 = vlaneseq
    %v121 = vshrl.u32 %v120, 7
    %v122 = vsub.s32 0, %v121
    %v123 = vrot.slane %v118, %v122
    %125 = vmatprep.subr.mxu0 0.0
    %126 = vmatpush1.msra.mxu0 %v117
    %127 = vmatprep.subr.mxu0 0.0
    %128 = vmatpush1.msra.mxu0 %v116
    %129 = vmatprep.subr.mxu0 0.0
    %130 = vmatpush1.msra.mxu0 %v115
    %131 = vmatprep.subr.mxu0 0.0
    %132 = vmatpush1.msra.mxu0 %v114
    %133 = vmatprep.subr.mxu0 0.0
    %134 = vmatpush1.msra.mxu0 %v113
    %135 = vmatprep.subr.mxu0 0.0
    %136 = vmatpush1.msra.mxu0 %v112
    %137 = vmatprep.subr.mxu0 0.0
    %138 = vmatpush1.msra.mxu0 %v111
    %139 = vmatprep.subr.mxu0 0.0
    %140 = vmatpush1.msra.mxu0 %v110
    %141 = vmatprep.subr.mxu0 0.0
    %142 = vmatpush1.msra.mxu0 %v109
    %143 = vmatprep.subr.mxu0 0.0
    %144 = vmatpush1.msra.mxu0 %v108
    %145 = vmatprep.subr.mxu0 0.0
    %146 = vmatpush1.msra.mxu0 %v107
    %147 = vmatprep.subr.mxu0 0.0
    %148 = vmatpush1.msra.mxu0 %v106
    %149 = vmatprep.subr.mxu0 0.0
    %150 = vmatpush1.msra.mxu0 %v105
    %151 = vmatprep.subr.mxu0 0.0
    %152 = vmatpush1.msra.mxu0 %v104
    %153 = vmatprep.subr.mxu0 0.0
    %154 = vmatpush1.msra.mxu0 %v103
    %155 = vmatprep.subr.mxu0 0.0
    %156 = vmatpush1.msra.mxu0 %v102
    %157 = vmatprep.subr.mxu0 0.0
    %158 = vmatpush2.msra.mxu0 0.0
    %159 = vmatprep.subr.mxu0 0.0
    %160 = vmatpush2.msra.mxu0 0.0
    %161 = vmatprep.subr.mxu0 0.0
    %162 = vmatpush2.msra.mxu0 0.0
    %163 = vmatprep.subr.mxu0 0.0
    %164 = vmatpush2.msra.mxu0 0.0
    %165 = vmatprep.subr.mxu0 0.0
    %166 = vmatpush2.msra.mxu0 0.0
    %167 = vmatprep.subr.mxu0 0.0
    %168 = vmatpush2.msra.mxu0 0.0
    %169 = vmatprep.subr.mxu0 0.0
    %170 = vmatpush2.msra.mxu0 0.0
    %171 = vmatprep.subr.mxu0 0.0
    %172 = vmatpush2.msra.mxu0 0.0
    %173 = vmatprep.subr.mxu0 0.0
    %174 = vmatpush2.msra.mxu0 0.0
    %175 = vmatprep.subr.mxu0 0.0
    %176 = vmatpush2.msra.mxu0 0.0
    %177 = vmatprep.subr.mxu0 0.0
    %178 = vmatpush2.msra.mxu0 0.0
    %179 = vmatprep.subr.mxu0 0.0
    %180 = vmatpush2.msra.mxu0 0.0
    %181 = vmatprep.subr.mxu0 0.0
    %182 = vmatpush2.msra.mxu0 0.0
    %183 = vmatprep.subr.mxu0 0.0
    %184 = vmatpush2.msra.mxu0 0.0
    %185 = vmatprep.subr.mxu0 0.0
    %186 = vmatpush2.msra.mxu0 0.0
    %187 = vmatprep.subr.mxu0 0.0
    %188 = vmatpush2.msra.mxu0 0.0
    %189 = vmatprep.mubr.f32.mxu0 0.0
    %190 = vmatmul.mubr.f32.gmra.mxu0 %v101
    %v191 = vpop.f32.mrf.mxu0
    %v192 = vadd.f32 %v123, %v191
    %v193 = vpop.f32.mrf.mxu0
    %194 = vdwg.mxu0
    %v195 = vld [vmem:[#allocation9] sm:$0xff]
    %v196 = vld [vmem:[#allocation9 + $0x8] sm:$0xff]
    %v197 = vld [vmem:[#allocation9 + $0x10] sm:$0xff]
    %v198 = vld [vmem:[#allocation9 + $0x18] sm:$0xff]
    %v199 = vld [vmem:[#allocation9 + $0x20] sm:$0xff]
    %v200 = vld [vmem:[#allocation9 + $0x28] sm:$0xff]
    %v201 = vld [vmem:[#allocation9 + $0x30] sm:$0xff]
    %v202 = vld [vmem:[#allocation9 + $0x38] sm:$0xff]
    %v203 = vld [vmem:[#allocation9 + $0x40] sm:$0xff]
    %v204 = vld [vmem:[#allocation9 + $0x48] sm:$0xff]
    %v205 = vld [vmem:[#allocation9 + $0x50] sm:$0xff]
    %v206 = vld [vmem:[#allocation9 + $0x58] sm:$0xff]
    %v207 = vld [vmem:[#allocation9 + $0x60] sm:$0xff]
    %v208 = vld [vmem:[#allocation9 + $0x68] sm:$0xff]
    %v209 = vld [vmem:[#allocation9 + $0x70] sm:$0xff]
    %v210 = vld [vmem:[#allocation9 + $0x78] sm:$0xff]
    %v211 = vld [vmem:[#allocation12] sm:$0xff]
    %v212 = vld [vmem:[#allocation12 + $0x8] sm:$0xff]
    %v213 = vld [vmem:[#allocation12 + $0x10] sm:$0xff]
    %v214 = vld [vmem:[#allocation12 + $0x18] sm:$0xff]
    %v215 = vld [vmem:[#allocation12 + $0x20] sm:$0xff]
    %v216 = vld [vmem:[#allocation12 + $0x28] sm:$0xff]
    %v217 = vld [vmem:[#allocation12 + $0x30] sm:$0xff]
    %v218 = vld [vmem:[#allocation12 + $0x38] sm:$0xff]
    %v219 = vld [vmem:[#allocation12 + $0x40] sm:$0xff]
    %v220 = vld [vmem:[#allocation12 + $0x48] sm:$0xff]
    %v221 = vld [vmem:[#allocation12 + $0x50] sm:$0xff]
    %v222 = vld [vmem:[#allocation12 + $0x58] sm:$0xff]
    %v223 = vld [vmem:[#allocation12 + $0x60] sm:$0xff]
    %v224 = vld [vmem:[#allocation12 + $0x68] sm:$0xff]
    %v225 = vld [vmem:[#allocation12 + $0x70] sm:$0xff]
    %v226 = vld [vmem:[#allocation12 + $0x78] sm:$0xff]
    %v227 = vstv %s96
    %v228 = vadd.f32 %v192, %v227
    %s229 = sadd.f32 %s96, %s99
    %v230 = vstv %s229
    %v231 = vadd.f32 %v192, %v230
    %s232 = sadd.f32 %s96, %s98
    %v233 = vstv %s232
    %v234 = vadd.f32 %v192, %v233
    %235 = vmatprep.subr.mxu0 0.0
    %236 = vmatpush1.msra.mxu0 %v210
    %237 = vmatprep.subr.mxu0 0.0
    %238 = vmatpush1.msra.mxu0 %v209
    %239 = vmatprep.subr.mxu0 0.0
    %240 = vmatpush1.msra.mxu0 %v208
    %241 = vmatprep.subr.mxu0 0.0
    %242 = vmatpush1.msra.mxu0 %v207
    %243 = vmatprep.subr.mxu0 0.0
    %244 = vmatpush1.msra.mxu0 %v206
    %245 = vmatprep.subr.mxu0 0.0
    %246 = vmatpush1.msra.mxu0 %v205
    %247 = vmatprep.subr.mxu0 0.0
    %248 = vmatpush1.msra.mxu0 %v204
    %249 = vmatprep.subr.mxu0 0.0
    %250 = vmatpush1.msra.mxu0 %v203
    %251 = vmatprep.subr.mxu0 0.0
    %252 = vmatpush1.msra.mxu0 %v202
    %253 = vmatprep.subr.mxu0 0.0
    %254 = vmatpush1.msra.mxu0 %v201
    %255 = vmatprep.subr.mxu0 0.0
    %256 = vmatpush1.msra.mxu0 %v200
    %257 = vmatprep.subr.mxu0 0.0
    %258 = vmatpush1.msra.mxu0 %v199
    %259 = vmatprep.subr.mxu0 0.0
    %260 = vmatpush1.msra.mxu0 %v198
    %261 = vmatprep.subr.mxu0 0.0
    %262 = vmatpush1.msra.mxu0 %v197
    %263 = vmatprep.subr.mxu0 0.0
    %264 = vmatpush1.msra.mxu0 %v196
    %265 = vmatprep.subr.mxu0 0.0
    %266 = vmatpush1.msra.mxu0 %v195
    %267 = vmatprep.subr.mxu0 0.0
    %268 = vmatpush2.msra.mxu0 0.0
    %269 = vmatprep.subr.mxu0 0.0
    %270 = vmatpush2.msra.mxu0 0.0
    %271 = vmatprep.subr.mxu0 0.0
    %272 = vmatpush2.msra.mxu0 0.0
    %273 = vmatprep.subr.mxu0 0.0
    %274 = vmatpush2.msra.mxu0 0.0
    %275 = vmatprep.subr.mxu0 0.0
    %276 = vmatpush2.msra.mxu0 0.0
    %277 = vmatprep.subr.mxu0 0.0
    %278 = vmatpush2.msra.mxu0 0.0
    %279 = vmatprep.subr.mxu0 0.0
    %280 = vmatpush2.msra.mxu0 0.0
    %281 = vmatprep.subr.mxu0 0.0
    %282 = vmatpush2.msra.mxu0 0.0
    %283 = vmatprep.subr.mxu0 0.0
    %284 = vmatpush2.msra.mxu0 0.0
    %285 = vmatprep.subr.mxu0 0.0
    %286 = vmatpush2.msra.mxu0 0.0
    %287 = vmatprep.subr.mxu0 0.0
    %288 = vmatpush2.msra.mxu0 0.0
    %289 = vmatprep.subr.mxu0 0.0
    %290 = vmatpush2.msra.mxu0 0.0
    %291 = vmatprep.subr.mxu0 0.0
    %292 = vmatpush2.msra.mxu0 0.0
    %293 = vmatprep.subr.mxu0 0.0
    %294 = vmatpush2.msra.mxu0 0.0
    %295 = vmatprep.subr.mxu0 0.0
    %296 = vmatpush2.msra.mxu0 0.0
    %297 = vmatprep.subr.mxu0 0.0
    %298 = vmatpush2.msra.mxu0 0.0
    %299 = vmatprep.mubr.f32.mxu0 0.0
    %300 = vmatmul.mubr.f32.gmra.mxu0 %v93
    %v301 = vpop.f32.mrf.mxu0
    %v302 = vadd.f32 %v228, %v301
    %v303 = vpop.f32.mrf.mxu0
    %304 = vdwg.mxu0
    %v305 = vtanh.pop %v302
    %306 = vmatprep.subr.mxu0 0.0
    %307 = vmatpush1.msra.mxu0 %v226
    %308 = vmatprep.subr.mxu0 0.0
    %309 = vmatpush1.msra.mxu0 %v225
    %310 = vmatprep.subr.mxu0 0.0
    %311 = vmatpush1.msra.mxu0 %v224
    %312 = vmatprep.subr.mxu0 0.0
    %313 = vmatpush1.msra.mxu0 %v223
    %314 = vmatprep.subr.mxu0 0.0
    %315 = vmatpush1.msra.mxu0 %v222
    %316 = vmatprep.subr.mxu0 0.0
    %317 = vmatpush1.msra.mxu0 %v221
    %318 = vmatprep.subr.mxu0 0.0
    %319 = vmatpush1.msra.mxu0 %v220
    %320 = vmatprep.subr.mxu0 0.0
    %321 = vmatpush1.msra.mxu0 %v219
    %322 = vmatprep.subr.mxu0 0.0
    %323 = vmatpush1.msra.mxu0 %v218
    %324 = vmatprep.subr.mxu0 0.0
    %325 = vmatpush1.msra.mxu0 %v217
    %326 = vmatprep.subr.mxu0 0.0
    %327 = vmatpush1.msra.mxu0 %v216
    %328 = vmatprep.subr.mxu0 0.0
    %329 = vmatpush1.msra.mxu0 %v215
    %330 = vmatprep.subr.mxu0 0.0
    %331 = vmatpush1.msra.mxu0 %v214
    %332 = vmatprep.subr.mxu0 0.0
    %333 = vmatpush1.msra.mxu0 %v213
    %334 = vmatprep.subr.mxu0 0.0
    %335 = vmatpush1.msra.mxu0 %v212
    %336 = vmatprep.subr.mxu0 0.0
    %337 = vmatpush1.msra.mxu0 %v211
    %338 = vmatprep.subr.mxu0 0.0
    %339 = vmatpush2.msra.mxu0 0.0
    %340 = vmatprep.subr.mxu0 0.0
    %341 = vmatpush2.msra.mxu0 0.0
    %342 = vmatprep.subr.mxu0 0.0
    %343 = vmatpush2.msra.mxu0 0.0
    %344 = vmatprep.subr.mxu0 0.0
    %345 = vmatpush2.msra.mxu0 0.0
    %346 = vmatprep.subr.mxu0 0.0
    %347 = vmatpush2.msra.mxu0 0.0
    %348 = vmatprep.subr.mxu0 0.0
    %349 = vmatpush2.msra.mxu0 0.0
    %350 = vmatprep.subr.mxu0 0.0
    %351 = vmatpush2.msra.mxu0 0.0
    %352 = vmatprep.subr.mxu0 0.0
    %353 = vmatpush2.msra.mxu0 0.0
    %354 = vmatprep.subr.mxu0 0.0
    %355 = vmatpush2.msra.mxu0 0.0
    %356 = vmatprep.subr.mxu0 0.0
    %357 = vmatpush2.msra.mxu0 0.0
    %358 = vmatprep.subr.mxu0 0.0
    %359 = vmatpush2.msra.mxu0 0.0
    %360 = vmatprep.subr.mxu0 0.0
    %361 = vmatpush2.msra.mxu0 0.0
    %362 = vmatprep.subr.mxu0 0.0
    %363 = vmatpush2.msra.mxu0 0.0
    %364 = vmatprep.subr.mxu0 0.0
    %365 = vmatpush2.msra.mxu0 0.0
    %366 = vmatprep.subr.mxu0 0.0
    %367 = vmatpush2.msra.mxu0 0.0
    %368 = vmatprep.subr.mxu0 0.0
    %369 = vmatpush2.msra.mxu0 0.0
    %370 = vmatprep.mubr.f32.mxu0 0.0
    %371 = vmatmul.mubr.f32.gmra.mxu0 %v305
    %v372 = vpop.f32.mrf.mxu0
    %v373 = vadd.f32 0.0, %v372
    %v374 = vpop.f32.mrf.mxu0
    %375 = vdwg.mxu0
    %v376 = vstv %s99
    %v377 = vmul.f32 %v376, %v373
    %v378 = vadd.f32 %v93, %v377
    %379 = vmatprep.subr.mxu0 0.0
    %380 = vmatpush1.msra.mxu0 %v210
    %381 = vmatprep.subr.mxu0 0.0
    %382 = vmatpush1.msra.mxu0 %v209
    %383 = vmatprep.subr.mxu0 0.0
    %384 = vmatpush1.msra.mxu0 %v208
    %385 = vmatprep.subr.mxu0 0.0
    %386 = vmatpush1.msra.mxu0 %v207
    %387 = vmatprep.subr.mxu0 0.0
    %388 = vmatpush1.msra.mxu0 %v206
    %389 = vmatprep.subr.mxu0 0.0
    %390 = vmatpush1.msra.mxu0 %v205
    %391 = vmatprep.subr.mxu0 0.0
    %392 = vmatpush1.msra.mxu0 %v204
    %393 = vmatprep.subr.mxu0 0.0
    %394 = vmatpush1.msra.mxu0 %v203
    %395 = vmatprep.subr.mxu0 0.0
    %396 = vmatpush1.msra.mxu0 %v202
    %397 = vmatprep.subr.mxu0 0.0
    %398 = vmatpush1.msra.mxu0 %v201
    %399 = vmatprep.subr.mxu0 0.0
    %400 = vmatpush1.msra.mxu0 %v200
    %401 = vmatprep.subr.mxu0 0.0
    %402 = vmatpush1.msra.mxu0 %v199
    %403 = vmatprep.subr.mxu0 0.0
    %404 = vmatpush1.msra.mxu0 %v198
    %405 = vmatprep.subr.mxu0 0.0
    %406 = vmatpush1.msra.mxu0 %v197
    %407 = vmatprep.subr.mxu0 0.0
    %408 = vmatpush1.msra.mxu0 %v196
    %409 = vmatprep.subr.mxu0 0.0
    %410 = vmatpush1.msra.mxu0 %v195
    %411 = vmatprep.subr.mxu0 0.0
    %412 = vmatpush2.msra.mxu0 0.0
    %413 = vmatprep.subr.mxu0 0.0
    %414 = vmatpush2.msra.mxu0 0.0
    %415 = vmatprep.subr.mxu0 0.0
    %416 = vmatpush2.msra.mxu0 0.0
    %417 = vmatprep.subr.mxu0 0.0
    %418 = vmatpush2.msra.mxu0 0.0
    %419 = vmatprep.subr.mxu0 0.0
    %420 = vmatpush2.msra.mxu0 0.0
    %421 = vmatprep.subr.mxu0 0.0
    %422 = vmatpush2.msra.mxu0 0.0
    %423 = vmatprep.subr.mxu0 0.0
    %424 = vmatpush2.msra.mxu0 0.0
    %425 = vmatprep.subr.mxu0 0.0
    %426 = vmatpush2.msra.mxu0 0.0
    %427 = vmatprep.subr.mxu0 0.0
    %428 = vmatpush2.msra.mxu0 0.0
    %429 = vmatprep.subr.mxu0 0.0
    %430 = vmatpush2.msra.mxu0 0.0
    %431 = vmatprep.subr.mxu0 0.0
    %432 = vmatpush2.msra.mxu0 0.0
    %433 = vmatprep.subr.mxu0 0.0
    %434 = vmatpush2.msra.mxu0 0.0
    %435 = vmatprep.subr.mxu0 0.0
    %436 = vmatpush2.msra.mxu0 0.0
    %437 = vmatprep.subr.mxu0 0.0
    %438 = vmatpush2.msra.mxu0 0.0
    %439 = vmatprep.subr.mxu0 0.0
    %440 = vmatpush2.msra.mxu0 0.0
    %441 = vmatprep.subr.mxu0 0.0
    %442 = vmatpush2.msra.mxu0 0.0
    %443 = vmatprep.mubr.f32.mxu0 0.0
    %444 = vmatmul.mubr.f32.gmra.mxu0 %v378
    %v445 = vpop.f32.mrf.mxu0
    %v446 = vadd.f32 %v231, %v445
    %v447 = vpop.f32.mrf.mxu0
    %448 = vdwg.mxu0
    %v449 = vtanh.pop %v446
    %450 = vmatprep.subr.mxu0 0.0
    %451 = vmatpush1.msra.mxu0 %v226
    %452 = vmatprep.subr.mxu0 0.0
    %453 = vmatpush1.msra.mxu0 %v225
    %454 = vmatprep.subr.mxu0 0.0
    %455 = vmatpush1.msra.mxu0 %v224
    %456 = vmatprep.subr.mxu0 0.0
    %457 = vmatpush1.msra.mxu0 %v223
    %458 = vmatprep.subr.mxu0 0.0
    %459 = vmatpush1.msra.mxu0 %v222
    %460 = vmatprep.subr.mxu0 0.0
    %461 = vmatpush1.msra.mxu0 %v221
    %462 = vmatprep.subr.mxu0 0.0
    %463 = vmatpush1.msra.mxu0 %v220
    %464 = vmatprep.subr.mxu0 0.0
    %465 = vmatpush1.msra.mxu0 %v219
    %466 = vmatprep.subr.mxu0 0.0
    %467 = vmatpush1.msra.mxu0 %v218
    %468 = vmatprep.subr.mxu0 0.0
    %469 = vmatpush1.msra.mxu0 %v217
    %470 = vmatprep.subr.mxu0 0.0
    %471 = vmatpush1.msra.mxu0 %v216
    %472 = vmatprep.subr.mxu0 0.0
    %473 = vmatpush1.msra.mxu0 %v215
    %474 = vmatprep.subr.mxu0 0.0
    %475 = vmatpush1.msra.mxu0 %v214
    %476 = vmatprep.subr.mxu0 0.0
    %477 = vmatpush1.msra.mxu0 %v213
    %478 = vmatprep.subr.mxu0 0.0
    %479 = vmatpush1.msra.mxu0 %v212
    %480 = vmatprep.subr.mxu0 0.0
    %481 = vmatpush1.msra.mxu0 %v211
    %482 = vmatprep.subr.mxu0 0.0
    %483 = vmatpush2.msra.mxu0 0.0
    %484 = vmatprep.subr.mxu0 0.0
    %485 = vmatpush2.msra.mxu0 0.0
    %486 = vmatprep.subr.mxu0 0.0
    %487 = vmatpush2.msra.mxu0 0.0
    %488 = vmatprep.subr.mxu0 0.0
    %489 = vmatpush2.msra.mxu0 0.0
    %490 = vmatprep.subr.mxu0 0.0
    %491 = vmatpush2.msra.mxu0 0.0
    %492 = vmatprep.subr.mxu0 0.0
    %493 = vmatpush2.msra.mxu0 0.0
    %494 = vmatprep.subr.mxu0 0.0
    %495 = vmatpush2.msra.mxu0 0.0
    %496 = vmatprep.subr.mxu0 0.0
    %497 = vmatpush2.msra.mxu0 0.0
    %498 = vmatprep.subr.mxu0 0.0
    %499 = vmatpush2.msra.mxu0 0.0
    %500 = vmatprep.subr.mxu0 0.0
    %501 = vmatpush2.msra.mxu0 0.0
    %502 = vmatprep.subr.mxu0 0.0
    %503 = vmatpush2.msra.mxu0 0.0
    %504 = vmatprep.subr.mxu0 0.0
    %505 = vmatpush2.msra.mxu0 0.0
    %506 = vmatprep.subr.mxu0 0.0
    %507 = vmatpush2.msra.mxu0 0.0
    %508 = vmatprep.subr.mxu0 0.0
    %509 = vmatpush2.msra.mxu0 0.0
    %510 = vmatprep.subr.mxu0 0.0
    %511 = vmatpush2.msra.mxu0 0.0
    %512 = vmatprep.subr.mxu0 0.0
    %513 = vmatpush2.msra.mxu0 0.0
    %514 = vmatprep.mubr.f32.mxu0 0.0
    %515 = vmatmul.mubr.f32.gmra.mxu0 %v449
    %v516 = vpop.f32.mrf.mxu0
    %v517 = vadd.f32 0.0, %v516
    %v518 = vpop.f32.mrf.mxu0
    %519 = vdwg.mxu0
    %v520 = vmul.f32 %v376, %v517
    %v521 = vadd.f32 %v93, %v520
    %522 = vmatprep.subr.mxu0 0.0
    %523 = vmatpush1.msra.mxu0 %v210
    %524 = vmatprep.subr.mxu0 0.0
    %525 = vmatpush1.msra.mxu0 %v209
    %526 = vmatprep.subr.mxu0 0.0
    %527 = vmatpush1.msra.mxu0 %v208
    %528 = vmatprep.subr.mxu0 0.0
    %529 = vmatpush1.msra.mxu0 %v207
    %530 = vmatprep.subr.mxu0 0.0
    %531 = vmatpush1.msra.mxu0 %v206
    %532 = vmatprep.subr.mxu0 0.0
    %533 = vmatpush1.msra.mxu0 %v205
    %534 = vmatprep.subr.mxu0 0.0
    %535 = vmatpush1.msra.mxu0 %v204
    %536 = vmatprep.subr.mxu0 0.0
    %537 = vmatpush1.msra.mxu0 %v203
    %538 = vmatprep.subr.mxu0 0.0
    %539 = vmatpush1.msra.mxu0 %v202
    %540 = vmatprep.subr.mxu0 0.0
    %541 = vmatpush1.msra.mxu0 %v201
    %542 = vmatprep.subr.mxu0 0.0
    %543 = vmatpush1.msra.mxu0 %v200
    %544 = vmatprep.subr.mxu0 0.0
    %545 = vmatpush1.msra.mxu0 %v199
    %546 = vmatprep.subr.mxu0 0.0
    %547 = vmatpush1.msra.mxu0 %v198
    %548 = vmatprep.subr.mxu0 0.0
    %549 = vmatpush1.msra.mxu0 %v197
    %550 = vmatprep.subr.mxu0 0.0
    %551 = vmatpush1.msra.mxu0 %v196
    %552 = vmatprep.subr.mxu0 0.0
    %553 = vmatpush1.msra.mxu0 %v195
    %554 = vmatprep.subr.mxu0 0.0
    %555 = vmatpush2.msra.mxu0 0.0
    %556 = vmatprep.subr.mxu0 0.0
    %557 = vmatpush2.msra.mxu0 0.0
    %558 = vmatprep.subr.mxu0 0.0
    %559 = vmatpush2.msra.mxu0 0.0
    %560 = vmatprep.subr.mxu0 0.0
    %561 = vmatpush2.msra.mxu0 0.0
    %562 = vmatprep.subr.mxu0 0.0
    %563 = vmatpush2.msra.mxu0 0.0
    %564 = vmatprep.subr.mxu0 0.0
    %565 = vmatpush2.msra.mxu0 0.0
    %566 = vmatprep.subr.mxu0 0.0
    %567 = vmatpush2.msra.mxu0 0.0
    %568 = vmatprep.subr.mxu0 0.0
    %569 = vmatpush2.msra.mxu0 0.0
    %570 = vmatprep.subr.mxu0 0.0
    %571 = vmatpush2.msra.mxu0 0.0
    %572 = vmatprep.subr.mxu0 0.0
    %573 = vmatpush2.msra.mxu0 0.0
    %574 = vmatprep.subr.mxu0 0.0
    %575 = vmatpush2.msra.mxu0 0.0
    %576 = vmatprep.subr.mxu0 0.0
    %577 = vmatpush2.msra.mxu0 0.0
    %578 = vmatprep.subr.mxu0 0.0
    %579 = vmatpush2.msra.mxu0 0.0
    %580 = vmatprep.subr.mxu0 0.0
    %581 = vmatpush2.msra.mxu0 0.0
    %582 = vmatprep.subr.mxu0 0.0
    %583 = vmatpush2.msra.mxu0 0.0
    %584 = vmatprep.subr.mxu0 0.0
    %585 = vmatpush2.msra.mxu0 0.0
    %586 = vmatprep.mubr.f32.mxu0 0.0
    %587 = vmatmul.mubr.f32.gmra.mxu0 %v521
    %v588 = vpop.f32.mrf.mxu0
    %v589 = vadd.f32 %v231, %v588
    %v590 = vpop.f32.mrf.mxu0
    %591 = vdwg.mxu0
    %v592 = vtanh.pop %v589
    %593 = vmatprep.subr.mxu0 0.0
    %594 = vmatpush1.msra.mxu0 %v226
    %595 = vmatprep.subr.mxu0 0.0
    %596 = vmatpush1.msra.mxu0 %v225
    %597 = vmatprep.subr.mxu0 0.0
    %598 = vmatpush1.msra.mxu0 %v224
    %599 = vmatprep.subr.mxu0 0.0
    %600 = vmatpush1.msra.mxu0 %v223
    %601 = vmatprep.subr.mxu0 0.0
    %602 = vmatpush1.msra.mxu0 %v222
    %603 = vmatprep.subr.mxu0 0.0
    %604 = vmatpush1.msra.mxu0 %v221
    %605 = vmatprep.subr.mxu0 0.0
    %606 = vmatpush1.msra.mxu0 %v220
    %607 = vmatprep.subr.mxu0 0.0
    %608 = vmatpush1.msra.mxu0 %v219
    %609 = vmatprep.subr.mxu0 0.0
    %610 = vmatpush1.msra.mxu0 %v218
    %611 = vmatprep.subr.mxu0 0.0
    %612 = vmatpush1.msra.mxu0 %v217
    %613 = vmatprep.subr.mxu0 0.0
    %614 = vmatpush1.msra.mxu0 %v216
    %615 = vmatprep.subr.mxu0 0.0
    %616 = vmatpush1.msra.mxu0 %v215
    %617 = vmatprep.subr.mxu0 0.0
    %618 = vmatpush1.msra.mxu0 %v214
    %619 = vmatprep.subr.mxu0 0.0
    %620 = vmatpush1.msra.mxu0 %v213
    %621 = vmatprep.subr.mxu0 0.0
    %622 = vmatpush1.msra.mxu0 %v212
    %623 = vmatprep.subr.mxu0 0.0
    %624 = vmatpush1.msra.mxu0 %v211
    %625 = vmatprep.subr.mxu0 0.0
    %626 = vmatpush2.msra.mxu0 0.0
    %627 = vmatprep.subr.mxu0 0.0
    %628 = vmatpush2.msra.mxu0 0.0
    %629 = vmatprep.subr.mxu0 0.0
    %630 = vmatpush2.msra.mxu0 0.0
    %631 = vmatprep.subr.mxu0 0.0
    %632 = vmatpush2.msra.mxu0 0.0
    %633 = vmatprep.subr.mxu0 0.0
    %634 = vmatpush2.msra.mxu0 0.0
    %635 = vmatprep.subr.mxu0 0.0
    %636 = vmatpush2.msra.mxu0 0.0
    %637 = vmatprep.subr.mxu0 0.0
    %638 = vmatpush2.msra.mxu0 0.0
    %639 = vmatprep.subr.mxu0 0.0
    %640 = vmatpush2.msra.mxu0 0.0
    %641 = vmatprep.subr.mxu0 0.0
    %642 = vmatpush2.msra.mxu0 0.0
    %643 = vmatprep.subr.mxu0 0.0
    %644 = vmatpush2.msra.mxu0 0.0
    %645 = vmatprep.subr.mxu0 0.0
    %646 = vmatpush2.msra.mxu0 0.0
    %647 = vmatprep.subr.mxu0 0.0
    %648 = vmatpush2.msra.mxu0 0.0
    %649 = vmatprep.subr.mxu0 0.0
    %650 = vmatpush2.msra.mxu0 0.0
    %651 = vmatprep.subr.mxu0 0.0
    %652 = vmatpush2.msra.mxu0 0.0
    %653 = vmatprep.subr.mxu0 0.0
    %654 = vmatpush2.msra.mxu0 0.0
    %655 = vmatprep.subr.mxu0 0.0
    %656 = vmatpush2.msra.mxu0 0.0
    %657 = vmatprep.mubr.f32.mxu0 0.0
    %658 = vmatmul.mubr.f32.gmra.mxu0 %v592
    %v659 = vpop.f32.mrf.mxu0
    %v660 = vadd.f32 0.0, %v659
    %v661 = vpop.f32.mrf.mxu0
    %662 = vdwg.mxu0
    %v663 = vstv %s98
    %v664 = vmul.f32 %v663, %v660
    %v665 = vadd.f32 %v93, %v664
    %666 = vmatprep.subr.mxu0 0.0
    %667 = vmatpush1.msra.mxu0 %v210
    %668 = vmatprep.subr.mxu0 0.0
    %669 = vmatpush1.msra.mxu0 %v209
    %670 = vmatprep.subr.mxu0 0.0
    %671 = vmatpush1.msra.mxu0 %v208
    %672 = vmatprep.subr.mxu0 0.0
    %673 = vmatpush1.msra.mxu0 %v207
    %674 = vmatprep.subr.mxu0 0.0
    %675 = vmatpush1.msra.mxu0 %v206
    %676 = vmatprep.subr.mxu0 0.0
    %677 = vmatpush1.msra.mxu0 %v205
    %678 = vmatprep.subr.mxu0 0.0
    %679 = vmatpush1.msra.mxu0 %v204
    %680 = vmatprep.subr.mxu0 0.0
    %681 = vmatpush1.msra.mxu0 %v203
    %682 = vmatprep.subr.mxu0 0.0
    %683 = vmatpush1.msra.mxu0 %v202
    %684 = vmatprep.subr.mxu0 0.0
    %685 = vmatpush1.msra.mxu0 %v201
    %686 = vmatprep.subr.mxu0 0.0
    %687 = vmatpush1.msra.mxu0 %v200
    %688 = vmatprep.subr.mxu0 0.0
    %689 = vmatpush1.msra.mxu0 %v199
    %690 = vmatprep.subr.mxu0 0.0
    %691 = vmatpush1.msra.mxu0 %v198
    %692 = vmatprep.subr.mxu0 0.0
    %693 = vmatpush1.msra.mxu0 %v197
    %694 = vmatprep.subr.mxu0 0.0
    %695 = vmatpush1.msra.mxu0 %v196
    %696 = vmatprep.subr.mxu0 0.0
    %697 = vmatpush1.msra.mxu0 %v195
    %698 = vmatprep.subr.mxu0 0.0
    %699 = vmatpush2.msra.mxu0 0.0
    %700 = vmatprep.subr.mxu0 0.0
    %701 = vmatpush2.msra.mxu0 0.0
    %702 = vmatprep.subr.mxu0 0.0
    %703 = vmatpush2.msra.mxu0 0.0
    %704 = vmatprep.subr.mxu0 0.0
    %705 = vmatpush2.msra.mxu0 0.0
    %706 = vmatprep.subr.mxu0 0.0
    %707 = vmatpush2.msra.mxu0 0.0
    %708 = vmatprep.subr.mxu0 0.0
    %709 = vmatpush2.msra.mxu0 0.0
    %710 = vmatprep.subr.mxu0 0.0
    %711 = vmatpush2.msra.mxu0 0.0
    %712 = vmatprep.subr.mxu0 0.0
    %713 = vmatpush2.msra.mxu0 0.0
    %714 = vmatprep.subr.mxu0 0.0
    %715 = vmatpush2.msra.mxu0 0.0
    %716 = vmatprep.subr.mxu0 0.0
    %717 = vmatpush2.msra.mxu0 0.0
    %718 = vmatprep.subr.mxu0 0.0
    %719 = vmatpush2.msra.mxu0 0.0
    %720 = vmatprep.subr.mxu0 0.0
    %721 = vmatpush2.msra.mxu0 0.0
    %722 = vmatprep.subr.mxu0 0.0
    %723 = vmatpush2.msra.mxu0 0.0
    %724 = vmatprep.subr.mxu0 0.0
    %725 = vmatpush2.msra.mxu0 0.0
    %726 = vmatprep.subr.mxu0 0.0
    %727 = vmatpush2.msra.mxu0 0.0
    %728 = vmatprep.subr.mxu0 0.0
    %729 = vmatpush2.msra.mxu0 0.0
    %730 = vmatprep.mubr.f32.mxu0 0.0
    %731 = vmatmul.mubr.f32.gmra.mxu0 %v665
    %v732 = vpop.f32.mrf.mxu0
    %v733 = vadd.f32 %v234, %v732
    %v734 = vpop.f32.mrf.mxu0
    %735 = vdwg.mxu0
    %v736 = vtanh.pop %v733
    %737 = vmatprep.subr.mxu0 0.0
    %738 = vmatpush1.msra.mxu0 %v226
    %739 = vmatprep.subr.mxu0 0.0
    %740 = vmatpush1.msra.mxu0 %v225
    %741 = vmatprep.subr.mxu0 0.0
    %742 = vmatpush1.msra.mxu0 %v224
    %743 = vmatprep.subr.mxu0 0.0
    %744 = vmatpush1.msra.mxu0 %v223
    %745 = vmatprep.subr.mxu0 0.0
    %746 = vmatpush1.msra.mxu0 %v222
    %747 = vmatprep.subr.mxu0 0.0
    %748 = vmatpush1.msra.mxu0 %v221
    %749 = vmatprep.subr.mxu0 0.0
    %750 = vmatpush1.msra.mxu0 %v220
    %751 = vmatprep.subr.mxu0 0.0
    %752 = vmatpush1.msra.mxu0 %v219
    %753 = vmatprep.subr.mxu0 0.0
    %754 = vmatpush1.msra.mxu0 %v218
    %755 = vmatprep.subr.mxu0 0.0
    %756 = vmatpush1.msra.mxu0 %v217
    %757 = vmatprep.subr.mxu0 0.0
    %758 = vmatpush1.msra.mxu0 %v216
    %759 = vmatprep.subr.mxu0 0.0
    %760 = vmatpush1.msra.mxu0 %v215
    %761 = vmatprep.subr.mxu0 0.0
    %762 = vmatpush1.msra.mxu0 %v214
    %763 = vmatprep.subr.mxu0 0.0
    %764 = vmatpush1.msra.mxu0 %v213
    %765 = vmatprep.subr.mxu0 0.0
    %766 = vmatpush1.msra.mxu0 %v212
    %767 = vmatprep.subr.mxu0 0.0
    %768 = vmatpush1.msra.mxu0 %v211
    %769 = vmatprep.subr.mxu0 0.0
    %770 = vmatpush2.msra.mxu0 0.0
    %771 = vmatprep.subr.mxu0 0.0
    %772 = vmatpush2.msra.mxu0 0.0
    %773 = vmatprep.subr.mxu0 0.0
    %774 = vmatpush2.msra.mxu0 0.0
    %775 = vmatprep.subr.mxu0 0.0
    %776 = vmatpush2.msra.mxu0 0.0
    %777 = vmatprep.subr.mxu0 0.0
    %778 = vmatpush2.msra.mxu0 0.0
    %779 = vmatprep.subr.mxu0 0.0
    %780 = vmatpush2.msra.mxu0 0.0
    %781 = vmatprep.subr.mxu0 0.0
    %782 = vmatpush2.msra.mxu0 0.0
    %783 = vmatprep.subr.mxu0 0.0
    %784 = vmatpush2.msra.mxu0 0.0
    %785 = vmatprep.subr.mxu0 0.0
    %786 = vmatpush2.msra.mxu0 0.0
    %787 = vmatprep.subr.mxu0 0.0
    %788 = vmatpush2.msra.mxu0 0.0
    %789 = vmatprep.subr.mxu0 0.0
    %790 = vmatpush2.msra.mxu0 0.0
    %791 = vmatprep.subr.mxu0 0.0
    %792 = vmatpush2.msra.mxu0 0.0
    %793 = vmatprep.subr.mxu0 0.0
    %794 = vmatpush2.msra.mxu0 0.0
    %795 = vmatprep.subr.mxu0 0.0
    %796 = vmatpush2.msra.mxu0 0.0
    %797 = vmatprep.subr.mxu0 0.0
    %798 = vmatpush2.msra.mxu0 0.0
    %799 = vmatprep.subr.mxu0 0.0
    %800 = vmatpush2.msra.mxu0 0.0
    %801 = vmatprep.mubr.f32.mxu0 0.0
    %802 = vmatmul.mubr.f32.gmra.mxu0 %v736
    %v803 = vpop.f32.mrf.mxu0
    %v804 = vadd.f32 0.0, %v803
    %v805 = vpop.f32.mrf.mxu0
    %806 = vdwg.mxu0
    %v807 = vmul.f32 %v517, 2.0
    %v808 = vadd.f32 %v373, %v807
    %v809 = vmul.f32 %v660, 2.0
    %v810 = vadd.f32 %v808, %v809
    %v811 = vadd.f32 %v810, %v804
    %v812 = vstv %s100
    %v813 = vmul.f32 %v812, %v811
    %v814 = vadd.f32 %v93, %v813
    %v815 = vtanh.pop %v814
    %s816 = scalar_lea.vmem [#allocation13], 8
    %817 = vst [vmem:[%s816] sm:$0xff] %v815
    %s818 = sld [smem:[#allocation3 + $0x1]]
    %v819 = vstv %s818
    %v820 = vadd.f32 %v192, %v819
    %s821 = sadd.f32 %s818, %s99
    %v822 = vstv %s821
    %v823 = vadd.f32 %v192, %v822
    %s824 = sadd.f32 %s818, %s98
    %v825 = vstv %s824
    %v826 = vadd.f32 %v192, %v825
    %827 = vmatprep.subr.mxu0 0.0
    %828 = vmatpush1.msra.mxu0 %v210
    %829 = vmatprep.subr.mxu0 0.0
    %830 = vmatpush1.msra.mxu0 %v209
    %831 = vmatprep.subr.mxu0 0.0
    %832 = vmatpush1.msra.mxu0 %v208
    %833 = vmatprep.subr.mxu0 0.0
    %834 = vmatpush1.msra.mxu0 %v207
    %835 = vmatprep.subr.mxu0 0.0
    %836 = vmatpush1.msra.mxu0 %v206
    %837 = vmatprep.subr.mxu0 0.0
    %838 = vmatpush1.msra.mxu0 %v205
    %839 = vmatprep.subr.mxu0 0.0
    %840 = vmatpush1.msra.mxu0 %v204
    %841 = vmatprep.subr.mxu0 0.0
    %842 = vmatpush1.msra.mxu0 %v203
    %843 = vmatprep.subr.mxu0 0.0
    %844 = vmatpush1.msra.mxu0 %v202
    %845 = vmatprep.subr.mxu0 0.0
    %846 = vmatpush1.msra.mxu0 %v201
    %847 = vmatprep.subr.mxu0 0.0
    %848 = vmatpush1.msra.mxu0 %v200
    %849 = vmatprep.subr.mxu0 0.0
    %850 = vmatpush1.msra.mxu0 %v199
    %851 = vmatprep.subr.mxu0 0.0
    %852 = vmatpush1.msra.mxu0 %v198
    %853 = vmatprep.subr.mxu0 0.0
    %854 = vmatpush1.msra.mxu0 %v197
    %855 = vmatprep.subr.mxu0 0.0
    %856 = vmatpush1.msra.mxu0 %v196
    %857 = vmatprep.subr.mxu0 0.0
    %858 = vmatpush1.msra.mxu0 %v195
    %859 = vmatprep.subr.mxu0 0.0
    %860 = vmatpush2.msra.mxu0 0.0
    %861 = vmatprep.subr.mxu0 0.0
    %862 = vmatpush2.msra.mxu0 0.0
    %863 = vmatprep.subr.mxu0 0.0
    %864 = vmatpush2.msra.mxu0 0.0
    %865 = vmatprep.subr.mxu0 0.0
    %866 = vmatpush2.msra.mxu0 0.0
    %867 = vmatprep.subr.mxu0 0.0
    %868 = vmatpush2.msra.mxu0 0.0
    %869 = vmatprep.subr.mxu0 0.0
    %870 = vmatpush2.msra.mxu0 0.0
    %871 = vmatprep.subr.mxu0 0.0
    %872 = vmatpush2.msra.mxu0 0.0
    %873 = vmatprep.subr.mxu0 0.0
    %874 = vmatpush2.msra.mxu0 0.0
    %875 = vmatprep.subr.mxu0 0.0
    %876 = vmatpush2.msra.mxu0 0.0
    %877 = vmatprep.subr.mxu0 0.0
    %878 = vmatpush2.msra.mxu0 0.0
    %879 = vmatprep.subr.mxu0 0.0
    %880 = vmatpush2.msra.mxu0 0.0
    %881 = vmatprep.subr.mxu0 0.0
    %882 = vmatpush2.msra.mxu0 0.0
    %883 = vmatprep.subr.mxu0 0.0
    %884 = vmatpush2.msra.mxu0 0.0
    %885 = vmatprep.subr.mxu0 0.0
    %886 = vmatpush2.msra.mxu0 0.0
    %887 = vmatprep.subr.mxu0 0.0
    %888 = vmatpush2.msra.mxu0 0.0
    %889 = vmatprep.subr.mxu0 0.0
    %890 = vmatpush2.msra.mxu0 0.0
    %891 = vmatprep.mubr.f32.mxu0 0.0
    %892 = vmatmul.mubr.f32.gmra.mxu0 %v815
    %v893 = vpop.f32.mrf.mxu0
    %v894 = vadd.f32 %v820, %v893
    %v895 = vpop.f32.mrf.mxu0
    %896 = vdwg.mxu0
    %v897 = vtanh.pop %v894
    %898 = vmatprep.subr.mxu0 0.0
    %899 = vmatpush1.msra.mxu0 %v226
    %900 = vmatprep.subr.mxu0 0.0
    %901 = vmatpush1.msra.mxu0 %v225
    %902 = vmatprep.subr.mxu0 0.0
    %903 = vmatpush1.msra.mxu0 %v224
    %904 = vmatprep.subr.mxu0 0.0
    %905 = vmatpush1.msra.mxu0 %v223
    %906 = vmatprep.subr.mxu0 0.0
    %907 = vmatpush1.msra.mxu0 %v222
    %908 = vmatprep.subr.mxu0 0.0
    %909 = vmatpush1.msra.mxu0 %v221
    %910 = vmatprep.subr.mxu0 0.0
    %911 = vmatpush1.msra.mxu0 %v220
    %912 = vmatprep.subr.mxu0 0.0
    %913 = vmatpush1.msra.mxu0 %v219
    %914 = vmatprep.subr.mxu0 0.0
    %915 = vmatpush1.msra.mxu0 %v218
    %916 = vmatprep.subr.mxu0 0.0
    %917 = vmatpush1.msra.mxu0 %v217
    %918 = vmatprep.subr.mxu0 0.0
    %919 = vmatpush1.msra.mxu0 %v216
    %920 = vmatprep.subr.mxu0 0.0
    %921 = vmatpush1.msra.mxu0 %v215
    %922 = vmatprep.subr.mxu0 0.0
    %923 = vmatpush1.msra.mxu0 %v214
    %924 = vmatprep.subr.mxu0 0.0
    %925 = vmatpush1.msra.mxu0 %v213
    %926 = vmatprep.subr.mxu0 0.0
    %927 = vmatpush1.msra.mxu0 %v212
    %928 = vmatprep.subr.mxu0 0.0
    %929 = vmatpush1.msra.mxu0 %v211
    %930 = vmatprep.subr.mxu0 0.0
    %931 = vmatpush2.msra.mxu0 0.0
    %932 = vmatprep.subr.mxu0 0.0
    %933 = vmatpush2.msra.mxu0 0.0
    %934 = vmatprep.subr.mxu0 0.0
    %935 = vmatpush2.msra.mxu0 0.0
    %936 = vmatprep.subr.mxu0 0.0
    %937 = vmatpush2.msra.mxu0 0.0
    %938 = vmatprep.subr.mxu0 0.0
    %939 = vmatpush2.msra.mxu0 0.0
    %940 = vmatprep.subr.mxu0 0.0
    %941 = vmatpush2.msra.mxu0 0.0
    %942 = vmatprep.subr.mxu0 0.0
    %943 = vmatpush2.msra.mxu0 0.0
    %944 = vmatprep.subr.mxu0 0.0
    %945 = vmatpush2.msra.mxu0 0.0
    %946 = vmatprep.subr.mxu0 0.0
    %947 = vmatpush2.msra.mxu0 0.0
    %948 = vmatprep.subr.mxu0 0.0
    %949 = vmatpush2.msra.mxu0 0.0
    %950 = vmatprep.subr.mxu0 0.0
    %951 = vmatpush2.msra.mxu0 0.0
    %952 = vmatprep.subr.mxu0 0.0
    %953 = vmatpush2.msra.mxu0 0.0
    %954 = vmatprep.subr.mxu0 0.0
    %955 = vmatpush2.msra.mxu0 0.0
    %956 = vmatprep.subr.mxu0 0.0
    %957 = vmatpush2.msra.mxu0 0.0
    %958 = vmatprep.subr.mxu0 0.0
    %959 = vmatpush2.msra.mxu0 0.0
    %960 = vmatprep.subr.mxu0 0.0
    %961 = vmatpush2.msra.mxu0 0.0
    %962 = vmatprep.mubr.f32.mxu0 0.0
    %963 = vmatmul.mubr.f32.gmra.mxu0 %v897
    %v964 = vpop.f32.mrf.mxu0
    %v965 = vadd.f32 0.0, %v964
    %v966 = vpop.f32.mrf.mxu0
    %967 = vdwg.mxu0
    %v968 = vmul.f32 %v376, %v965
    %v969 = vadd.f32 %v815, %v968
    %970 = vmatprep.subr.mxu0 0.0
    %971 = vmatpush1.msra.mxu0 %v210
    %972 = vmatprep.subr.mxu0 0.0
    %973 = vmatpush1.msra.mxu0 %v209
    %974 = vmatprep.subr.mxu0 0.0
    %975 = vmatpush1.msra.mxu0 %v208
    %976 = vmatprep.subr.mxu0 0.0
    %977 = vmatpush1.msra.mxu0 %v207
    %978 = vmatprep.subr.mxu0 0.0
    %979 = vmatpush1.msra.mxu0 %v206
    %980 = vmatprep.subr.mxu0 0.0
    %981 = vmatpush1.msra.mxu0 %v205
    %982 = vmatprep.subr.mxu0 0.0
    %983 = vmatpush1.msra.mxu0 %v204
    %984 = vmatprep.subr.mxu0 0.0
    %985 = vmatpush1.msra.mxu0 %v203
    %986 = vmatprep.subr.mxu0 0.0
    %987 = vmatpush1.msra.mxu0 %v202
    %988 = vmatprep.subr.mxu0 0.0
    %989 = vmatpush1.msra.mxu0 %v201
    %990 = vmatprep.subr.mxu0 0.0
    %991 = vmatpush1.msra.mxu0 %v200
    %992 = vmatprep.subr.mxu0 0.0
    %993 = vmatpush1.msra.mxu0 %v199
    %994 = vmatprep.subr.mxu0 0.0
    %995 = vmatpush1.msra.mxu0 %v198
    %996 = vmatprep.subr.mxu0 0.0
    %997 = vmatpush1.msra.mxu0 %v197
    %998 = vmatprep.subr.mxu0 0.0
    %999 = vmatpush1.msra.mxu0 %v196
    %1000 = vmatprep.subr.mxu0 0.0
    %1001 = vmatpush1.msra.mxu0 %v195
    %1002 = vmatprep.subr.mxu0 0.0
    %1003 = vmatpush2.msra.mxu0 0.0
    %1004 = vmatprep.subr.mxu0 0.0
    %1005 = vmatpush2.msra.mxu0 0.0
    %1006 = vmatprep.subr.mxu0 0.0
    %1007 = vmatpush2.msra.mxu0 0.0
    %1008 = vmatprep.subr.mxu0 0.0
    %1009 = vmatpush2.msra.mxu0 0.0
    %1010 = vmatprep.subr.mxu0 0.0
    %1011 = vmatpush2.msra.mxu0 0.0
    %1012 = vmatprep.subr.mxu0 0.0
    %1013 = vmatpush2.msra.mxu0 0.0
    %1014 = vmatprep.subr.mxu0 0.0
    %1015 = vmatpush2.msra.mxu0 0.0
    %1016 = vmatprep.subr.mxu0 0.0
    %1017 = vmatpush2.msra.mxu0 0.0
    %1018 = vmatprep.subr.mxu0 0.0
    %1019 = vmatpush2.msra.mxu0 0.0
    %1020 = vmatprep.subr.mxu0 0.0
    %1021 = vmatpush2.msra.mxu0 0.0
    %1022 = vmatprep.subr.mxu0 0.0
    %1023 = vmatpush2.msra.mxu0 0.0
    %1024 = vmatprep.subr.mxu0 0.0
    %1025 = vmatpush2.msra.mxu0 0.0
    %1026 = vmatprep.subr.mxu0 0.0
    %1027 = vmatpush2.msra.mxu0 0.0
    %1028 = vmatprep.subr.mxu0 0.0
    %1029 = vmatpush2.msra.mxu0 0.0
    %1030 = vmatprep.subr.mxu0 0.0
    %1031 = vmatpush2.msra.mxu0 0.0
    %1032 = vmatprep.subr.mxu0 0.0
    %1033 = vmatpush2.msra.mxu0 0.0
    %1034 = vmatprep.mubr.f32.mxu0 0.0
    %1035 = vmatmul.mubr.f32.gmra.mxu0 %v969
    %v1036 = vpop.f32.mrf.mxu0
    %v1037 = vadd.f32 %v823, %v1036
    %v1038 = vpop.f32.mrf.mxu0
    %1039 = vdwg.mxu0
    %v1040 = vtanh.pop %v1037
    %1041 = vmatprep.subr.mxu0 0.0
    %1042 = vmatpush1.msra.mxu0 %v226
    %1043 = vmatprep.subr.mxu0 0.0
    %1044 = vmatpush1.msra.mxu0 %v225
    %1045 = vmatprep.subr.mxu0 0.0
    %1046 = vmatpush1.msra.mxu0 %v224
    %1047 = vmatprep.subr.mxu0 0.0
    %1048 = vmatpush1.msra.mxu0 %v223
    %1049 = vmatprep.subr.mxu0 0.0
    %1050 = vmatpush1.msra.mxu0 %v222
    %1051 = vmatprep.subr.mxu0 0.0
    %1052 = vmatpush1.msra.mxu0 %v221
    %1053 = vmatprep.subr.mxu0 0.0
    %1054 = vmatpush1.msra.mxu0 %v220
    %1055 = vmatprep.subr.mxu0 0.0
    %1056 = vmatpush1.msra.mxu0 %v219
    %1057 = vmatprep.subr.mxu0 0.0
    %1058 = vmatpush1.msra.mxu0 %v218
    %1059 = vmatprep.subr.mxu0 0.0
    %1060 = vmatpush1.msra.mxu0 %v217
    %1061 = vmatprep.subr.mxu0 0.0
    %1062 = vmatpush1.msra.mxu0 %v216
    %1063 = vmatprep.subr.mxu0 0.0
    %1064 = vmatpush1.msra.mxu0 %v215
    %1065 = vmatprep.subr.mxu0 0.0
    %1066 = vmatpush1.msra.mxu0 %v214
    %1067 = vmatprep.subr.mxu0 0.0
    %1068 = vmatpush1.msra.mxu0 %v213
    %1069 = vmatprep.subr.mxu0 0.0
    %1070 = vmatpush1.msra.mxu0 %v212
    %1071 = vmatprep.subr.mxu0 0.0
    %1072 = vmatpush1.msra.mxu0 %v211
    %1073 = vmatprep.subr.mxu0 0.0
    %1074 = vmatpush2.msra.mxu0 0.0
    %1075 = vmatprep.subr.mxu0 0.0
    %1076 = vmatpush2.msra.mxu0 0.0
    %1077 = vmatprep.subr.mxu0 0.0
    %1078 = vmatpush2.msra.mxu0 0.0
    %1079 = vmatprep.subr.mxu0 0.0
    %1080 = vmatpush2.msra.mxu0 0.0
    %1081 = vmatprep.subr.mxu0 0.0
    %1082 = vmatpush2.msra.mxu0 0.0
    %1083 = vmatprep.subr.mxu0 0.0
    %1084 = vmatpush2.msra.mxu0 0.0
    %1085 = vmatprep.subr.mxu0 0.0
    %1086 = vmatpush2.msra.mxu0 0.0
    %1087 = vmatprep.subr.mxu0 0.0
    %1088 = vmatpush2.msra.mxu0 0.0
    %1089 = vmatprep.subr.mxu0 0.0
    %1090 = vmatpush2.msra.mxu0 0.0
    %1091 = vmatprep.subr.mxu0 0.0
    %1092 = vmatpush2.msra.mxu0 0.0
    %1093 = vmatprep.subr.mxu0 0.0
    %1094 = vmatpush2.msra.mxu0 0.0
    %1095 = vmatprep.subr.mxu0 0.0
    %1096 = vmatpush2.msra.mxu0 0.0
    %1097 = vmatprep.subr.mxu0 0.0
    %1098 = vmatpush2.msra.mxu0 0.0
    %1099 = vmatprep.subr.mxu0 0.0
    %1100 = vmatpush2.msra.mxu0 0.0
    %1101 = vmatprep.subr.mxu0 0.0
    %1102 = vmatpush2.msra.mxu0 0.0
    %1103 = vmatprep.subr.mxu0 0.0
    %1104 = vmatpush2.msra.mxu0 0.0
    %1105 = vmatprep.mubr.f32.mxu0 0.0
    %1106 = vmatmul.mubr.f32.gmra.mxu0 %v1040
    %v1107 = vpop.f32.mrf.mxu0
    %v1108 = vadd.f32 0.0, %v1107
    %v1109 = vpop.f32.mrf.mxu0
    %1110 = vdwg.mxu0
    %v1111 = vmul.f32 %v376, %v1108
    %v1112 = vadd.f32 %v815, %v1111
    %1113 = vmatprep.subr.mxu0 0.0
    %1114 = vmatpush1.msra.mxu0 %v210
    %1115 = vmatprep.subr.mxu0 0.0
    %1116 = vmatpush1.msra.mxu0 %v209
    %1117 = vmatprep.subr.mxu0 0.0
    %1118 = vmatpush1.msra.mxu0 %v208
    %1119 = vmatprep.subr.mxu0 0.0
    %1120 = vmatpush1.msra.mxu0 %v207
    %1121 = vmatprep.subr.mxu0 0.0
    %1122 = vmatpush1.msra.mxu0 %v206
    %1123 = vmatprep.subr.mxu0 0.0
    %1124 = vmatpush1.msra.mxu0 %v205
    %1125 = vmatprep.subr.mxu0 0.0
    %1126 = vmatpush1.msra.mxu0 %v204
    %1127 = vmatprep.subr.mxu0 0.0
    %1128 = vmatpush1.msra.mxu0 %v203
    %1129 = vmatprep.subr.mxu0 0.0
    %1130 = vmatpush1.msra.mxu0 %v202
    %1131 = vmatprep.subr.mxu0 0.0
    %1132 = vmatpush1.msra.mxu0 %v201
    %1133 = vmatprep.subr.mxu0 0.0
    %1134 = vmatpush1.msra.mxu0 %v200
    %1135 = vmatprep.subr.mxu0 0.0
    %1136 = vmatpush1.msra.mxu0 %v199
    %1137 = vmatprep.subr.mxu0 0.0
    %1138 = vmatpush1.msra.mxu0 %v198
    %1139 = vmatprep.subr.mxu0 0.0
    %1140 = vmatpush1.msra.mxu0 %v197
    %1141 = vmatprep.subr.mxu0 0.0
    %1142 = vmatpush1.msra.mxu0 %v196
    %1143 = vmatprep.subr.mxu0 0.0
    %1144 = vmatpush1.msra.mxu0 %v195
    %1145 = vmatprep.subr.mxu0 0.0
    %1146 = vmatpush2.msra.mxu0 0.0
    %1147 = vmatprep.subr.mxu0 0.0
    %1148 = vmatpush2.msra.mxu0 0.0
    %1149 = vmatprep.subr.mxu0 0.0
    %1150 = vmatpush2.msra.mxu0 0.0
    %1151 = vmatprep.subr.mxu0 0.0
    %1152 = vmatpush2.msra.mxu0 0.0
    %1153 = vmatprep.subr.mxu0 0.0
    %1154 = vmatpush2.msra.mxu0 0.0
    %1155 = vmatprep.subr.mxu0 0.0
    %1156 = vmatpush2.msra.mxu0 0.0
    %1157 = vmatprep.subr.mxu0 0.0
    %1158 = vmatpush2.msra.mxu0 0.0
    %1159 = vmatprep.subr.mxu0 0.0
    %1160 = vmatpush2.msra.mxu0 0.0
    %1161 = vmatprep.subr.mxu0 0.0
    %1162 = vmatpush2.msra.mxu0 0.0
    %1163 = vmatprep.subr.mxu0 0.0
    %1164 = vmatpush2.msra.mxu0 0.0
    %1165 = vmatprep.subr.mxu0 0.0
    %1166 = vmatpush2.msra.mxu0 0.0
    %1167 = vmatprep.subr.mxu0 0.0
    %1168 = vmatpush2.msra.mxu0 0.0
    %1169 = vmatprep.subr.mxu0 0.0
    %1170 = vmatpush2.msra.mxu0 0.0
    %1171 = vmatprep.subr.mxu0 0.0
    %1172 = vmatpush2.msra.mxu0 0.0
    %1173 = vmatprep.subr.mxu0 0.0
    %1174 = vmatpush2.msra.mxu0 0.0
    %1175 = vmatprep.subr.mxu0 0.0
    %1176 = vmatpush2.msra.mxu0 0.0
    %1177 = vmatprep.mubr.f32.mxu0 0.0
    %1178 = vmatmul.mubr.f32.gmra.mxu0 %v1112
    %v1179 = vpop.f32.mrf.mxu0
    %v1180 = vadd.f32 %v823, %v1179
    %v1181 = vpop.f32.mrf.mxu0
    %1182 = vdwg.mxu0
    %v1183 = vtanh.pop %v1180
    %1184 = vmatprep.subr.mxu0 0.0
    %1185 = vmatpush1.msra.mxu0 %v226
    %1186 = vmatprep.subr.mxu0 0.0
    %1187 = vmatpush1.msra.mxu0 %v225
    %1188 = vmatprep.subr.mxu0 0.0
    %1189 = vmatpush1.msra.mxu0 %v224
    %1190 = vmatprep.subr.mxu0 0.0
    %1191 = vmatpush1.msra.mxu0 %v223
    %1192 = vmatprep.subr.mxu0 0.0
    %1193 = vmatpush1.msra.mxu0 %v222
    %1194 = vmatprep.subr.mxu0 0.0
    %1195 = vmatpush1.msra.mxu0 %v221
    %1196 = vmatprep.subr.mxu0 0.0
    %1197 = vmatpush1.msra.mxu0 %v220
    %1198 = vmatprep.subr.mxu0 0.0
    %1199 = vmatpush1.msra.mxu0 %v219
    %1200 = vmatprep.subr.mxu0 0.0
    %1201 = vmatpush1.msra.mxu0 %v218
    %1202 = vmatprep.subr.mxu0 0.0
    %1203 = vmatpush1.msra.mxu0 %v217
    %1204 = vmatprep.subr.mxu0 0.0
    %1205 = vmatpush1.msra.mxu0 %v216
    %1206 = vmatprep.subr.mxu0 0.0
    %1207 = vmatpush1.msra.mxu0 %v215
    %1208 = vmatprep.subr.mxu0 0.0
    %1209 = vmatpush1.msra.mxu0 %v214
    %1210 = vmatprep.subr.mxu0 0.0
    %1211 = vmatpush1.msra.mxu0 %v213
    %1212 = vmatprep.subr.mxu0 0.0
    %1213 = vmatpush1.msra.mxu0 %v212
    %1214 = vmatprep.subr.mxu0 0.0
    %1215 = vmatpush1.msra.mxu0 %v211
    %1216 = vmatprep.subr.mxu0 0.0
    %1217 = vmatpush2.msra.mxu0 0.0
    %1218 = vmatprep.subr.mxu0 0.0
    %1219 = vmatpush2.msra.mxu0 0.0
    %1220 = vmatprep.subr.mxu0 0.0
    %1221 = vmatpush2.msra.mxu0 0.0
    %1222 = vmatprep.subr.mxu0 0.0
    %1223 = vmatpush2.msra.mxu0 0.0
    %1224 = vmatprep.subr.mxu0 0.0
    %1225 = vmatpush2.msra.mxu0 0.0
    %1226 = vmatprep.subr.mxu0 0.0
    %1227 = vmatpush2.msra.mxu0 0.0
    %1228 = vmatprep.subr.mxu0 0.0
    %1229 = vmatpush2.msra.mxu0 0.0
    %1230 = vmatprep.subr.mxu0 0.0
    %1231 = vmatpush2.msra.mxu0 0.0
    %1232 = vmatprep.subr.mxu0 0.0
    %1233 = vmatpush2.msra.mxu0 0.0
    %1234 = vmatprep.subr.mxu0 0.0
    %1235 = vmatpush2.msra.mxu0 0.0
    %1236 = vmatprep.subr.mxu0 0.0
    %1237 = vmatpush2.msra.mxu0 0.0
    %1238 = vmatprep.subr.mxu0 0.0
    %1239 = vmatpush2.msra.mxu0 0.0
    %1240 = vmatprep.subr.mxu0 0.0
    %1241 = vmatpush2.msra.mxu0 0.0
    %1242 = vmatprep.subr.mxu0 0.0
    %1243 = vmatpush2.msra.mxu0 0.0
    %1244 = vmatprep.subr.mxu0 0.0
    %1245 = vmatpush2.msra.mxu0 0.0
    %1246 = vmatprep.subr.mxu0 0.0
    %1247 = vmatpush2.msra.mxu0 0.0
    %1248 = vmatprep.mubr.f32.mxu0 0.0
    %1249 = vmatmul.mubr.f32.gmra.mxu0 %v1183
    %v1250 = vpop.f32.mrf.mxu0
    %v1251 = vadd.f32 0.0, %v1250
    %v1252 = vpop.f32.mrf.mxu0
    %1253 = vdwg.mxu0
    %v1254 = vmul.f32 %v663, %v1251
    %v1255 = vadd.f32 %v815, %v1254
    %1256 = vmatprep.subr.mxu0 0.0
    %1257 = vmatpush1.msra.mxu0 %v210
    %1258 = vmatprep.subr.mxu0 0.0
    %1259 = vmatpush1.msra.mxu0 %v209
    %1260 = vmatprep.subr.mxu0 0.0
    %1261 = vmatpush1.msra.mxu0 %v208
    %1262 = vmatprep.subr.mxu0 0.0
    %1263 = vmatpush1.msra.mxu0 %v207
    %1264 = vmatprep.subr.mxu0 0.0
    %1265 = vmatpush1.msra.mxu0 %v206
    %1266 = vmatprep.subr.mxu0 0.0
    %1267 = vmatpush1.msra.mxu0 %v205
    %1268 = vmatprep.subr.mxu0 0.0
    %1269 = vmatpush1.msra.mxu0 %v204
    %1270 = vmatprep.subr.mxu0 0.0
    %1271 = vmatpush1.msra.mxu0 %v203
    %1272 = vmatprep.subr.mxu0 0.0
    %1273 = vmatpush1.msra.mxu0 %v202
    %1274 = vmatprep.subr.mxu0 0.0
    %1275 = vmatpush1.msra.mxu0 %v201
    %1276 = vmatprep.subr.mxu0 0.0
    %1277 = vmatpush1.msra.mxu0 %v200
    %1278 = vmatprep.subr.mxu0 0.0
    %1279 = vmatpush1.msra.mxu0 %v199
    %1280 = vmatprep.subr.mxu0 0.0
    %1281 = vmatpush1.msra.mxu0 %v198
    %1282 = vmatprep.subr.mxu0 0.0
    %1283 = vmatpush1.msra.mxu0 %v197
    %1284 = vmatprep.subr.mxu0 0.0
    %1285 = vmatpush1.msra.mxu0 %v196
    %1286 = vmatprep.subr.mxu0 0.0
    %1287 = vmatpush1.msra.mxu0 %v195
    %1288 = vmatprep.subr.mxu0 0.0
    %1289 = vmatpush2.msra.mxu0 0.0
    %1290 = vmatprep.subr.mxu0 0.0
    %1291 = vmatpush2.msra.mxu0 0.0
    %1292 = vmatprep.subr.mxu0 0.0
    %1293 = vmatpush2.msra.mxu0 0.0
    %1294 = vmatprep.subr.mxu0 0.0
    %1295 = vmatpush2.msra.mxu0 0.0
    %1296 = vmatprep.subr.mxu0 0.0
    %1297 = vmatpush2.msra.mxu0 0.0
    %1298 = vmatprep.subr.mxu0 0.0
    %1299 = vmatpush2.msra.mxu0 0.0
    %1300 = vmatprep.subr.mxu0 0.0
    %1301 = vmatpush2.msra.mxu0 0.0
    %1302 = vmatprep.subr.mxu0 0.0
    %1303 = vmatpush2.msra.mxu0 0.0
    %1304 = vmatprep.subr.mxu0 0.0
    %1305 = vmatpush2.msra.mxu0 0.0
    %1306 = vmatprep.subr.mxu0 0.0
    %1307 = vmatpush2.msra.mxu0 0.0
    %1308 = vmatprep.subr.mxu0 0.0
    %1309 = vmatpush2.msra.mxu0 0.0
    %1310 = vmatprep.subr.mxu0 0.0
    %1311 = vmatpush2.msra.mxu0 0.0
    %1312 = vmatprep.subr.mxu0 0.0
    %1313 = vmatpush2.msra.mxu0 0.0
    %1314 = vmatprep.subr.mxu0 0.0
    %1315 = vmatpush2.msra.mxu0 0.0
    %1316 = vmatprep.subr.mxu0 0.0
    %1317 = vmatpush2.msra.mxu0 0.0
    %1318 = vmatprep.subr.mxu0 0.0
    %1319 = vmatpush2.msra.mxu0 0.0
    %1320 = vmatprep.mubr.f32.mxu0 0.0
    %1321 = vmatmul.mubr.f32.gmra.mxu0 %v1255
    %v1322 = vpop.f32.mrf.mxu0
    %v1323 = vadd.f32 %v826, %v1322
    %v1324 = vpop.f32.mrf.mxu0
    %1325 = vdwg.mxu0
    %v1326 = vtanh.pop %v1323
    %1327 = vmatprep.subr.mxu0 0.0
    %1328 = vmatpush1.msra.mxu0 %v226
    %1329 = vmatprep.subr.mxu0 0.0
    %1330 = vmatpush1.msra.mxu0 %v225
    %1331 = vmatprep.subr.mxu0 0.0
    %1332 = vmatpush1.msra.mxu0 %v224
    %1333 = vmatprep.subr.mxu0 0.0
    %1334 = vmatpush1.msra.mxu0 %v223
    %1335 = vmatprep.subr.mxu0 0.0
    %1336 = vmatpush1.msra.mxu0 %v222
    %1337 = vmatprep.subr.mxu0 0.0
    %1338 = vmatpush1.msra.mxu0 %v221
    %1339 = vmatprep.subr.mxu0 0.0
    %1340 = vmatpush1.msra.mxu0 %v220
    %1341 = vmatprep.subr.mxu0 0.0
    %1342 = vmatpush1.msra.mxu0 %v219
    %1343 = vmatprep.subr.mxu0 0.0
    %1344 = vmatpush1.msra.mxu0 %v218
    %1345 = vmatprep.subr.mxu0 0.0
    %1346 = vmatpush1.msra.mxu0 %v217
    %1347 = vmatprep.subr.mxu0 0.0
    %1348 = vmatpush1.msra.mxu0 %v216
    %1349 = vmatprep.subr.mxu0 0.0
    %1350 = vmatpush1.msra.mxu0 %v215
    %1351 = vmatprep.subr.mxu0 0.0
    %1352 = vmatpush1.msra.mxu0 %v214
    %1353 = vmatprep.subr.mxu0 0.0
    %1354 = vmatpush1.msra.mxu0 %v213
    %1355 = vmatprep.subr.mxu0 0.0
    %1356 = vmatpush1.msra.mxu0 %v212
    %1357 = vmatprep.subr.mxu0 0.0
    %1358 = vmatpush1.msra.mxu0 %v211
    %1359 = vmatprep.subr.mxu0 0.0
    %1360 = vmatpush2.msra.mxu0 0.0
    %1361 = vmatprep.subr.mxu0 0.0
    %1362 = vmatpush2.msra.mxu0 0.0
    %1363 = vmatprep.subr.mxu0 0.0
    %1364 = vmatpush2.msra.mxu0 0.0
    %1365 = vmatprep.subr.mxu0 0.0
    %1366 = vmatpush2.msra.mxu0 0.0
    %1367 = vmatprep.subr.mxu0 0.0
    %1368 = vmatpush2.msra.mxu0 0.0
    %1369 = vmatprep.subr.mxu0 0.0
    %1370 = vmatpush2.msra.mxu0 0.0
    %1371 = vmatprep.subr.mxu0 0.0
    %1372 = vmatpush2.msra.mxu0 0.0
    %1373 = vmatprep.subr.mxu0 0.0
    %1374 = vmatpush2.msra.mxu0 0.0
    %1375 = vmatprep.subr.mxu0 0.0
    %1376 = vmatpush2.msra.mxu0 0.0
    %1377 = vmatprep.subr.mxu0 0.0
    %1378 = vmatpush2.msra.mxu0 0.0
    %1379 = vmatprep.subr.mxu0 0.0
    %1380 = vmatpush2.msra.mxu0 0.0
    %1381 = vmatprep.subr.mxu0 0.0
    %1382 = vmatpush2.msra.mxu0 0.0
    %1383 = vmatprep.subr.mxu0 0.0
    %1384 = vmatpush2.msra.mxu0 0.0
    %1385 = vmatprep.subr.mxu0 0.0
    %1386 = vmatpush2.msra.mxu0 0.0
    %1387 = vmatprep.subr.mxu0 0.0
    %1388 = vmatpush2.msra.mxu0 0.0
    %1389 = vmatprep.subr.mxu0 0.0
    %1390 = vmatpush2.msra.mxu0 0.0
    %1391 = vmatprep.mubr.f32.mxu0 0.0
    %1392 = vmatmul.mubr.f32.gmra.mxu0 %v1326
    %v1393 = vpop.f32.mrf.mxu0
    %v1394 = vadd.f32 0.0, %v1393
    %v1395 = vpop.f32.mrf.mxu0
    %1396 = vdwg.mxu0
    %v1397 = vmul.f32 %v1108, 2.0
    %v1398 = vadd.f32 %v965, %v1397
    %v1399 = vmul.f32 %v1251, 2.0
    %v1400 = vadd.f32 %v1398, %v1399
    %v1401 = vadd.f32 %v1400, %v1394
    %v1402 = vmul.f32 %v812, %v1401
    %v1403 = vadd.f32 %v815, %v1402
    %v1404 = vtanh.pop %v1403
    %s1405 = scalar_lea.vmem [#allocation13], 16
    %1406 = vst [vmem:[%s1405] sm:$0xff] %v1404
    %s1407 = sld [smem:[#allocation3 + $0x2]]
    %v1408 = vstv %s1407
    %v1409 = vadd.f32 %v192, %v1408
    %s1410 = sadd.f32 %s1407, %s99
    %v1411 = vstv %s1410
    %v1412 = vadd.f32 %v192, %v1411
    %s1413 = sadd.f32 %s1407, %s98
    %v1414 = vstv %s1413
    %v1415 = vadd.f32 %v192, %v1414
    %1416 = vmatprep.subr.mxu0 0.0
    %1417 = vmatpush1.msra.mxu0 %v210
    %1418 = vmatprep.subr.mxu0 0.0
    %1419 = vmatpush1.msra.mxu0 %v209
    %1420 = vmatprep.subr.mxu0 0.0
    %1421 = vmatpush1.msra.mxu0 %v208
    %1422 = vmatprep.subr.mxu0 0.0
    %1423 = vmatpush1.msra.mxu0 %v207
    %1424 = vmatprep.subr.mxu0 0.0
    %1425 = vmatpush1.msra.mxu0 %v206
    %1426 = vmatprep.subr.mxu0 0.0
    %1427 = vmatpush1.msra.mxu0 %v205
    %1428 = vmatprep.subr.mxu0 0.0
    %1429 = vmatpush1.msra.mxu0 %v204
    %1430 = vmatprep.subr.mxu0 0.0
    %1431 = vmatpush1.msra.mxu0 %v203
    %1432 = vmatprep.subr.mxu0 0.0
    %1433 = vmatpush1.msra.mxu0 %v202
    %1434 = vmatprep.subr.mxu0 0.0
    %1435 = vmatpush1.msra.mxu0 %v201
    %1436 = vmatprep.subr.mxu0 0.0
    %1437 = vmatpush1.msra.mxu0 %v200
    %1438 = vmatprep.subr.mxu0 0.0
    %1439 = vmatpush1.msra.mxu0 %v199
    %1440 = vmatprep.subr.mxu0 0.0
    %1441 = vmatpush1.msra.mxu0 %v198
    %1442 = vmatprep.subr.mxu0 0.0
    %1443 = vmatpush1.msra.mxu0 %v197
    %1444 = vmatprep.subr.mxu0 0.0
    %1445 = vmatpush1.msra.mxu0 %v196
    %1446 = vmatprep.subr.mxu0 0.0
    %1447 = vmatpush1.msra.mxu0 %v195
    %1448 = vmatprep.subr.mxu0 0.0
    %1449 = vmatpush2.msra.mxu0 0.0
    %1450 = vmatprep.subr.mxu0 0.0
    %1451 = vmatpush2.msra.mxu0 0.0
    %1452 = vmatprep.subr.mxu0 0.0
    %1453 = vmatpush2.msra.mxu0 0.0
    %1454 = vmatprep.subr.mxu0 0.0
    %1455 = vmatpush2.msra.mxu0 0.0
    %1456 = vmatprep.subr.mxu0 0.0
    %1457 = vmatpush2.msra.mxu0 0.0
    %1458 = vmatprep.subr.mxu0 0.0
    %1459 = vmatpush2.msra.mxu0 0.0
    %1460 = vmatprep.subr.mxu0 0.0
    %1461 = vmatpush2.msra.mxu0 0.0
    %1462 = vmatprep.subr.mxu0 0.0
    %1463 = vmatpush2.msra.mxu0 0.0
    %1464 = vmatprep.subr.mxu0 0.0
    %1465 = vmatpush2.msra.mxu0 0.0
    %1466 = vmatprep.subr.mxu0 0.0
    %1467 = vmatpush2.msra.mxu0 0.0
    %1468 = vmatprep.subr.mxu0 0.0
    %1469 = vmatpush2.msra.mxu0 0.0
    %1470 = vmatprep.subr.mxu0 0.0
    %1471 = vmatpush2.msra.mxu0 0.0
    %1472 = vmatprep.subr.mxu0 0.0
    %1473 = vmatpush2.msra.mxu0 0.0
    %1474 = vmatprep.subr.mxu0 0.0
    %1475 = vmatpush2.msra.mxu0 0.0
    %1476 = vmatprep.subr.mxu0 0.0
    %1477 = vmatpush2.msra.mxu0 0.0
    %1478 = vmatprep.subr.mxu0 0.0
    %1479 = vmatpush2.msra.mxu0 0.0
    %1480 = vmatprep.mubr.f32.mxu0 0.0
    %1481 = vmatmul.mubr.f32.gmra.mxu0 %v1404
    %v1482 = vpop.f32.mrf.mxu0
    %v1483 = vadd.f32 %v1409, %v1482
    %v1484 = vpop.f32.mrf.mxu0
    %1485 = vdwg.mxu0
    %v1486 = vtanh.pop %v1483
    %1487 = vmatprep.subr.mxu0 0.0
    %1488 = vmatpush1.msra.mxu0 %v226
    %1489 = vmatprep.subr.mxu0 0.0
    %1490 = vmatpush1.msra.mxu0 %v225
    %1491 = vmatprep.subr.mxu0 0.0
    %1492 = vmatpush1.msra.mxu0 %v224
    %1493 = vmatprep.subr.mxu0 0.0
    %1494 = vmatpush1.msra.mxu0 %v223
    %1495 = vmatprep.subr.mxu0 0.0
    %1496 = vmatpush1.msra.mxu0 %v222
    %1497 = vmatprep.subr.mxu0 0.0
    %1498 = vmatpush1.msra.mxu0 %v221
    %1499 = vmatprep.subr.mxu0 0.0
    %1500 = vmatpush1.msra.mxu0 %v220
    %1501 = vmatprep.subr.mxu0 0.0
    %1502 = vmatpush1.msra.mxu0 %v219
    %1503 = vmatprep.subr.mxu0 0.0
    %1504 = vmatpush1.msra.mxu0 %v218
    %1505 = vmatprep.subr.mxu0 0.0
    %1506 = vmatpush1.msra.mxu0 %v217
    %1507 = vmatprep.subr.mxu0 0.0
    %1508 = vmatpush1.msra.mxu0 %v216
    %1509 = vmatprep.subr.mxu0 0.0
    %1510 = vmatpush1.msra.mxu0 %v215
    %1511 = vmatprep.subr.mxu0 0.0
    %1512 = vmatpush1.msra.mxu0 %v214
    %1513 = vmatprep.subr.mxu0 0.0
    %1514 = vmatpush1.msra.mxu0 %v213
    %1515 = vmatprep.subr.mxu0 0.0
    %1516 = vmatpush1.msra.mxu0 %v212
    %1517 = vmatprep.subr.mxu0 0.0
    %1518 = vmatpush1.msra.mxu0 %v211
    %1519 = vmatprep.subr.mxu0 0.0
    %1520 = vmatpush2.msra.mxu0 0.0
    %1521 = vmatprep.subr.mxu0 0.0
    %1522 = vmatpush2.msra.mxu0 0.0
    %1523 = vmatprep.subr.mxu0 0.0
    %1524 = vmatpush2.msra.mxu0 0.0
    %1525 = vmatprep.subr.mxu0 0.0
    %1526 = vmatpush2.msra.mxu0 0.0
    %1527 = vmatprep.subr.mxu0 0.0
    %1528 = vmatpush2.msra.mxu0 0.0
    %1529 = vmatprep.subr.mxu0 0.0
    %1530 = vmatpush2.msra.mxu0 0.0
    %1531 = vmatprep.subr.mxu0 0.0
    %1532 = vmatpush2.msra.mxu0 0.0
    %1533 = vmatprep.subr.mxu0 0.0
    %1534 = vmatpush2.msra.mxu0 0.0
    %1535 = vmatprep.subr.mxu0 0.0
    %1536 = vmatpush2.msra.mxu0 0.0
    %1537 = vmatprep.subr.mxu0 0.0
    %1538 = vmatpush2.msra.mxu0 0.0
    %1539 = vmatprep.subr.mxu0 0.0
    %1540 = vmatpush2.msra.mxu0 0.0
    %1541 = vmatprep.subr.mxu0 0.0
    %1542 = vmatpush2.msra.mxu0 0.0
    %1543 = vmatprep.subr.mxu0 0.0
    %1544 = vmatpush2.msra.mxu0 0.0
    %1545 = vmatprep.subr.mxu0 0.0
    %1546 = vmatpush2.msra.mxu0 0.0
    %1547 = vmatprep.subr.mxu0 0.0
    %1548 = vmatpush2.msra.mxu0 0.0
    %1549 = vmatprep.subr.mxu0 0.0
    %1550 = vmatpush2.msra.mxu0 0.0
    %1551 = vmatprep.mubr.f32.mxu0 0.0
    %1552 = vmatmul.mubr.f32.gmra.mxu0 %v1486
    %v1553 = vpop.f32.mrf.mxu0
    %v1554 = vadd.f32 0.0, %v1553
    %v1555 = vpop.f32.mrf.mxu0
    %1556 = vdwg.mxu0
    %v1557 = vmul.f32 %v376, %v1554
    %v1558 = vadd.f32 %v1404, %v1557
    %1559 = vmatprep.subr.mxu0 0.0
    %1560 = vmatpush1.msra.mxu0 %v210
    %1561 = vmatprep.subr.mxu0 0.0
    %1562 = vmatpush1.msra.mxu0 %v209
    %1563 = vmatprep.subr.mxu0 0.0
    %1564 = vmatpush1.msra.mxu0 %v208
    %1565 = vmatprep.subr.mxu0 0.0
    %1566 = vmatpush1.msra.mxu0 %v207
    %1567 = vmatprep.subr.mxu0 0.0
    %1568 = vmatpush1.msra.mxu0 %v206
    %1569 = vmatprep.subr.mxu0 0.0
    %1570 = vmatpush1.msra.mxu0 %v205
    %1571 = vmatprep.subr.mxu0 0.0
    %1572 = vmatpush1.msra.mxu0 %v204
    %1573 = vmatprep.subr.mxu0 0.0
    %1574 = vmatpush1.msra.mxu0 %v203
    %1575 = vmatprep.subr.mxu0 0.0
    %1576 = vmatpush1.msra.mxu0 %v202
    %1577 = vmatprep.subr.mxu0 0.0
    %1578 = vmatpush1.msra.mxu0 %v201
    %1579 = vmatprep.subr.mxu0 0.0
    %1580 = vmatpush1.msra.mxu0 %v200
    %1581 = vmatprep.subr.mxu0 0.0
    %1582 = vmatpush1.msra.mxu0 %v199
    %1583 = vmatprep.subr.mxu0 0.0
    %1584 = vmatpush1.msra.mxu0 %v198
    %1585 = vmatprep.subr.mxu0 0.0
    %1586 = vmatpush1.msra.mxu0 %v197
    %1587 = vmatprep.subr.mxu0 0.0
    %1588 = vmatpush1.msra.mxu0 %v196
    %1589 = vmatprep.subr.mxu0 0.0
    %1590 = vmatpush1.msra.mxu0 %v195
    %1591 = vmatprep.subr.mxu0 0.0
    %1592 = vmatpush2.msra.mxu0 0.0
    %1593 = vmatprep.subr.mxu0 0.0
    %1594 = vmatpush2.msra.mxu0 0.0
    %1595 = vmatprep.subr.mxu0 0.0
    %1596 = vmatpush2.msra.mxu0 0.0
    %1597 = vmatprep.subr.mxu0 0.0
    %1598 = vmatpush2.msra.mxu0 0.0
    %1599 = vmatprep.subr.mxu0 0.0
    %1600 = vmatpush2.msra.mxu0 0.0
    %1601 = vmatprep.subr.mxu0 0.0
    %1602 = vmatpush2.msra.mxu0 0.0
    %1603 = vmatprep.subr.mxu0 0.0
    %1604 = vmatpush2.msra.mxu0 0.0
    %1605 = vmatprep.subr.mxu0 0.0
    %1606 = vmatpush2.msra.mxu0 0.0
    %1607 = vmatprep.subr.mxu0 0.0
    %1608 = vmatpush2.msra.mxu0 0.0
    %1609 = vmatprep.subr.mxu0 0.0
    %1610 = vmatpush2.msra.mxu0 0.0
    %1611 = vmatprep.subr.mxu0 0.0
    %1612 = vmatpush2.msra.mxu0 0.0
    %1613 = vmatprep.subr.mxu0 0.0
    %1614 = vmatpush2.msra.mxu0 0.0
    %1615 = vmatprep.subr.mxu0 0.0
    %1616 = vmatpush2.msra.mxu0 0.0
    %1617 = vmatprep.subr.mxu0 0.0
    %1618 = vmatpush2.msra.mxu0 0.0
    %1619 = vmatprep.subr.mxu0 0.0
    %1620 = vmatpush2.msra.mxu0 0.0
    %1621 = vmatprep.subr.mxu0 0.0
    %1622 = vmatpush2.msra.mxu0 0.0
    %1623 = vmatprep.mubr.f32.mxu0 0.0
    %1624 = vmatmul.mubr.f32.gmra.mxu0 %v1558
    %v1625 = vpop.f32.mrf.mxu0
    %v1626 = vadd.f32 %v1412, %v1625
    %v1627 = vpop.f32.mrf.mxu0
    %1628 = vdwg.mxu0
    %v1629 = vtanh.pop %v1626
    %1630 = vmatprep.subr.mxu0 0.0
    %1631 = vmatpush1.msra.mxu0 %v226
    %1632 = vmatprep.subr.mxu0 0.0
    %1633 = vmatpush1.msra.mxu0 %v225
    %1634 = vmatprep.subr.mxu0 0.0
    %1635 = vmatpush1.msra.mxu0 %v224
    %1636 = vmatprep.subr.mxu0 0.0
    %1637 = vmatpush1.msra.mxu0 %v223
    %1638 = vmatprep.subr.mxu0 0.0
    %1639 = vmatpush1.msra.mxu0 %v222
    %1640 = vmatprep.subr.mxu0 0.0
    %1641 = vmatpush1.msra.mxu0 %v221
    %1642 = vmatprep.subr.mxu0 0.0
    %1643 = vmatpush1.msra.mxu0 %v220
    %1644 = vmatprep.subr.mxu0 0.0
    %1645 = vmatpush1.msra.mxu0 %v219
    %1646 = vmatprep.subr.mxu0 0.0
    %1647 = vmatpush1.msra.mxu0 %v218
    %1648 = vmatprep.subr.mxu0 0.0
    %1649 = vmatpush1.msra.mxu0 %v217
    %1650 = vmatprep.subr.mxu0 0.0
    %1651 = vmatpush1.msra.mxu0 %v216
    %1652 = vmatprep.subr.mxu0 0.0
    %1653 = vmatpush1.msra.mxu0 %v215
    %1654 = vmatprep.subr.mxu0 0.0
    %1655 = vmatpush1.msra.mxu0 %v214
    %1656 = vmatprep.subr.mxu0 0.0
    %1657 = vmatpush1.msra.mxu0 %v213
    %1658 = vmatprep.subr.mxu0 0.0
    %1659 = vmatpush1.msra.mxu0 %v212
    %1660 = vmatprep.subr.mxu0 0.0
    %1661 = vmatpush1.msra.mxu0 %v211
    %1662 = vmatprep.subr.mxu0 0.0
    %1663 = vmatpush2.msra.mxu0 0.0
    %1664 = vmatprep.subr.mxu0 0.0
    %1665 = vmatpush2.msra.mxu0 0.0
    %1666 = vmatprep.subr.mxu0 0.0
    %1667 = vmatpush2.msra.mxu0 0.0
    %1668 = vmatprep.subr.mxu0 0.0
    %1669 = vmatpush2.msra.mxu0 0.0
    %1670 = vmatprep.subr.mxu0 0.0
    %1671 = vmatpush2.msra.mxu0 0.0
    %1672 = vmatprep.subr.mxu0 0.0
    %1673 = vmatpush2.msra.mxu0 0.0
    %1674 = vmatprep.subr.mxu0 0.0
    %1675 = vmatpush2.msra.mxu0 0.0
    %1676 = vmatprep.subr.mxu0 0.0
    %1677 = vmatpush2.msra.mxu0 0.0
    %1678 = vmatprep.subr.mxu0 0.0
    %1679 = vmatpush2.msra.mxu0 0.0
    %1680 = vmatprep.subr.mxu0 0.0
    %1681 = vmatpush2.msra.mxu0 0.0
    %1682 = vmatprep.subr.mxu0 0.0
    %1683 = vmatpush2.msra.mxu0 0.0
    %1684 = vmatprep.subr.mxu0 0.0
    %1685 = vmatpush2.msra.mxu0 0.0
    %1686 = vmatprep.subr.mxu0 0.0
    %1687 = vmatpush2.msra.mxu0 0.0
    %1688 = vmatprep.subr.mxu0 0.0
    %1689 = vmatpush2.msra.mxu0 0.0
    %1690 = vmatprep.subr.mxu0 0.0
    %1691 = vmatpush2.msra.mxu0 0.0
    %1692 = vmatprep.subr.mxu0 0.0
    %1693 = vmatpush2.msra.mxu0 0.0
    %1694 = vmatprep.mubr.f32.mxu0 0.0
    %1695 = vmatmul.mubr.f32.gmra.mxu0 %v1629
    %v1696 = vpop.f32.mrf.mxu0
    %v1697 = vadd.f32 0.0, %v1696
    %v1698 = vpop.f32.mrf.mxu0
    %1699 = vdwg.mxu0
    %v1700 = vmul.f32 %v376, %v1697
    %v1701 = vadd.f32 %v1404, %v1700
    %1702 = vmatprep.subr.mxu0 0.0
    %1703 = vmatpush1.msra.mxu0 %v210
    %1704 = vmatprep.subr.mxu0 0.0
    %1705 = vmatpush1.msra.mxu0 %v209
    %1706 = vmatprep.subr.mxu0 0.0
    %1707 = vmatpush1.msra.mxu0 %v208
    %1708 = vmatprep.subr.mxu0 0.0
    %1709 = vmatpush1.msra.mxu0 %v207
    %1710 = vmatprep.subr.mxu0 0.0
    %1711 = vmatpush1.msra.mxu0 %v206
    %1712 = vmatprep.subr.mxu0 0.0
    %1713 = vmatpush1.msra.mxu0 %v205
    %1714 = vmatprep.subr.mxu0 0.0
    %1715 = vmatpush1.msra.mxu0 %v204
    %1716 = vmatprep.subr.mxu0 0.0
    %1717 = vmatpush1.msra.mxu0 %v203
    %1718 = vmatprep.subr.mxu0 0.0
    %1719 = vmatpush1.msra.mxu0 %v202
    %1720 = vmatprep.subr.mxu0 0.0
    %1721 = vmatpush1.msra.mxu0 %v201
    %1722 = vmatprep.subr.mxu0 0.0
    %1723 = vmatpush1.msra.mxu0 %v200
    %1724 = vmatprep.subr.mxu0 0.0
    %1725 = vmatpush1.msra.mxu0 %v199
    %1726 = vmatprep.subr.mxu0 0.0
    %1727 = vmatpush1.msra.mxu0 %v198
    %1728 = vmatprep.subr.mxu0 0.0
    %1729 = vmatpush1.msra.mxu0 %v197
    %1730 = vmatprep.subr.mxu0 0.0
    %1731 = vmatpush1.msra.mxu0 %v196
    %1732 = vmatprep.subr.mxu0 0.0
    %1733 = vmatpush1.msra.mxu0 %v195
    %1734 = vmatprep.subr.mxu0 0.0
    %1735 = vmatpush2.msra.mxu0 0.0
    %1736 = vmatprep.subr.mxu0 0.0
    %1737 = vmatpush2.msra.mxu0 0.0
    %1738 = vmatprep.subr.mxu0 0.0
    %1739 = vmatpush2.msra.mxu0 0.0
    %1740 = vmatprep.subr.mxu0 0.0
    %1741 = vmatpush2.msra.mxu0 0.0
    %1742 = vmatprep.subr.mxu0 0.0
    %1743 = vmatpush2.msra.mxu0 0.0
    %1744 = vmatprep.subr.mxu0 0.0
    %1745 = vmatpush2.msra.mxu0 0.0
    %1746 = vmatprep.subr.mxu0 0.0
    %1747 = vmatpush2.msra.mxu0 0.0
    %1748 = vmatprep.subr.mxu0 0.0
    %1749 = vmatpush2.msra.mxu0 0.0
    %1750 = vmatprep.subr.mxu0 0.0
    %1751 = vmatpush2.msra.mxu0 0.0
    %1752 = vmatprep.subr.mxu0 0.0
    %1753 = vmatpush2.msra.mxu0 0.0
    %1754 = vmatprep.subr.mxu0 0.0
    %1755 = vmatpush2.msra.mxu0 0.0
    %1756 = vmatprep.subr.mxu0 0.0
    %1757 = vmatpush2.msra.mxu0 0.0
    %1758 = vmatprep.subr.mxu0 0.0
    %1759 = vmatpush2.msra.mxu0 0.0
    %1760 = vmatprep.subr.mxu0 0.0
    %1761 = vmatpush2.msra.mxu0 0.0
    %1762 = vmatprep.subr.mxu0 0.0
    %1763 = vmatpush2.msra.mxu0 0.0
    %1764 = vmatprep.subr.mxu0 0.0
    %1765 = vmatpush2.msra.mxu0 0.0
    %1766 = vmatprep.mubr.f32.mxu0 0.0
    %1767 = vmatmul.mubr.f32.gmra.mxu0 %v1701
    %v1768 = vpop.f32.mrf.mxu0
    %v1769 = vadd.f32 %v1412, %v1768
    %v1770 = vpop.f32.mrf.mxu0
    %1771 = vdwg.mxu0
    %v1772 = vtanh.pop %v1769
    %1773 = vmatprep.subr.mxu0 0.0
    %1774 = vmatpush1.msra.mxu0 %v226
    %1775 = vmatprep.subr.mxu0 0.0
    %1776 = vmatpush1.msra.mxu0 %v225
    %1777 = vmatprep.subr.mxu0 0.0
    %1778 = vmatpush1.msra.mxu0 %v224
    %1779 = vmatprep.subr.mxu0 0.0
    %1780 = vmatpush1.msra.mxu0 %v223
    %1781 = vmatprep.subr.mxu0 0.0
    %1782 = vmatpush1.msra.mxu0 %v222
    %1783 = vmatprep.subr.mxu0 0.0
    %1784 = vmatpush1.msra.mxu0 %v221
    %1785 = vmatprep.subr.mxu0 0.0
    %1786 = vmatpush1.msra.mxu0 %v220
    %1787 = vmatprep.subr.mxu0 0.0
    %1788 = vmatpush1.msra.mxu0 %v219
    %1789 = vmatprep.subr.mxu0 0.0
    %1790 = vmatpush1.msra.mxu0 %v218
    %1791 = vmatprep.subr.mxu0 0.0
    %1792 = vmatpush1.msra.mxu0 %v217
    %1793 = vmatprep.subr.mxu0 0.0
    %1794 = vmatpush1.msra.mxu0 %v216
    %1795 = vmatprep.subr.mxu0 0.0
    %1796 = vmatpush1.msra.mxu0 %v215
    %1797 = vmatprep.subr.mxu0 0.0
    %1798 = vmatpush1.msra.mxu0 %v214
    %1799 = vmatprep.subr.mxu0 0.0
    %1800 = vmatpush1.msra.mxu0 %v213
    %1801 = vmatprep.subr.mxu0 0.0
    %1802 = vmatpush1.msra.mxu0 %v212
    %1803 = vmatprep.subr.mxu0 0.0
    %1804 = vmatpush1.msra.mxu0 %v211
    %1805 = vmatprep.subr.mxu0 0.0
    %1806 = vmatpush2.msra.mxu0 0.0
    %1807 = vmatprep.subr.mxu0 0.0
    %1808 = vmatpush2.msra.mxu0 0.0
    %1809 = vmatprep.subr.mxu0 0.0
    %1810 = vmatpush2.msra.mxu0 0.0
    %1811 = vmatprep.subr.mxu0 0.0
    %1812 = vmatpush2.msra.mxu0 0.0
    %1813 = vmatprep.subr.mxu0 0.0
    %1814 = vmatpush2.msra.mxu0 0.0
    %1815 = vmatprep.subr.mxu0 0.0
    %1816 = vmatpush2.msra.mxu0 0.0
    %1817 = vmatprep.subr.mxu0 0.0
    %1818 = vmatpush2.msra.mxu0 0.0
    %1819 = vmatprep.subr.mxu0 0.0
    %1820 = vmatpush2.msra.mxu0 0.0
    %1821 = vmatprep.subr.mxu0 0.0
    %1822 = vmatpush2.msra.mxu0 0.0
    %1823 = vmatprep.subr.mxu0 0.0
    %1824 = vmatpush2.msra.mxu0 0.0
    %1825 = vmatprep.subr.mxu0 0.0
    %1826 = vmatpush2.msra.mxu0 0.0
    %1827 = vmatprep.subr.mxu0 0.0
    %1828 = vmatpush2.msra.mxu0 0.0
    %1829 = vmatprep.subr.mxu0 0.0
    %1830 = vmatpush2.msra.mxu0 0.0
    %1831 = vmatprep.subr.mxu0 0.0
    %1832 = vmatpush2.msra.mxu0 0.0
    %1833 = vmatprep.subr.mxu0 0.0
    %1834 = vmatpush2.msra.mxu0 0.0
    %1835 = vmatprep.subr.mxu0 0.0
    %1836 = vmatpush2.msra.mxu0 0.0
    %1837 = vmatprep.mubr.f32.mxu0 0.0
    %1838 = vmatmul.mubr.f32.gmra.mxu0 %v1772
    %v1839 = vpop.f32.mrf.mxu0
    %v1840 = vadd.f32 0.0, %v1839
    %v1841 = vpop.f32.mrf.mxu0
    %1842 = vdwg.mxu0
    %v1843 = vmul.f32 %v663, %v1840
    %v1844 = vadd.f32 %v1404, %v1843
    %1845 = vmatprep.subr.mxu0 0.0
    %1846 = vmatpush1.msra.mxu0 %v210
    %1847 = vmatprep.subr.mxu0 0.0
    %1848 = vmatpush1.msra.mxu0 %v209
    %1849 = vmatprep.subr.mxu0 0.0
    %1850 = vmatpush1.msra.mxu0 %v208
    %1851 = vmatprep.subr.mxu0 0.0
    %1852 = vmatpush1.msra.mxu0 %v207
    %1853 = vmatprep.subr.mxu0 0.0
    %1854 = vmatpush1.msra.mxu0 %v206
    %1855 = vmatprep.subr.mxu0 0.0
    %1856 = vmatpush1.msra.mxu0 %v205
    %1857 = vmatprep.subr.mxu0 0.0
    %1858 = vmatpush1.msra.mxu0 %v204
    %1859 = vmatprep.subr.mxu0 0.0
    %1860 = vmatpush1.msra.mxu0 %v203
    %1861 = vmatprep.subr.mxu0 0.0
    %1862 = vmatpush1.msra.mxu0 %v202
    %1863 = vmatprep.subr.mxu0 0.0
    %1864 = vmatpush1.msra.mxu0 %v201
    %1865 = vmatprep.subr.mxu0 0.0
    %1866 = vmatpush1.msra.mxu0 %v200
    %1867 = vmatprep.subr.mxu0 0.0
    %1868 = vmatpush1.msra.mxu0 %v199
    %1869 = vmatprep.subr.mxu0 0.0
    %1870 = vmatpush1.msra.mxu0 %v198
    %1871 = vmatprep.subr.mxu0 0.0
    %1872 = vmatpush1.msra.mxu0 %v197
    %1873 = vmatprep.subr.mxu0 0.0
    %1874 = vmatpush1.msra.mxu0 %v196
    %1875 = vmatprep.subr.mxu0 0.0
    %1876 = vmatpush1.msra.mxu0 %v195
    %1877 = vmatprep.subr.mxu0 0.0
    %1878 = vmatpush2.msra.mxu0 0.0
    %1879 = vmatprep.subr.mxu0 0.0
    %1880 = vmatpush2.msra.mxu0 0.0
    %1881 = vmatprep.subr.mxu0 0.0
    %1882 = vmatpush2.msra.mxu0 0.0
    %1883 = vmatprep.subr.mxu0 0.0
    %1884 = vmatpush2.msra.mxu0 0.0
    %1885 = vmatprep.subr.mxu0 0.0
    %1886 = vmatpush2.msra.mxu0 0.0
    %1887 = vmatprep.subr.mxu0 0.0
    %1888 = vmatpush2.msra.mxu0 0.0
    %1889 = vmatprep.subr.mxu0 0.0
    %1890 = vmatpush2.msra.mxu0 0.0
    %1891 = vmatprep.subr.mxu0 0.0
    %1892 = vmatpush2.msra.mxu0 0.0
    %1893 = vmatprep.subr.mxu0 0.0
    %1894 = vmatpush2.msra.mxu0 0.0
    %1895 = vmatprep.subr.mxu0 0.0
    %1896 = vmatpush2.msra.mxu0 0.0
    %1897 = vmatprep.subr.mxu0 0.0
    %1898 = vmatpush2.msra.mxu0 0.0
    %1899 = vmatprep.subr.mxu0 0.0
    %1900 = vmatpush2.msra.mxu0 0.0
    %1901 = vmatprep.subr.mxu0 0.0
    %1902 = vmatpush2.msra.mxu0 0.0
    %1903 = vmatprep.subr.mxu0 0.0
    %1904 = vmatpush2.msra.mxu0 0.0
    %1905 = vmatprep.subr.mxu0 0.0
    %1906 = vmatpush2.msra.mxu0 0.0
    %1907 = vmatprep.subr.mxu0 0.0
    %1908 = vmatpush2.msra.mxu0 0.0
    %1909 = vmatprep.mubr.f32.mxu0 0.0
    %1910 = vmatmul.mubr.f32.gmra.mxu0 %v1844
    %v1911 = vpop.f32.mrf.mxu0
    %v1912 = vadd.f32 %v1415, %v1911
    %v1913 = vpop.f32.mrf.mxu0
    %1914 = vdwg.mxu0
    %v1915 = vtanh.pop %v1912
    %1916 = vmatprep.subr.mxu0 0.0
    %1917 = vmatpush1.msra.mxu0 %v226
    %1918 = vmatprep.subr.mxu0 0.0
    %1919 = vmatpush1.msra.mxu0 %v225
    %1920 = vmatprep.subr.mxu0 0.0
    %1921 = vmatpush1.msra.mxu0 %v224
    %1922 = vmatprep.subr.mxu0 0.0
    %1923 = vmatpush1.msra.mxu0 %v223
    %1924 = vmatprep.subr.mxu0 0.0
    %1925 = vmatpush1.msra.mxu0 %v222
    %1926 = vmatprep.subr.mxu0 0.0
    %1927 = vmatpush1.msra.mxu0 %v221
    %1928 = vmatprep.subr.mxu0 0.0
    %1929 = vmatpush1.msra.mxu0 %v220
    %1930 = vmatprep.subr.mxu0 0.0
    %1931 = vmatpush1.msra.mxu0 %v219
    %1932 = vmatprep.subr.mxu0 0.0
    %1933 = vmatpush1.msra.mxu0 %v218
    %1934 = vmatprep.subr.mxu0 0.0
    %1935 = vmatpush1.msra.mxu0 %v217
    %1936 = vmatprep.subr.mxu0 0.0
    %1937 = vmatpush1.msra.mxu0 %v216
    %1938 = vmatprep.subr.mxu0 0.0
    %1939 = vmatpush1.msra.mxu0 %v215
    %1940 = vmatprep.subr.mxu0 0.0
    %1941 = vmatpush1.msra.mxu0 %v214
    %1942 = vmatprep.subr.mxu0 0.0
    %1943 = vmatpush1.msra.mxu0 %v213
    %1944 = vmatprep.subr.mxu0 0.0
    %1945 = vmatpush1.msra.mxu0 %v212
    %1946 = vmatprep.subr.mxu0 0.0
    %1947 = vmatpush1.msra.mxu0 %v211
    %1948 = vmatprep.subr.mxu0 0.0
    %1949 = vmatpush2.msra.mxu0 0.0
    %1950 = vmatprep.subr.mxu0 0.0
    %1951 = vmatpush2.msra.mxu0 0.0
    %1952 = vmatprep.subr.mxu0 0.0
    %1953 = vmatpush2.msra.mxu0 0.0
    %1954 = vmatprep.subr.mxu0 0.0
    %1955 = vmatpush2.msra.mxu0 0.0
    %1956 = vmatprep.subr.mxu0 0.0
    %1957 = vmatpush2.msra.mxu0 0.0
    %1958 = vmatprep.subr.mxu0 0.0
    %1959 = vmatpush2.msra.mxu0 0.0
    %1960 = vmatprep.subr.mxu0 0.0
    %1961 = vmatpush2.msra.mxu0 0.0
    %1962 = vmatprep.subr.mxu0 0.0
    %1963 = vmatpush2.msra.mxu0 0.0
    %1964 = vmatprep.subr.mxu0 0.0
    %1965 = vmatpush2.msra.mxu0 0.0
    %1966 = vmatprep.subr.mxu0 0.0
    %1967 = vmatpush2.msra.mxu0 0.0
    %1968 = vmatprep.subr.mxu0 0.0
    %1969 = vmatpush2.msra.mxu0 0.0
    %1970 = vmatprep.subr.mxu0 0.0
    %1971 = vmatpush2.msra.mxu0 0.0
    %1972 = vmatprep.subr.mxu0 0.0
    %1973 = vmatpush2.msra.mxu0 0.0
    %1974 = vmatprep.subr.mxu0 0.0
    %1975 = vmatpush2.msra.mxu0 0.0
    %1976 = vmatprep.subr.mxu0 0.0
    %1977 = vmatpush2.msra.mxu0 0.0
    %1978 = vmatprep.subr.mxu0 0.0
    %1979 = vmatpush2.msra.mxu0 0.0
    %1980 = vmatprep.mubr.f32.mxu0 0.0
    %1981 = vmatmul.mubr.f32.gmra.mxu0 %v1915
    %v1982 = vpop.f32.mrf.mxu0
    %v1983 = vadd.f32 0.0, %v1982
    %v1984 = vpop.f32.mrf.mxu0
    %1985 = vdwg.mxu0
    %v1986 = vmul.f32 %v1697, 2.0
    %v1987 = vadd.f32 %v1554, %v1986
    %v1988 = vmul.f32 %v1840, 2.0
    %v1989 = vadd.f32 %v1987, %v1988
    %v1990 = vadd.f32 %v1989, %v1983
    %v1991 = vmul.f32 %v812, %v1990
    %v1992 = vadd.f32 %v1404, %v1991
    %v1993 = vtanh.pop %v1992
    %s1994 = scalar_lea.vmem [#allocation13], 24
    %1995 = vst [vmem:[%s1994] sm:$0xff] %v1993
    %s1996 = sld [smem:[#allocation3 + $0x3]]
    %v1997 = vstv %s1996
    %v1998 = vadd.f32 %v192, %v1997
    %s1999 = sadd.f32 %s1996, %s99
    %v2000 = vstv %s1999
    %v2001 = vadd.f32 %v192, %v2000
    %s2002 = sadd.f32 %s1996, %s98
    %v2003 = vstv %s2002
    %v2004 = vadd.f32 %v192, %v2003
    %2005 = vmatprep.subr.mxu0 0.0
    %2006 = vmatpush1.msra.mxu0 %v210
    %2007 = vmatprep.subr.mxu0 0.0
    %2008 = vmatpush1.msra.mxu0 %v209
    %2009 = vmatprep.subr.mxu0 0.0
    %2010 = vmatpush1.msra.mxu0 %v208
    %2011 = vmatprep.subr.mxu0 0.0
    %2012 = vmatpush1.msra.mxu0 %v207
    %2013 = vmatprep.subr.mxu0 0.0
    %2014 = vmatpush1.msra.mxu0 %v206
    %2015 = vmatprep.subr.mxu0 0.0
    %2016 = vmatpush1.msra.mxu0 %v205
    %2017 = vmatprep.subr.mxu0 0.0
    %2018 = vmatpush1.msra.mxu0 %v204
    %2019 = vmatprep.subr.mxu0 0.0
    %2020 = vmatpush1.msra.mxu0 %v203
    %2021 = vmatprep.subr.mxu0 0.0
    %2022 = vmatpush1.msra.mxu0 %v202
    %2023 = vmatprep.subr.mxu0 0.0
    %2024 = vmatpush1.msra.mxu0 %v201
    %2025 = vmatprep.subr.mxu0 0.0
    %2026 = vmatpush1.msra.mxu0 %v200
    %2027 = vmatprep.subr.mxu0 0.0
    %2028 = vmatpush1.msra.mxu0 %v199
    %2029 = vmatprep.subr.mxu0 0.0
    %2030 = vmatpush1.msra.mxu0 %v198
    %2031 = vmatprep.subr.mxu0 0.0
    %2032 = vmatpush1.msra.mxu0 %v197
    %2033 = vmatprep.subr.mxu0 0.0
    %2034 = vmatpush1.msra.mxu0 %v196
    %2035 = vmatprep.subr.mxu0 0.0
    %2036 = vmatpush1.msra.mxu0 %v195
    %2037 = vmatprep.subr.mxu0 0.0
    %2038 = vmatpush2.msra.mxu0 0.0
    %2039 = vmatprep.subr.mxu0 0.0
    %2040 = vmatpush2.msra.mxu0 0.0
    %2041 = vmatprep.subr.mxu0 0.0
    %2042 = vmatpush2.msra.mxu0 0.0
    %2043 = vmatprep.subr.mxu0 0.0
    %2044 = vmatpush2.msra.mxu0 0.0
    %2045 = vmatprep.subr.mxu0 0.0
    %2046 = vmatpush2.msra.mxu0 0.0
    %2047 = vmatprep.subr.mxu0 0.0
    %2048 = vmatpush2.msra.mxu0 0.0
    %2049 = vmatprep.subr.mxu0 0.0
    %2050 = vmatpush2.msra.mxu0 0.0
    %2051 = vmatprep.subr.mxu0 0.0
    %2052 = vmatpush2.msra.mxu0 0.0
    %2053 = vmatprep.subr.mxu0 0.0
    %2054 = vmatpush2.msra.mxu0 0.0
    %2055 = vmatprep.subr.mxu0 0.0
    %2056 = vmatpush2.msra.mxu0 0.0
    %2057 = vmatprep.subr.mxu0 0.0
    %2058 = vmatpush2.msra.mxu0 0.0
    %2059 = vmatprep.subr.mxu0 0.0
    %2060 = vmatpush2.msra.mxu0 0.0
    %2061 = vmatprep.subr.mxu0 0.0
    %2062 = vmatpush2.msra.mxu0 0.0
    %2063 = vmatprep.subr.mxu0 0.0
    %2064 = vmatpush2.msra.mxu0 0.0
    %2065 = vmatprep.subr.mxu0 0.0
    %2066 = vmatpush2.msra.mxu0 0.0
    %2067 = vmatprep.subr.mxu0 0.0
    %2068 = vmatpush2.msra.mxu0 0.0
    %2069 = vmatprep.mubr.f32.mxu0 0.0
    %2070 = vmatmul.mubr.f32.gmra.mxu0 %v1993
    %v2071 = vpop.f32.mrf.mxu0
    %v2072 = vadd.f32 %v1998, %v2071
    %v2073 = vpop.f32.mrf.mxu0
    %2074 = vdwg.mxu0
    %v2075 = vtanh.pop %v2072
    %2076 = vmatprep.subr.mxu0 0.0
    %2077 = vmatpush1.msra.mxu0 %v226
    %2078 = vmatprep.subr.mxu0 0.0
    %2079 = vmatpush1.msra.mxu0 %v225
    %2080 = vmatprep.subr.mxu0 0.0
    %2081 = vmatpush1.msra.mxu0 %v224
    %2082 = vmatprep.subr.mxu0 0.0
    %2083 = vmatpush1.msra.mxu0 %v223
    %2084 = vmatprep.subr.mxu0 0.0
    %2085 = vmatpush1.msra.mxu0 %v222
    %2086 = vmatprep.subr.mxu0 0.0
    %2087 = vmatpush1.msra.mxu0 %v221
    %2088 = vmatprep.subr.mxu0 0.0
    %2089 = vmatpush1.msra.mxu0 %v220
    %2090 = vmatprep.subr.mxu0 0.0
    %2091 = vmatpush1.msra.mxu0 %v219
    %2092 = vmatprep.subr.mxu0 0.0
    %2093 = vmatpush1.msra.mxu0 %v218
    %2094 = vmatprep.subr.mxu0 0.0
    %2095 = vmatpush1.msra.mxu0 %v217
    %2096 = vmatprep.subr.mxu0 0.0
    %2097 = vmatpush1.msra.mxu0 %v216
    %2098 = vmatprep.subr.mxu0 0.0
    %2099 = vmatpush1.msra.mxu0 %v215
    %2100 = vmatprep.subr.mxu0 0.0
    %2101 = vmatpush1.msra.mxu0 %v214
    %2102 = vmatprep.subr.mxu0 0.0
    %2103 = vmatpush1.msra.mxu0 %v213
    %2104 = vmatprep.subr.mxu0 0.0
    %2105 = vmatpush1.msra.mxu0 %v212
    %2106 = vmatprep.subr.mxu0 0.0
    %2107 = vmatpush1.msra.mxu0 %v211
    %2108 = vmatprep.subr.mxu0 0.0
    %2109 = vmatpush2.msra.mxu0 0.0
    %2110 = vmatprep.subr.mxu0 0.0
    %2111 = vmatpush2.msra.mxu0 0.0
    %2112 = vmatprep.subr.mxu0 0.0
    %2113 = vmatpush2.msra.mxu0 0.0
    %2114 = vmatprep.subr.mxu0 0.0
    %2115 = vmatpush2.msra.mxu0 0.0
    %2116 = vmatprep.subr.mxu0 0.0
    %2117 = vmatpush2.msra.mxu0 0.0
    %2118 = vmatprep.subr.mxu0 0.0
    %2119 = vmatpush2.msra.mxu0 0.0
    %2120 = vmatprep.subr.mxu0 0.0
    %2121 = vmatpush2.msra.mxu0 0.0
    %2122 = vmatprep.subr.mxu0 0.0
    %2123 = vmatpush2.msra.mxu0 0.0
    %2124 = vmatprep.subr.mxu0 0.0
    %2125 = vmatpush2.msra.mxu0 0.0
    %2126 = vmatprep.subr.mxu0 0.0
    %2127 = vmatpush2.msra.mxu0 0.0
    %2128 = vmatprep.subr.mxu0 0.0
    %2129 = vmatpush2.msra.mxu0 0.0
    %2130 = vmatprep.subr.mxu0 0.0
    %2131 = vmatpush2.msra.mxu0 0.0
    %2132 = vmatprep.subr.mxu0 0.0
    %2133 = vmatpush2.msra.mxu0 0.0
    %2134 = vmatprep.subr.mxu0 0.0
    %2135 = vmatpush2.msra.mxu0 0.0
    %2136 = vmatprep.subr.mxu0 0.0
    %2137 = vmatpush2.msra.mxu0 0.0
    %2138 = vmatprep.subr.mxu0 0.0
    %2139 = vmatpush2.msra.mxu0 0.0
    %2140 = vmatprep.mubr.f32.mxu0 0.0
    %2141 = vmatmul.mubr.f32.gmra.mxu0 %v2075
    %v2142 = vpop.f32.mrf.mxu0
    %v2143 = vadd.f32 0.0, %v2142
    %v2144 = vpop.f32.mrf.mxu0
    %2145 = vdwg.mxu0
    %v2146 = vmul.f32 %v376, %v2143
    %v2147 = vadd.f32 %v1993, %v2146
    %2148 = vmatprep.subr.mxu0 0.0
    %2149 = vmatpush1.msra.mxu0 %v210
    %2150 = vmatprep.subr.mxu0 0.0
    %2151 = vmatpush1.msra.mxu0 %v209
    %2152 = vmatprep.subr.mxu0 0.0
    %2153 = vmatpush1.msra.mxu0 %v208
    %2154 = vmatprep.subr.mxu0 0.0
    %2155 = vmatpush1.msra.mxu0 %v207
    %2156 = vmatprep.subr.mxu0 0.0
    %2157 = vmatpush1.msra.mxu0 %v206
    %2158 = vmatprep.subr.mxu0 0.0
    %2159 = vmatpush1.msra.mxu0 %v205
    %2160 = vmatprep.subr.mxu0 0.0
    %2161 = vmatpush1.msra.mxu0 %v204
    %2162 = vmatprep.subr.mxu0 0.0
    %2163 = vmatpush1.msra.mxu0 %v203
    %2164 = vmatprep.subr.mxu0 0.0
    %2165 = vmatpush1.msra.mxu0 %v202
    %2166 = vmatprep.subr.mxu0 0.0
    %2167 = vmatpush1.msra.mxu0 %v201
    %2168 = vmatprep.subr.mxu0 0.0
    %2169 = vmatpush1.msra.mxu0 %v200
    %2170 = vmatprep.subr.mxu0 0.0
    %2171 = vmatpush1.msra.mxu0 %v199
    %2172 = vmatprep.subr.mxu0 0.0
    %2173 = vmatpush1.msra.mxu0 %v198
    %2174 = vmatprep.subr.mxu0 0.0
    %2175 = vmatpush1.msra.mxu0 %v197
    %2176 = vmatprep.subr.mxu0 0.0
    %2177 = vmatpush1.msra.mxu0 %v196
    %2178 = vmatprep.subr.mxu0 0.0
    %2179 = vmatpush1.msra.mxu0 %v195
    %2180 = vmatprep.subr.mxu0 0.0
    %2181 = vmatpush2.msra.mxu0 0.0
    %2182 = vmatprep.subr.mxu0 0.0
    %2183 = vmatpush2.msra.mxu0 0.0
    %2184 = vmatprep.subr.mxu0 0.0
    %2185 = vmatpush2.msra.mxu0 0.0
    %2186 = vmatprep.subr.mxu0 0.0
    %2187 = vmatpush2.msra.mxu0 0.0
    %2188 = vmatprep.subr.mxu0 0.0
    %2189 = vmatpush2.msra.mxu0 0.0
    %2190 = vmatprep.subr.mxu0 0.0
    %2191 = vmatpush2.msra.mxu0 0.0
    %2192 = vmatprep.subr.mxu0 0.0
    %2193 = vmatpush2.msra.mxu0 0.0
    %2194 = vmatprep.subr.mxu0 0.0
    %2195 = vmatpush2.msra.mxu0 0.0
    %2196 = vmatprep.subr.mxu0 0.0
    %2197 = vmatpush2.msra.mxu0 0.0
    %2198 = vmatprep.subr.mxu0 0.0
    %2199 = vmatpush2.msra.mxu0 0.0
    %2200 = vmatprep.subr.mxu0 0.0
    %2201 = vmatpush2.msra.mxu0 0.0
    %2202 = vmatprep.subr.mxu0 0.0
    %2203 = vmatpush2.msra.mxu0 0.0
    %2204 = vmatprep.subr.mxu0 0.0
    %2205 = vmatpush2.msra.mxu0 0.0
    %2206 = vmatprep.subr.mxu0 0.0
    %2207 = vmatpush2.msra.mxu0 0.0
    %2208 = vmatprep.subr.mxu0 0.0
    %2209 = vmatpush2.msra.mxu0 0.0
    %2210 = vmatprep.subr.mxu0 0.0
    %2211 = vmatpush2.msra.mxu0 0.0
    %2212 = vmatprep.mubr.f32.mxu0 0.0
    %2213 = vmatmul.mubr.f32.gmra.mxu0 %v2147
    %v2214 = vpop.f32.mrf.mxu0
    %v2215 = vadd.f32 %v2001, %v2214
    %v2216 = vpop.f32.mrf.mxu0
    %2217 = vdwg.mxu0
    %v2218 = vtanh.pop %v2215
    %2219 = vmatprep.subr.mxu0 0.0
    %2220 = vmatpush1.msra.mxu0 %v226
    %2221 = vmatprep.subr.mxu0 0.0
    %2222 = vmatpush1.msra.mxu0 %v225
    %2223 = vmatprep.subr.mxu0 0.0
    %2224 = vmatpush1.msra.mxu0 %v224
    %2225 = vmatprep.subr.mxu0 0.0
    %2226 = vmatpush1.msra.mxu0 %v223
    %2227 = vmatprep.subr.mxu0 0.0
    %2228 = vmatpush1.msra.mxu0 %v222
    %2229 = vmatprep.subr.mxu0 0.0
    %2230 = vmatpush1.msra.mxu0 %v221
    %2231 = vmatprep.subr.mxu0 0.0
    %2232 = vmatpush1.msra.mxu0 %v220
    %2233 = vmatprep.subr.mxu0 0.0
    %2234 = vmatpush1.msra.mxu0 %v219
    %2235 = vmatprep.subr.mxu0 0.0
    %2236 = vmatpush1.msra.mxu0 %v218
    %2237 = vmatprep.subr.mxu0 0.0
    %2238 = vmatpush1.msra.mxu0 %v217
    %2239 = vmatprep.subr.mxu0 0.0
    %2240 = vmatpush1.msra.mxu0 %v216
    %2241 = vmatprep.subr.mxu0 0.0
    %2242 = vmatpush1.msra.mxu0 %v215
    %2243 = vmatprep.subr.mxu0 0.0
    %2244 = vmatpush1.msra.mxu0 %v214
    %2245 = vmatprep.subr.mxu0 0.0
    %2246 = vmatpush1.msra.mxu0 %v213
    %2247 = vmatprep.subr.mxu0 0.0
    %2248 = vmatpush1.msra.mxu0 %v212
    %2249 = vmatprep.subr.mxu0 0.0
    %2250 = vmatpush1.msra.mxu0 %v211
    %2251 = vmatprep.subr.mxu0 0.0
    %2252 = vmatpush2.msra.mxu0 0.0
    %2253 = vmatprep.subr.mxu0 0.0
    %2254 = vmatpush2.msra.mxu0 0.0
    %2255 = vmatprep.subr.mxu0 0.0
    %2256 = vmatpush2.msra.mxu0 0.0
    %2257 = vmatprep.subr.mxu0 0.0
    %2258 = vmatpush2.msra.mxu0 0.0
    %2259 = vmatprep.subr.mxu0 0.0
    %2260 = vmatpush2.msra.mxu0 0.0
    %2261 = vmatprep.subr.mxu0 0.0
    %2262 = vmatpush2.msra.mxu0 0.0
    %2263 = vmatprep.subr.mxu0 0.0
    %2264 = vmatpush2.msra.mxu0 0.0
    %2265 = vmatprep.subr.mxu0 0.0
    %2266 = vmatpush2.msra.mxu0 0.0
    %2267 = vmatprep.subr.mxu0 0.0
    %2268 = vmatpush2.msra.mxu0 0.0
    %2269 = vmatprep.subr.mxu0 0.0
    %2270 = vmatpush2.msra.mxu0 0.0
    %2271 = vmatprep.subr.mxu0 0.0
    %2272 = vmatpush2.msra.mxu0 0.0
    %2273 = vmatprep.subr.mxu0 0.0
    %2274 = vmatpush2.msra.mxu0 0.0
    %2275 = vmatprep.subr.mxu0 0.0
    %2276 = vmatpush2.msra.mxu0 0.0
    %2277 = vmatprep.subr.mxu0 0.0
    %2278 = vmatpush2.msra.mxu0 0.0
    %2279 = vmatprep.subr.mxu0 0.0
    %2280 = vmatpush2.msra.mxu0 0.0
    %2281 = vmatprep.subr.mxu0 0.0
    %2282 = vmatpush2.msra.mxu0 0.0
    %2283 = vmatprep.mubr.f32.mxu0 0.0
    %2284 = vmatmul.mubr.f32.gmra.mxu0 %v2218
    %v2285 = vpop.f32.mrf.mxu0
    %v2286 = vadd.f32 0.0, %v2285
    %v2287 = vpop.f32.mrf.mxu0
    %2288 = vdwg.mxu0
    %v2289 = vmul.f32 %v376, %v2286
    %v2290 = vadd.f32 %v1993, %v2289
    %2291 = vmatprep.subr.mxu0 0.0
    %2292 = vmatpush1.msra.mxu0 %v210
    %2293 = vmatprep.subr.mxu0 0.0
    %2294 = vmatpush1.msra.mxu0 %v209
    %2295 = vmatprep.subr.mxu0 0.0
    %2296 = vmatpush1.msra.mxu0 %v208
    %2297 = vmatprep.subr.mxu0 0.0
    %2298 = vmatpush1.msra.mxu0 %v207
    %2299 = vmatprep.subr.mxu0 0.0
    %2300 = vmatpush1.msra.mxu0 %v206
    %2301 = vmatprep.subr.mxu0 0.0
    %2302 = vmatpush1.msra.mxu0 %v205
    %2303 = vmatprep.subr.mxu0 0.0
    %2304 = vmatpush1.msra.mxu0 %v204
    %2305 = vmatprep.subr.mxu0 0.0
    %2306 = vmatpush1.msra.mxu0 %v203
    %2307 = vmatprep.subr.mxu0 0.0
    %2308 = vmatpush1.msra.mxu0 %v202
    %2309 = vmatprep.subr.mxu0 0.0
    %2310 = vmatpush1.msra.mxu0 %v201
    %2311 = vmatprep.subr.mxu0 0.0
    %2312 = vmatpush1.msra.mxu0 %v200
    %2313 = vmatprep.subr.mxu0 0.0
    %2314 = vmatpush1.msra.mxu0 %v199
    %2315 = vmatprep.subr.mxu0 0.0
    %2316 = vmatpush1.msra.mxu0 %v198
    %2317 = vmatprep.subr.mxu0 0.0
    %2318 = vmatpush1.msra.mxu0 %v197
    %2319 = vmatprep.subr.mxu0 0.0
    %2320 = vmatpush1.msra.mxu0 %v196
    %2321 = vmatprep.subr.mxu0 0.0
    %2322 = vmatpush1.msra.mxu0 %v195
    %2323 = vmatprep.subr.mxu0 0.0
    %2324 = vmatpush2.msra.mxu0 0.0
    %2325 = vmatprep.subr.mxu0 0.0
    %2326 = vmatpush2.msra.mxu0 0.0
    %2327 = vmatprep.subr.mxu0 0.0
    %2328 = vmatpush2.msra.mxu0 0.0
    %2329 = vmatprep.subr.mxu0 0.0
    %2330 = vmatpush2.msra.mxu0 0.0
    %2331 = vmatprep.subr.mxu0 0.0
    %2332 = vmatpush2.msra.mxu0 0.0
    %2333 = vmatprep.subr.mxu0 0.0
    %2334 = vmatpush2.msra.mxu0 0.0
    %2335 = vmatprep.subr.mxu0 0.0
    %2336 = vmatpush2.msra.mxu0 0.0
    %2337 = vmatprep.subr.mxu0 0.0
    %2338 = vmatpush2.msra.mxu0 0.0
    %2339 = vmatprep.subr.mxu0 0.0
    %2340 = vmatpush2.msra.mxu0 0.0
    %2341 = vmatprep.subr.mxu0 0.0
    %2342 = vmatpush2.msra.mxu0 0.0
    %2343 = vmatprep.subr.mxu0 0.0
    %2344 = vmatpush2.msra.mxu0 0.0
    %2345 = vmatprep.subr.mxu0 0.0
    %2346 = vmatpush2.msra.mxu0 0.0
    %2347 = vmatprep.subr.mxu0 0.0
    %2348 = vmatpush2.msra.mxu0 0.0
    %2349 = vmatprep.subr.mxu0 0.0
    %2350 = vmatpush2.msra.mxu0 0.0
    %2351 = vmatprep.subr.mxu0 0.0
    %2352 = vmatpush2.msra.mxu0 0.0
    %2353 = vmatprep.subr.mxu0 0.0
    %2354 = vmatpush2.msra.mxu0 0.0
    %2355 = vmatprep.mubr.f32.mxu0 0.0
    %2356 = vmatmul.mubr.f32.gmra.mxu0 %v2290
    %v2357 = vpop.f32.mrf.mxu0
    %v2358 = vadd.f32 %v2001, %v2357
    %v2359 = vpop.f32.mrf.mxu0
    %2360 = vdwg.mxu0
    %v2361 = vtanh.pop %v2358
    %2362 = vmatprep.subr.mxu0 0.0
    %2363 = vmatpush1.msra.mxu0 %v226
    %2364 = vmatprep.subr.mxu0 0.0
    %2365 = vmatpush1.msra.mxu0 %v225
    %2366 = vmatprep.subr.mxu0 0.0
    %2367 = vmatpush1.msra.mxu0 %v224
    %2368 = vmatprep.subr.mxu0 0.0
    %2369 = vmatpush1.msra.mxu0 %v223
    %2370 = vmatprep.subr.mxu0 0.0
    %2371 = vmatpush1.msra.mxu0 %v222
    %2372 = vmatprep.subr.mxu0 0.0
    %2373 = vmatpush1.msra.mxu0 %v221
    %2374 = vmatprep.subr.mxu0 0.0
    %2375 = vmatpush1.msra.mxu0 %v220
    %2376 = vmatprep.subr.mxu0 0.0
    %2377 = vmatpush1.msra.mxu0 %v219
    %2378 = vmatprep.subr.mxu0 0.0
    %2379 = vmatpush1.msra.mxu0 %v218
    %2380 = vmatprep.subr.mxu0 0.0
    %2381 = vmatpush1.msra.mxu0 %v217
    %2382 = vmatprep.subr.mxu0 0.0
    %2383 = vmatpush1.msra.mxu0 %v216
    %2384 = vmatprep.subr.mxu0 0.0
    %2385 = vmatpush1.msra.mxu0 %v215
    %2386 = vmatprep.subr.mxu0 0.0
    %2387 = vmatpush1.msra.mxu0 %v214
    %2388 = vmatprep.subr.mxu0 0.0
    %2389 = vmatpush1.msra.mxu0 %v213
    %2390 = vmatprep.subr.mxu0 0.0
    %2391 = vmatpush1.msra.mxu0 %v212
    %2392 = vmatprep.subr.mxu0 0.0
    %2393 = vmatpush1.msra.mxu0 %v211
    %2394 = vmatprep.subr.mxu0 0.0
    %2395 = vmatpush2.msra.mxu0 0.0
    %2396 = vmatprep.subr.mxu0 0.0
    %2397 = vmatpush2.msra.mxu0 0.0
    %2398 = vmatprep.subr.mxu0 0.0
    %2399 = vmatpush2.msra.mxu0 0.0
    %2400 = vmatprep.subr.mxu0 0.0
    %2401 = vmatpush2.msra.mxu0 0.0
    %2402 = vmatprep.subr.mxu0 0.0
    %2403 = vmatpush2.msra.mxu0 0.0
    %2404 = vmatprep.subr.mxu0 0.0
    %2405 = vmatpush2.msra.mxu0 0.0
    %2406 = vmatprep.subr.mxu0 0.0
    %2407 = vmatpush2.msra.mxu0 0.0
    %2408 = vmatprep.subr.mxu0 0.0
    %2409 = vmatpush2.msra.mxu0 0.0
    %2410 = vmatprep.subr.mxu0 0.0
    %2411 = vmatpush2.msra.mxu0 0.0
    %2412 = vmatprep.subr.mxu0 0.0
    %2413 = vmatpush2.msra.mxu0 0.0
    %2414 = vmatprep.subr.mxu0 0.0
    %2415 = vmatpush2.msra.mxu0 0.0
    %2416 = vmatprep.subr.mxu0 0.0
    %2417 = vmatpush2.msra.mxu0 0.0
    %2418 = vmatprep.subr.mxu0 0.0
    %2419 = vmatpush2.msra.mxu0 0.0
    %2420 = vmatprep.subr.mxu0 0.0
    %2421 = vmatpush2.msra.mxu0 0.0
    %2422 = vmatprep.subr.mxu0 0.0
    %2423 = vmatpush2.msra.mxu0 0.0
    %2424 = vmatprep.subr.mxu0 0.0
    %2425 = vmatpush2.msra.mxu0 0.0
    %2426 = vmatprep.mubr.f32.mxu0 0.0
    %2427 = vmatmul.mubr.f32.gmra.mxu0 %v2361
    %v2428 = vpop.f32.mrf.mxu0
    %v2429 = vadd.f32 0.0, %v2428
    %v2430 = vpop.f32.mrf.mxu0
    %2431 = vdwg.mxu0
    %v2432 = vmul.f32 %v663, %v2429
    %v2433 = vadd.f32 %v1993, %v2432
    %2434 = vmatprep.subr.mxu0 0.0
    %2435 = vmatpush1.msra.mxu0 %v210
    %2436 = vmatprep.subr.mxu0 0.0
    %2437 = vmatpush1.msra.mxu0 %v209
    %2438 = vmatprep.subr.mxu0 0.0
    %2439 = vmatpush1.msra.mxu0 %v208
    %2440 = vmatprep.subr.mxu0 0.0
    %2441 = vmatpush1.msra.mxu0 %v207
    %2442 = vmatprep.subr.mxu0 0.0
    %2443 = vmatpush1.msra.mxu0 %v206
    %2444 = vmatprep.subr.mxu0 0.0
    %2445 = vmatpush1.msra.mxu0 %v205
    %2446 = vmatprep.subr.mxu0 0.0
    %2447 = vmatpush1.msra.mxu0 %v204
    %2448 = vmatprep.subr.mxu0 0.0
    %2449 = vmatpush1.msra.mxu0 %v203
    %2450 = vmatprep.subr.mxu0 0.0
    %2451 = vmatpush1.msra.mxu0 %v202
    %2452 = vmatprep.subr.mxu0 0.0
    %2453 = vmatpush1.msra.mxu0 %v201
    %2454 = vmatprep.subr.mxu0 0.0
    %2455 = vmatpush1.msra.mxu0 %v200
    %2456 = vmatprep.subr.mxu0 0.0
    %2457 = vmatpush1.msra.mxu0 %v199
    %2458 = vmatprep.subr.mxu0 0.0
    %2459 = vmatpush1.msra.mxu0 %v198
    %2460 = vmatprep.subr.mxu0 0.0
    %2461 = vmatpush1.msra.mxu0 %v197
    %2462 = vmatprep.subr.mxu0 0.0
    %2463 = vmatpush1.msra.mxu0 %v196
    %2464 = vmatprep.subr.mxu0 0.0
    %2465 = vmatpush1.msra.mxu0 %v195
    %2466 = vmatprep.subr.mxu0 0.0
    %2467 = vmatpush2.msra.mxu0 0.0
    %2468 = vmatprep.subr.mxu0 0.0
    %2469 = vmatpush2.msra.mxu0 0.0
    %2470 = vmatprep.subr.mxu0 0.0
    %2471 = vmatpush2.msra.mxu0 0.0
    %2472 = vmatprep.subr.mxu0 0.0
    %2473 = vmatpush2.msra.mxu0 0.0
    %2474 = vmatprep.subr.mxu0 0.0
    %2475 = vmatpush2.msra.mxu0 0.0
    %2476 = vmatprep.subr.mxu0 0.0
    %2477 = vmatpush2.msra.mxu0 0.0
    %2478 = vmatprep.subr.mxu0 0.0
    %2479 = vmatpush2.msra.mxu0 0.0
    %2480 = vmatprep.subr.mxu0 0.0
    %2481 = vmatpush2.msra.mxu0 0.0
    %2482 = vmatprep.subr.mxu0 0.0
    %2483 = vmatpush2.msra.mxu0 0.0
    %2484 = vmatprep.subr.mxu0 0.0
    %2485 = vmatpush2.msra.mxu0 0.0
    %2486 = vmatprep.subr.mxu0 0.0
    %2487 = vmatpush2.msra.mxu0 0.0
    %2488 = vmatprep.subr.mxu0 0.0
    %2489 = vmatpush2.msra.mxu0 0.0
    %2490 = vmatprep.subr.mxu0 0.0
    %2491 = vmatpush2.msra.mxu0 0.0
    %2492 = vmatprep.subr.mxu0 0.0
    %2493 = vmatpush2.msra.mxu0 0.0
    %2494 = vmatprep.subr.mxu0 0.0
    %2495 = vmatpush2.msra.mxu0 0.0
    %2496 = vmatprep.subr.mxu0 0.0
    %2497 = vmatpush2.msra.mxu0 0.0
    %2498 = vmatprep.mubr.f32.mxu0 0.0
    %2499 = vmatmul.mubr.f32.gmra.mxu0 %v2433
    %v2500 = vpop.f32.mrf.mxu0
    %v2501 = vadd.f32 %v2004, %v2500
    %v2502 = vpop.f32.mrf.mxu0
    %2503 = vdwg.mxu0
    %v2504 = vtanh.pop %v2501
    %2505 = vmatprep.subr.mxu0 0.0
    %2506 = vmatpush1.msra.mxu0 %v226
    %2507 = vmatprep.subr.mxu0 0.0
    %2508 = vmatpush1.msra.mxu0 %v225
    %2509 = vmatprep.subr.mxu0 0.0
    %2510 = vmatpush1.msra.mxu0 %v224
    %2511 = vmatprep.subr.mxu0 0.0
    %2512 = vmatpush1.msra.mxu0 %v223
    %2513 = vmatprep.subr.mxu0 0.0
    %2514 = vmatpush1.msra.mxu0 %v222
    %2515 = vmatprep.subr.mxu0 0.0
    %2516 = vmatpush1.msra.mxu0 %v221
    %2517 = vmatprep.subr.mxu0 0.0
    %2518 = vmatpush1.msra.mxu0 %v220
    %2519 = vmatprep.subr.mxu0 0.0
    %2520 = vmatpush1.msra.mxu0 %v219
    %2521 = vmatprep.subr.mxu0 0.0
    %2522 = vmatpush1.msra.mxu0 %v218
    %2523 = vmatprep.subr.mxu0 0.0
    %2524 = vmatpush1.msra.mxu0 %v217
    %2525 = vmatprep.subr.mxu0 0.0
    %2526 = vmatpush1.msra.mxu0 %v216
    %2527 = vmatprep.subr.mxu0 0.0
    %2528 = vmatpush1.msra.mxu0 %v215
    %2529 = vmatprep.subr.mxu0 0.0
    %2530 = vmatpush1.msra.mxu0 %v214
    %2531 = vmatprep.subr.mxu0 0.0
    %2532 = vmatpush1.msra.mxu0 %v213
    %2533 = vmatprep.subr.mxu0 0.0
    %2534 = vmatpush1.msra.mxu0 %v212
    %2535 = vmatprep.subr.mxu0 0.0
    %2536 = vmatpush1.msra.mxu0 %v211
    %2537 = vmatprep.subr.mxu0 0.0
    %2538 = vmatpush2.msra.mxu0 0.0
    %2539 = vmatprep.subr.mxu0 0.0
    %2540 = vmatpush2.msra.mxu0 0.0
    %2541 = vmatprep.subr.mxu0 0.0
    %2542 = vmatpush2.msra.mxu0 0.0
    %2543 = vmatprep.subr.mxu0 0.0
    %2544 = vmatpush2.msra.mxu0 0.0
    %2545 = vmatprep.subr.mxu0 0.0
    %2546 = vmatpush2.msra.mxu0 0.0
    %2547 = vmatprep.subr.mxu0 0.0
    %2548 = vmatpush2.msra.mxu0 0.0
    %2549 = vmatprep.subr.mxu0 0.0
    %2550 = vmatpush2.msra.mxu0 0.0
    %2551 = vmatprep.subr.mxu0 0.0
    %2552 = vmatpush2.msra.mxu0 0.0
    %2553 = vmatprep.subr.mxu0 0.0
    %2554 = vmatpush2.msra.mxu0 0.0
    %2555 = vmatprep.subr.mxu0 0.0
    %2556 = vmatpush2.msra.mxu0 0.0
    %2557 = vmatprep.subr.mxu0 0.0
    %2558 = vmatpush2.msra.mxu0 0.0
    %2559 = vmatprep.subr.mxu0 0.0
    %2560 = vmatpush2.msra.mxu0 0.0
    %2561 = vmatprep.subr.mxu0 0.0
    %2562 = vmatpush2.msra.mxu0 0.0
    %2563 = vmatprep.subr.mxu0 0.0
    %2564 = vmatpush2.msra.mxu0 0.0
    %2565 = vmatprep.subr.mxu0 0.0
    %2566 = vmatpush2.msra.mxu0 0.0
    %2567 = vmatprep.subr.mxu0 0.0
    %2568 = vmatpush2.msra.mxu0 0.0
    %2569 = vmatprep.mubr.f32.mxu0 0.0
    %2570 = vmatmul.mubr.f32.gmra.mxu0 %v2504
    %v2571 = vpop.f32.mrf.mxu0
    %v2572 = vadd.f32 0.0, %v2571
    %v2573 = vpop.f32.mrf.mxu0
    %2574 = vdwg.mxu0
    %v2575 = vmul.f32 %v2286, 2.0
    %v2576 = vadd.f32 %v2143, %v2575
    %v2577 = vmul.f32 %v2429, 2.0
    %v2578 = vadd.f32 %v2576, %v2577
    %v2579 = vadd.f32 %v2578, %v2572
    %v2580 = vmul.f32 %v812, %v2579
    %v2581 = vadd.f32 %v1993, %v2580
    %v2582 = vtanh.pop %v2581
    %s2583 = scalar_lea.vmem [#allocation13], 32
    %2584 = vst [vmem:[%s2583] sm:$0xff] %v2582
    %s2585 = sld [smem:[#allocation3 + $0x4]]
    %v2586 = vstv %s2585
    %v2587 = vadd.f32 %v192, %v2586
    %s2588 = sadd.f32 %s2585, %s99
    %v2589 = vstv %s2588
    %v2590 = vadd.f32 %v192, %v2589
    %s2591 = sadd.f32 %s2585, %s98
    %v2592 = vstv %s2591
    %v2593 = vadd.f32 %v192, %v2592
    %2594 = vmatprep.subr.mxu0 0.0
    %2595 = vmatpush1.msra.mxu0 %v210
    %2596 = vmatprep.subr.mxu0 0.0
    %2597 = vmatpush1.msra.mxu0 %v209
    %2598 = vmatprep.subr.mxu0 0.0
    %2599 = vmatpush1.msra.mxu0 %v208
    %2600 = vmatprep.subr.mxu0 0.0
    %2601 = vmatpush1.msra.mxu0 %v207
    %2602 = vmatprep.subr.mxu0 0.0
    %2603 = vmatpush1.msra.mxu0 %v206
    %2604 = vmatprep.subr.mxu0 0.0
    %2605 = vmatpush1.msra.mxu0 %v205
    %2606 = vmatprep.subr.mxu0 0.0
    %2607 = vmatpush1.msra.mxu0 %v204
    %2608 = vmatprep.subr.mxu0 0.0
    %2609 = vmatpush1.msra.mxu0 %v203
    %2610 = vmatprep.subr.mxu0 0.0
    %2611 = vmatpush1.msra.mxu0 %v202
    %2612 = vmatprep.subr.mxu0 0.0
    %2613 = vmatpush1.msra.mxu0 %v201
    %2614 = vmatprep.subr.mxu0 0.0
    %2615 = vmatpush1.msra.mxu0 %v200
    %2616 = vmatprep.subr.mxu0 0.0
    %2617 = vmatpush1.msra.mxu0 %v199
    %2618 = vmatprep.subr.mxu0 0.0
    %2619 = vmatpush1.msra.mxu0 %v198
    %2620 = vmatprep.subr.mxu0 0.0
    %2621 = vmatpush1.msra.mxu0 %v197
    %2622 = vmatprep.subr.mxu0 0.0
    %2623 = vmatpush1.msra.mxu0 %v196
    %2624 = vmatprep.subr.mxu0 0.0
    %2625 = vmatpush1.msra.mxu0 %v195
    %2626 = vmatprep.subr.mxu0 0.0
    %2627 = vmatpush2.msra.mxu0 0.0
    %2628 = vmatprep.subr.mxu0 0.0
    %2629 = vmatpush2.msra.mxu0 0.0
    %2630 = vmatprep.subr.mxu0 0.0
    %2631 = vmatpush2.msra.mxu0 0.0
    %2632 = vmatprep.subr.mxu0 0.0
    %2633 = vmatpush2.msra.mxu0 0.0
    %2634 = vmatprep.subr.mxu0 0.0
    %2635 = vmatpush2.msra.mxu0 0.0
    %2636 = vmatprep.subr.mxu0 0.0
    %2637 = vmatpush2.msra.mxu0 0.0
    %2638 = vmatprep.subr.mxu0 0.0
    %2639 = vmatpush2.msra.mxu0 0.0
    %2640 = vmatprep.subr.mxu0 0.0
    %2641 = vmatpush2.msra.mxu0 0.0
    %2642 = vmatprep.subr.mxu0 0.0
    %2643 = vmatpush2.msra.mxu0 0.0
    %2644 = vmatprep.subr.mxu0 0.0
    %2645 = vmatpush2.msra.mxu0 0.0
    %2646 = vmatprep.subr.mxu0 0.0
    %2647 = vmatpush2.msra.mxu0 0.0
    %2648 = vmatprep.subr.mxu0 0.0
    %2649 = vmatpush2.msra.mxu0 0.0
    %2650 = vmatprep.subr.mxu0 0.0
    %2651 = vmatpush2.msra.mxu0 0.0
    %2652 = vmatprep.subr.mxu0 0.0
    %2653 = vmatpush2.msra.mxu0 0.0
    %2654 = vmatprep.subr.mxu0 0.0
    %2655 = vmatpush2.msra.mxu0 0.0
    %2656 = vmatprep.subr.mxu0 0.0
    %2657 = vmatpush2.msra.mxu0 0.0
    %2658 = vmatprep.mubr.f32.mxu0 0.0
    %2659 = vmatmul.mubr.f32.gmra.mxu0 %v2582
    %v2660 = vpop.f32.mrf.mxu0
    %v2661 = vadd.f32 %v2587, %v2660
    %v2662 = vpop.f32.mrf.mxu0
    %2663 = vdwg.mxu0
    %v2664 = vtanh.pop %v2661
    %2665 = vmatprep.subr.mxu0 0.0
    %2666 = vmatpush1.msra.mxu0 %v226
    %2667 = vmatprep.subr.mxu0 0.0
    %2668 = vmatpush1.msra.mxu0 %v225
    %2669 = vmatprep.subr.mxu0 0.0
    %2670 = vmatpush1.msra.mxu0 %v224
    %2671 = vmatprep.subr.mxu0 0.0
    %2672 = vmatpush1.msra.mxu0 %v223
    %2673 = vmatprep.subr.mxu0 0.0
    %2674 = vmatpush1.msra.mxu0 %v222
    %2675 = vmatprep.subr.mxu0 0.0
    %2676 = vmatpush1.msra.mxu0 %v221
    %2677 = vmatprep.subr.mxu0 0.0
    %2678 = vmatpush1.msra.mxu0 %v220
    %2679 = vmatprep.subr.mxu0 0.0
    %2680 = vmatpush1.msra.mxu0 %v219
    %2681 = vmatprep.subr.mxu0 0.0
    %2682 = vmatpush1.msra.mxu0 %v218
    %2683 = vmatprep.subr.mxu0 0.0
    %2684 = vmatpush1.msra.mxu0 %v217
    %2685 = vmatprep.subr.mxu0 0.0
    %2686 = vmatpush1.msra.mxu0 %v216
    %2687 = vmatprep.subr.mxu0 0.0
    %2688 = vmatpush1.msra.mxu0 %v215
    %2689 = vmatprep.subr.mxu0 0.0
    %2690 = vmatpush1.msra.mxu0 %v214
    %2691 = vmatprep.subr.mxu0 0.0
    %2692 = vmatpush1.msra.mxu0 %v213
    %2693 = vmatprep.subr.mxu0 0.0
    %2694 = vmatpush1.msra.mxu0 %v212
    %2695 = vmatprep.subr.mxu0 0.0
    %2696 = vmatpush1.msra.mxu0 %v211
    %2697 = vmatprep.subr.mxu0 0.0
    %2698 = vmatpush2.msra.mxu0 0.0
    %2699 = vmatprep.subr.mxu0 0.0
    %2700 = vmatpush2.msra.mxu0 0.0
    %2701 = vmatprep.subr.mxu0 0.0
    %2702 = vmatpush2.msra.mxu0 0.0
    %2703 = vmatprep.subr.mxu0 0.0
    %2704 = vmatpush2.msra.mxu0 0.0
    %2705 = vmatprep.subr.mxu0 0.0
    %2706 = vmatpush2.msra.mxu0 0.0
    %2707 = vmatprep.subr.mxu0 0.0
    %2708 = vmatpush2.msra.mxu0 0.0
    %2709 = vmatprep.subr.mxu0 0.0
    %2710 = vmatpush2.msra.mxu0 0.0
    %2711 = vmatprep.subr.mxu0 0.0
    %2712 = vmatpush2.msra.mxu0 0.0
    %2713 = vmatprep.subr.mxu0 0.0
    %2714 = vmatpush2.msra.mxu0 0.0
    %2715 = vmatprep.subr.mxu0 0.0
    %2716 = vmatpush2.msra.mxu0 0.0
    %2717 = vmatprep.subr.mxu0 0.0
    %2718 = vmatpush2.msra.mxu0 0.0
    %2719 = vmatprep.subr.mxu0 0.0
    %2720 = vmatpush2.msra.mxu0 0.0
    %2721 = vmatprep.subr.mxu0 0.0
    %2722 = vmatpush2.msra.mxu0 0.0
    %2723 = vmatprep.subr.mxu0 0.0
    %2724 = vmatpush2.msra.mxu0 0.0
    %2725 = vmatprep.subr.mxu0 0.0
    %2726 = vmatpush2.msra.mxu0 0.0
    %2727 = vmatprep.subr.mxu0 0.0
    %2728 = vmatpush2.msra.mxu0 0.0
    %2729 = vmatprep.mubr.f32.mxu0 0.0
    %2730 = vmatmul.mubr.f32.gmra.mxu0 %v2664
    %v2731 = vpop.f32.mrf.mxu0
    %v2732 = vadd.f32 0.0, %v2731
    %v2733 = vpop.f32.mrf.mxu0
    %2734 = vdwg.mxu0
    %v2735 = vmul.f32 %v376, %v2732
    %v2736 = vadd.f32 %v2582, %v2735
    %2737 = vmatprep.subr.mxu0 0.0
    %2738 = vmatpush1.msra.mxu0 %v210
    %2739 = vmatprep.subr.mxu0 0.0
    %2740 = vmatpush1.msra.mxu0 %v209
    %2741 = vmatprep.subr.mxu0 0.0
    %2742 = vmatpush1.msra.mxu0 %v208
    %2743 = vmatprep.subr.mxu0 0.0
    %2744 = vmatpush1.msra.mxu0 %v207
    %2745 = vmatprep.subr.mxu0 0.0
    %2746 = vmatpush1.msra.mxu0 %v206
    %2747 = vmatprep.subr.mxu0 0.0
    %2748 = vmatpush1.msra.mxu0 %v205
    %2749 = vmatprep.subr.mxu0 0.0
    %2750 = vmatpush1.msra.mxu0 %v204
    %2751 = vmatprep.subr.mxu0 0.0
    %2752 = vmatpush1.msra.mxu0 %v203
    %2753 = vmatprep.subr.mxu0 0.0
    %2754 = vmatpush1.msra.mxu0 %v202
    %2755 = vmatprep.subr.mxu0 0.0
    %2756 = vmatpush1.msra.mxu0 %v201
    %2757 = vmatprep.subr.mxu0 0.0
    %2758 = vmatpush1.msra.mxu0 %v200
    %2759 = vmatprep.subr.mxu0 0.0
    %2760 = vmatpush1.msra.mxu0 %v199
    %2761 = vmatprep.subr.mxu0 0.0
    %2762 = vmatpush1.msra.mxu0 %v198
    %2763 = vmatprep.subr.mxu0 0.0
    %2764 = vmatpush1.msra.mxu0 %v197
    %2765 = vmatprep.subr.mxu0 0.0
    %2766 = vmatpush1.msra.mxu0 %v196
    %2767 = vmatprep.subr.mxu0 0.0
    %2768 = vmatpush1.msra.mxu0 %v195
    %2769 = vmatprep.subr.mxu0 0.0
    %2770 = vmatpush2.msra.mxu0 0.0
    %2771 = vmatprep.subr.mxu0 0.0
    %2772 = vmatpush2.msra.mxu0 0.0
    %2773 = vmatprep.subr.mxu0 0.0
    %2774 = vmatpush2.msra.mxu0 0.0
    %2775 = vmatprep.subr.mxu0 0.0
    %2776 = vmatpush2.msra.mxu0 0.0
    %2777 = vmatprep.subr.mxu0 0.0
    %2778 = vmatpush2.msra.mxu0 0.0
    %2779 = vmatprep.subr.mxu0 0.0
    %2780 = vmatpush2.msra.mxu0 0.0
    %2781 = vmatprep.subr.mxu0 0.0
    %2782 = vmatpush2.msra.mxu0 0.0
    %2783 = vmatprep.subr.mxu0 0.0
    %2784 = vmatpush2.msra.mxu0 0.0
    %2785 = vmatprep.subr.mxu0 0.0
    %2786 = vmatpush2.msra.mxu0 0.0
    %2787 = vmatprep.subr.mxu0 0.0
    %2788 = vmatpush2.msra.mxu0 0.0
    %2789 = vmatprep.subr.mxu0 0.0
    %2790 = vmatpush2.msra.mxu0 0.0
    %2791 = vmatprep.subr.mxu0 0.0
    %2792 = vmatpush2.msra.mxu0 0.0
    %2793 = vmatprep.subr.mxu0 0.0
    %2794 = vmatpush2.msra.mxu0 0.0
    %2795 = vmatprep.subr.mxu0 0.0
    %2796 = vmatpush2.msra.mxu0 0.0
    %2797 = vmatprep.subr.mxu0 0.0
    %2798 = vmatpush2.msra.mxu0 0.0
    %2799 = vmatprep.subr.mxu0 0.0
    %2800 = vmatpush2.msra.mxu0 0.0
    %2801 = vmatprep.mubr.f32.mxu0 0.0
    %2802 = vmatmul.mubr.f32.gmra.mxu0 %v2736
    %v2803 = vpop.f32.mrf.mxu0
    %v2804 = vadd.f32 %v2590, %v2803
    %v2805 = vpop.f32.mrf.mxu0
    %2806 = vdwg.mxu0
    %v2807 = vtanh.pop %v2804
    %2808 = vmatprep.subr.mxu0 0.0
    %2809 = vmatpush1.msra.mxu0 %v226
    %2810 = vmatprep.subr.mxu0 0.0
    %2811 = vmatpush1.msra.mxu0 %v225
    %2812 = vmatprep.subr.mxu0 0.0
    %2813 = vmatpush1.msra.mxu0 %v224
    %2814 = vmatprep.subr.mxu0 0.0
    %2815 = vmatpush1.msra.mxu0 %v223
    %2816 = vmatprep.subr.mxu0 0.0
    %2817 = vmatpush1.msra.mxu0 %v222
    %2818 = vmatprep.subr.mxu0 0.0
    %2819 = vmatpush1.msra.mxu0 %v221
    %2820 = vmatprep.subr.mxu0 0.0
    %2821 = vmatpush1.msra.mxu0 %v220
    %2822 = vmatprep.subr.mxu0 0.0
    %2823 = vmatpush1.msra.mxu0 %v219
    %2824 = vmatprep.subr.mxu0 0.0
    %2825 = vmatpush1.msra.mxu0 %v218
    %2826 = vmatprep.subr.mxu0 0.0
    %2827 = vmatpush1.msra.mxu0 %v217
    %2828 = vmatprep.subr.mxu0 0.0
    %2829 = vmatpush1.msra.mxu0 %v216
    %2830 = vmatprep.subr.mxu0 0.0
    %2831 = vmatpush1.msra.mxu0 %v215
    %2832 = vmatprep.subr.mxu0 0.0
    %2833 = vmatpush1.msra.mxu0 %v214
    %2834 = vmatprep.subr.mxu0 0.0
    %2835 = vmatpush1.msra.mxu0 %v213
    %2836 = vmatprep.subr.mxu0 0.0
    %2837 = vmatpush1.msra.mxu0 %v212
    %2838 = vmatprep.subr.mxu0 0.0
    %2839 = vmatpush1.msra.mxu0 %v211
    %2840 = vmatprep.subr.mxu0 0.0
    %2841 = vmatpush2.msra.mxu0 0.0
    %2842 = vmatprep.subr.mxu0 0.0
    %2843 = vmatpush2.msra.mxu0 0.0
    %2844 = vmatprep.subr.mxu0 0.0
    %2845 = vmatpush2.msra.mxu0 0.0
    %2846 = vmatprep.subr.mxu0 0.0
    %2847 = vmatpush2.msra.mxu0 0.0
    %2848 = vmatprep.subr.mxu0 0.0
    %2849 = vmatpush2.msra.mxu0 0.0
    %2850 = vmatprep.subr.mxu0 0.0
    %2851 = vmatpush2.msra.mxu0 0.0
    %2852 = vmatprep.subr.mxu0 0.0
    %2853 = vmatpush2.msra.mxu0 0.0
    %2854 = vmatprep.subr.mxu0 0.0
    %2855 = vmatpush2.msra.mxu0 0.0
    %2856 = vmatprep.subr.mxu0 0.0
    %2857 = vmatpush2.msra.mxu0 0.0
    %2858 = vmatprep.subr.mxu0 0.0
    %2859 = vmatpush2.msra.mxu0 0.0
    %2860 = vmatprep.subr.mxu0 0.0
    %2861 = vmatpush2.msra.mxu0 0.0
    %2862 = vmatprep.subr.mxu0 0.0
    %2863 = vmatpush2.msra.mxu0 0.0
    %2864 = vmatprep.subr.mxu0 0.0
    %2865 = vmatpush2.msra.mxu0 0.0
    %2866 = vmatprep.subr.mxu0 0.0
    %2867 = vmatpush2.msra.mxu0 0.0
    %2868 = vmatprep.subr.mxu0 0.0
    %2869 = vmatpush2.msra.mxu0 0.0
    %2870 = vmatprep.subr.mxu0 0.0
    %2871 = vmatpush2.msra.mxu0 0.0
    %2872 = vmatprep.mubr.f32.mxu0 0.0
    %2873 = vmatmul.mubr.f32.gmra.mxu0 %v2807
    %v2874 = vpop.f32.mrf.mxu0
    %v2875 = vadd.f32 0.0, %v2874
    %v2876 = vpop.f32.mrf.mxu0
    %2877 = vdwg.mxu0
    %v2878 = vmul.f32 %v376, %v2875
    %v2879 = vadd.f32 %v2582, %v2878
    %2880 = vmatprep.subr.mxu0 0.0
    %2881 = vmatpush1.msra.mxu0 %v210
    %2882 = vmatprep.subr.mxu0 0.0
    %2883 = vmatpush1.msra.mxu0 %v209
    %2884 = vmatprep.subr.mxu0 0.0
    %2885 = vmatpush1.msra.mxu0 %v208
    %2886 = vmatprep.subr.mxu0 0.0
    %2887 = vmatpush1.msra.mxu0 %v207
    %2888 = vmatprep.subr.mxu0 0.0
    %2889 = vmatpush1.msra.mxu0 %v206
    %2890 = vmatprep.subr.mxu0 0.0
    %2891 = vmatpush1.msra.mxu0 %v205
    %2892 = vmatprep.subr.mxu0 0.0
    %2893 = vmatpush1.msra.mxu0 %v204
    %2894 = vmatprep.subr.mxu0 0.0
    %2895 = vmatpush1.msra.mxu0 %v203
    %2896 = vmatprep.subr.mxu0 0.0
    %2897 = vmatpush1.msra.mxu0 %v202
    %2898 = vmatprep.subr.mxu0 0.0
    %2899 = vmatpush1.msra.mxu0 %v201
    %2900 = vmatprep.subr.mxu0 0.0
    %2901 = vmatpush1.msra.mxu0 %v200
    %2902 = vmatprep.subr.mxu0 0.0
    %2903 = vmatpush1.msra.mxu0 %v199
    %2904 = vmatprep.subr.mxu0 0.0
    %2905 = vmatpush1.msra.mxu0 %v198
    %2906 = vmatprep.subr.mxu0 0.0
    %2907 = vmatpush1.msra.mxu0 %v197
    %2908 = vmatprep.subr.mxu0 0.0
    %2909 = vmatpush1.msra.mxu0 %v196
    %2910 = vmatprep.subr.mxu0 0.0
    %2911 = vmatpush1.msra.mxu0 %v195
    %2912 = vmatprep.subr.mxu0 0.0
    %2913 = vmatpush2.msra.mxu0 0.0
    %2914 = vmatprep.subr.mxu0 0.0
    %2915 = vmatpush2.msra.mxu0 0.0
    %2916 = vmatprep.subr.mxu0 0.0
    %2917 = vmatpush2.msra.mxu0 0.0
    %2918 = vmatprep.subr.mxu0 0.0
    %2919 = vmatpush2.msra.mxu0 0.0
    %2920 = vmatprep.subr.mxu0 0.0
    %2921 = vmatpush2.msra.mxu0 0.0
    %2922 = vmatprep.subr.mxu0 0.0
    %2923 = vmatpush2.msra.mxu0 0.0
    %2924 = vmatprep.subr.mxu0 0.0
    %2925 = vmatpush2.msra.mxu0 0.0
    %2926 = vmatprep.subr.mxu0 0.0
    %2927 = vmatpush2.msra.mxu0 0.0
    %2928 = vmatprep.subr.mxu0 0.0
    %2929 = vmatpush2.msra.mxu0 0.0
    %2930 = vmatprep.subr.mxu0 0.0
    %2931 = vmatpush2.msra.mxu0 0.0
    %2932 = vmatprep.subr.mxu0 0.0
    %2933 = vmatpush2.msra.mxu0 0.0
    %2934 = vmatprep.subr.mxu0 0.0
    %2935 = vmatpush2.msra.mxu0 0.0
    %2936 = vmatprep.subr.mxu0 0.0
    %2937 = vmatpush2.msra.mxu0 0.0
    %2938 = vmatprep.subr.mxu0 0.0
    %2939 = vmatpush2.msra.mxu0 0.0
    %2940 = vmatprep.subr.mxu0 0.0
    %2941 = vmatpush2.msra.mxu0 0.0
    %2942 = vmatprep.subr.mxu0 0.0
    %2943 = vmatpush2.msra.mxu0 0.0
    %2944 = vmatprep.mubr.f32.mxu0 0.0
    %2945 = vmatmul.mubr.f32.gmra.mxu0 %v2879
    %v2946 = vpop.f32.mrf.mxu0
    %v2947 = vadd.f32 %v2590, %v2946
    %v2948 = vpop.f32.mrf.mxu0
    %2949 = vdwg.mxu0
    %v2950 = vtanh.pop %v2947
    %2951 = vmatprep.subr.mxu0 0.0
    %2952 = vmatpush1.msra.mxu0 %v226
    %2953 = vmatprep.subr.mxu0 0.0
    %2954 = vmatpush1.msra.mxu0 %v225
    %2955 = vmatprep.subr.mxu0 0.0
    %2956 = vmatpush1.msra.mxu0 %v224
    %2957 = vmatprep.subr.mxu0 0.0
    %2958 = vmatpush1.msra.mxu0 %v223
    %2959 = vmatprep.subr.mxu0 0.0
    %2960 = vmatpush1.msra.mxu0 %v222
    %2961 = vmatprep.subr.mxu0 0.0
    %2962 = vmatpush1.msra.mxu0 %v221
    %2963 = vmatprep.subr.mxu0 0.0
    %2964 = vmatpush1.msra.mxu0 %v220
    %2965 = vmatprep.subr.mxu0 0.0
    %2966 = vmatpush1.msra.mxu0 %v219
    %2967 = vmatprep.subr.mxu0 0.0
    %2968 = vmatpush1.msra.mxu0 %v218
    %2969 = vmatprep.subr.mxu0 0.0
    %2970 = vmatpush1.msra.mxu0 %v217
    %2971 = vmatprep.subr.mxu0 0.0
    %2972 = vmatpush1.msra.mxu0 %v216
    %2973 = vmatprep.subr.mxu0 0.0
    %2974 = vmatpush1.msra.mxu0 %v215
    %2975 = vmatprep.subr.mxu0 0.0
    %2976 = vmatpush1.msra.mxu0 %v214
    %2977 = vmatprep.subr.mxu0 0.0
    %2978 = vmatpush1.msra.mxu0 %v213
    %2979 = vmatprep.subr.mxu0 0.0
    %2980 = vmatpush1.msra.mxu0 %v212
    %2981 = vmatprep.subr.mxu0 0.0
    %2982 = vmatpush1.msra.mxu0 %v211
    %2983 = vmatprep.subr.mxu0 0.0
    %2984 = vmatpush2.msra.mxu0 0.0
    %2985 = vmatprep.subr.mxu0 0.0
    %2986 = vmatpush2.msra.mxu0 0.0
    %2987 = vmatprep.subr.mxu0 0.0
    %2988 = vmatpush2.msra.mxu0 0.0
    %2989 = vmatprep.subr.mxu0 0.0
    %2990 = vmatpush2.msra.mxu0 0.0
    %2991 = vmatprep.subr.mxu0 0.0
    %2992 = vmatpush2.msra.mxu0 0.0
    %2993 = vmatprep.subr.mxu0 0.0
    %2994 = vmatpush2.msra.mxu0 0.0
    %2995 = vmatprep.subr.mxu0 0.0
    %2996 = vmatpush2.msra.mxu0 0.0
    %2997 = vmatprep.subr.mxu0 0.0
    %2998 = vmatpush2.msra.mxu0 0.0
    %2999 = vmatprep.subr.mxu0 0.0
    %3000 = vmatpush2.msra.mxu0 0.0
    %3001 = vmatprep.subr.mxu0 0.0
    %3002 = vmatpush2.msra.mxu0 0.0
    %3003 = vmatprep.subr.mxu0 0.0
    %3004 = vmatpush2.msra.mxu0 0.0
    %3005 = vmatprep.subr.mxu0 0.0
    %3006 = vmatpush2.msra.mxu0 0.0
    %3007 = vmatprep.subr.mxu0 0.0
    %3008 = vmatpush2.msra.mxu0 0.0
    %3009 = vmatprep.subr.mxu0 0.0
    %3010 = vmatpush2.msra.mxu0 0.0
    %3011 = vmatprep.subr.mxu0 0.0
    %3012 = vmatpush2.msra.mxu0 0.0
    %3013 = vmatprep.subr.mxu0 0.0
    %3014 = vmatpush2.msra.mxu0 0.0
    %3015 = vmatprep.mubr.f32.mxu0 0.0
    %3016 = vmatmul.mubr.f32.gmra.mxu0 %v2950
    %v3017 = vpop.f32.mrf.mxu0
    %v3018 = vadd.f32 0.0, %v3017
    %v3019 = vpop.f32.mrf.mxu0
    %3020 = vdwg.mxu0
    %v3021 = vmul.f32 %v663, %v3018
    %v3022 = vadd.f32 %v2582, %v3021
    %3023 = vmatprep.subr.mxu0 0.0
    %3024 = vmatpush1.msra.mxu0 %v210
    %3025 = vmatprep.subr.mxu0 0.0
    %3026 = vmatpush1.msra.mxu0 %v209
    %3027 = vmatprep.subr.mxu0 0.0
    %3028 = vmatpush1.msra.mxu0 %v208
    %3029 = vmatprep.subr.mxu0 0.0
    %3030 = vmatpush1.msra.mxu0 %v207
    %3031 = vmatprep.subr.mxu0 0.0
    %3032 = vmatpush1.msra.mxu0 %v206
    %3033 = vmatprep.subr.mxu0 0.0
    %3034 = vmatpush1.msra.mxu0 %v205
    %3035 = vmatprep.subr.mxu0 0.0
    %3036 = vmatpush1.msra.mxu0 %v204
    %3037 = vmatprep.subr.mxu0 0.0
    %3038 = vmatpush1.msra.mxu0 %v203
    %3039 = vmatprep.subr.mxu0 0.0
    %3040 = vmatpush1.msra.mxu0 %v202
    %3041 = vmatprep.subr.mxu0 0.0
    %3042 = vmatpush1.msra.mxu0 %v201
    %3043 = vmatprep.subr.mxu0 0.0
    %3044 = vmatpush1.msra.mxu0 %v200
    %3045 = vmatprep.subr.mxu0 0.0
    %3046 = vmatpush1.msra.mxu0 %v199
    %3047 = vmatprep.subr.mxu0 0.0
    %3048 = vmatpush1.msra.mxu0 %v198
    %3049 = vmatprep.subr.mxu0 0.0
    %3050 = vmatpush1.msra.mxu0 %v197
    %3051 = vmatprep.subr.mxu0 0.0
    %3052 = vmatpush1.msra.mxu0 %v196
    %3053 = vmatprep.subr.mxu0 0.0
    %3054 = vmatpush1.msra.mxu0 %v195
    %3055 = vmatprep.subr.mxu0 0.0
    %3056 = vmatpush2.msra.mxu0 0.0
    %3057 = vmatprep.subr.mxu0 0.0
    %3058 = vmatpush2.msra.mxu0 0.0
    %3059 = vmatprep.subr.mxu0 0.0
    %3060 = vmatpush2.msra.mxu0 0.0
    %3061 = vmatprep.subr.mxu0 0.0
    %3062 = vmatpush2.msra.mxu0 0.0
    %3063 = vmatprep.subr.mxu0 0.0
    %3064 = vmatpush2.msra.mxu0 0.0
    %3065 = vmatprep.subr.mxu0 0.0
    %3066 = vmatpush2.msra.mxu0 0.0
    %3067 = vmatprep.subr.mxu0 0.0
    %3068 = vmatpush2.msra.mxu0 0.0
    %3069 = vmatprep.subr.mxu0 0.0
    %3070 = vmatpush2.msra.mxu0 0.0
    %3071 = vmatprep.subr.mxu0 0.0
    %3072 = vmatpush2.msra.mxu0 0.0
    %3073 = vmatprep.subr.mxu0 0.0
    %3074 = vmatpush2.msra.mxu0 0.0
    %3075 = vmatprep.subr.mxu0 0.0
    %3076 = vmatpush2.msra.mxu0 0.0
    %3077 = vmatprep.subr.mxu0 0.0
    %3078 = vmatpush2.msra.mxu0 0.0
    %3079 = vmatprep.subr.mxu0 0.0
    %3080 = vmatpush2.msra.mxu0 0.0
    %3081 = vmatprep.subr.mxu0 0.0
    %3082 = vmatpush2.msra.mxu0 0.0
    %3083 = vmatprep.subr.mxu0 0.0
    %3084 = vmatpush2.msra.mxu0 0.0
    %3085 = vmatprep.subr.mxu0 0.0
    %3086 = vmatpush2.msra.mxu0 0.0
    %3087 = vmatprep.mubr.f32.mxu0 0.0
    %3088 = vmatmul.mubr.f32.gmra.mxu0 %v3022
    %v3089 = vpop.f32.mrf.mxu0
    %v3090 = vadd.f32 %v2593, %v3089
    %v3091 = vpop.f32.mrf.mxu0
    %3092 = vdwg.mxu0
    %v3093 = vtanh.pop %v3090
    %3094 = vmatprep.subr.mxu0 0.0
    %3095 = vmatpush1.msra.mxu0 %v226
    %3096 = vmatprep.subr.mxu0 0.0
    %3097 = vmatpush1.msra.mxu0 %v225
    %3098 = vmatprep.subr.mxu0 0.0
    %3099 = vmatpush1.msra.mxu0 %v224
    %3100 = vmatprep.subr.mxu0 0.0
    %3101 = vmatpush1.msra.mxu0 %v223
    %3102 = vmatprep.subr.mxu0 0.0
    %3103 = vmatpush1.msra.mxu0 %v222
    %3104 = vmatprep.subr.mxu0 0.0
    %3105 = vmatpush1.msra.mxu0 %v221
    %3106 = vmatprep.subr.mxu0 0.0
    %3107 = vmatpush1.msra.mxu0 %v220
    %3108 = vmatprep.subr.mxu0 0.0
    %3109 = vmatpush1.msra.mxu0 %v219
    %3110 = vmatprep.subr.mxu0 0.0
    %3111 = vmatpush1.msra.mxu0 %v218
    %3112 = vmatprep.subr.mxu0 0.0
    %3113 = vmatpush1.msra.mxu0 %v217
    %3114 = vmatprep.subr.mxu0 0.0
    %3115 = vmatpush1.msra.mxu0 %v216
    %3116 = vmatprep.subr.mxu0 0.0
    %3117 = vmatpush1.msra.mxu0 %v215
    %3118 = vmatprep.subr.mxu0 0.0
    %3119 = vmatpush1.msra.mxu0 %v214
    %3120 = vmatprep.subr.mxu0 0.0
    %3121 = vmatpush1.msra.mxu0 %v213
    %3122 = vmatprep.subr.mxu0 0.0
    %3123 = vmatpush1.msra.mxu0 %v212
    %3124 = vmatprep.subr.mxu0 0.0
    %3125 = vmatpush1.msra.mxu0 %v211
    %3126 = vmatprep.subr.mxu0 0.0
    %3127 = vmatpush2.msra.mxu0 0.0
    %3128 = vmatprep.subr.mxu0 0.0
    %3129 = vmatpush2.msra.mxu0 0.0
    %3130 = vmatprep.subr.mxu0 0.0
    %3131 = vmatpush2.msra.mxu0 0.0
    %3132 = vmatprep.subr.mxu0 0.0
    %3133 = vmatpush2.msra.mxu0 0.0
    %3134 = vmatprep.subr.mxu0 0.0
    %3135 = vmatpush2.msra.mxu0 0.0
    %3136 = vmatprep.subr.mxu0 0.0
    %3137 = vmatpush2.msra.mxu0 0.0
    %3138 = vmatprep.subr.mxu0 0.0
    %3139 = vmatpush2.msra.mxu0 0.0
    %3140 = vmatprep.subr.mxu0 0.0
    %3141 = vmatpush2.msra.mxu0 0.0
    %3142 = vmatprep.subr.mxu0 0.0
    %3143 = vmatpush2.msra.mxu0 0.0
    %3144 = vmatprep.subr.mxu0 0.0
    %3145 = vmatpush2.msra.mxu0 0.0
    %3146 = vmatprep.subr.mxu0 0.0
    %3147 = vmatpush2.msra.mxu0 0.0
    %3148 = vmatprep.subr.mxu0 0.0
    %3149 = vmatpush2.msra.mxu0 0.0
    %3150 = vmatprep.subr.mxu0 0.0
    %3151 = vmatpush2.msra.mxu0 0.0
    %3152 = vmatprep.subr.mxu0 0.0
    %3153 = vmatpush2.msra.mxu0 0.0
    %3154 = vmatprep.subr.mxu0 0.0
    %3155 = vmatpush2.msra.mxu0 0.0
    %3156 = vmatprep.subr.mxu0 0.0
    %3157 = vmatpush2.msra.mxu0 0.0
    %3158 = vmatprep.mubr.f32.mxu0 0.0
    %3159 = vmatmul.mubr.f32.gmra.mxu0 %v3093
    %v3160 = vpop.f32.mrf.mxu0
    %v3161 = vadd.f32 0.0, %v3160
    %v3162 = vpop.f32.mrf.mxu0
    %3163 = vdwg.mxu0
    %v3164 = vmul.f32 %v2875, 2.0
    %v3165 = vadd.f32 %v2732, %v3164
    %v3166 = vmul.f32 %v3018, 2.0
    %v3167 = vadd.f32 %v3165, %v3166
    %v3168 = vadd.f32 %v3167, %v3161
    %v3169 = vmul.f32 %v812, %v3168
    %v3170 = vadd.f32 %v2582, %v3169
    %v3171 = vtanh.pop %v3170
    %s3172 = scalar_lea.vmem [#allocation13], 40
    %3173 = vst [vmem:[%s3172] sm:$0xff] %v3171
    %s3174 = sld [smem:[#allocation3 + $0x5]]
    %v3175 = vstv %s3174
    %v3176 = vadd.f32 %v192, %v3175
    %s3177 = sadd.f32 %s3174, %s99
    %v3178 = vstv %s3177
    %v3179 = vadd.f32 %v192, %v3178
    %s3180 = sadd.f32 %s3174, %s98
    %v3181 = vstv %s3180
    %v3182 = vadd.f32 %v192, %v3181
    %3183 = vmatprep.subr.mxu0 0.0
    %3184 = vmatpush1.msra.mxu0 %v210
    %3185 = vmatprep.subr.mxu0 0.0
    %3186 = vmatpush1.msra.mxu0 %v209
    %3187 = vmatprep.subr.mxu0 0.0
    %3188 = vmatpush1.msra.mxu0 %v208
    %3189 = vmatprep.subr.mxu0 0.0
    %3190 = vmatpush1.msra.mxu0 %v207
    %3191 = vmatprep.subr.mxu0 0.0
    %3192 = vmatpush1.msra.mxu0 %v206
    %3193 = vmatprep.subr.mxu0 0.0
    %3194 = vmatpush1.msra.mxu0 %v205
    %3195 = vmatprep.subr.mxu0 0.0
    %3196 = vmatpush1.msra.mxu0 %v204
    %3197 = vmatprep.subr.mxu0 0.0
    %3198 = vmatpush1.msra.mxu0 %v203
    %3199 = vmatprep.subr.mxu0 0.0
    %3200 = vmatpush1.msra.mxu0 %v202
    %3201 = vmatprep.subr.mxu0 0.0
    %3202 = vmatpush1.msra.mxu0 %v201
    %3203 = vmatprep.subr.mxu0 0.0
    %3204 = vmatpush1.msra.mxu0 %v200
    %3205 = vmatprep.subr.mxu0 0.0
    %3206 = vmatpush1.msra.mxu0 %v199
    %3207 = vmatprep.subr.mxu0 0.0
    %3208 = vmatpush1.msra.mxu0 %v198
    %3209 = vmatprep.subr.mxu0 0.0
    %3210 = vmatpush1.msra.mxu0 %v197
    %3211 = vmatprep.subr.mxu0 0.0
    %3212 = vmatpush1.msra.mxu0 %v196
    %3213 = vmatprep.subr.mxu0 0.0
    %3214 = vmatpush1.msra.mxu0 %v195
    %3215 = vmatprep.subr.mxu0 0.0
    %3216 = vmatpush2.msra.mxu0 0.0
    %3217 = vmatprep.subr.mxu0 0.0
    %3218 = vmatpush2.msra.mxu0 0.0
    %3219 = vmatprep.subr.mxu0 0.0
    %3220 = vmatpush2.msra.mxu0 0.0
    %3221 = vmatprep.subr.mxu0 0.0
    %3222 = vmatpush2.msra.mxu0 0.0
    %3223 = vmatprep.subr.mxu0 0.0
    %3224 = vmatpush2.msra.mxu0 0.0
    %3225 = vmatprep.subr.mxu0 0.0
    %3226 = vmatpush2.msra.mxu0 0.0
    %3227 = vmatprep.subr.mxu0 0.0
    %3228 = vmatpush2.msra.mxu0 0.0
    %3229 = vmatprep.subr.mxu0 0.0
    %3230 = vmatpush2.msra.mxu0 0.0
    %3231 = vmatprep.subr.mxu0 0.0
    %3232 = vmatpush2.msra.mxu0 0.0
    %3233 = vmatprep.subr.mxu0 0.0
    %3234 = vmatpush2.msra.mxu0 0.0
    %3235 = vmatprep.subr.mxu0 0.0
    %3236 = vmatpush2.msra.mxu0 0.0
    %3237 = vmatprep.subr.mxu0 0.0
    %3238 = vmatpush2.msra.mxu0 0.0
    %3239 = vmatprep.subr.mxu0 0.0
    %3240 = vmatpush2.msra.mxu0 0.0
    %3241 = vmatprep.subr.mxu0 0.0
    %3242 = vmatpush2.msra.mxu0 0.0
    %3243 = vmatprep.subr.mxu0 0.0
    %3244 = vmatpush2.msra.mxu0 0.0
    %3245 = vmatprep.subr.mxu0 0.0
    %3246 = vmatpush2.msra.mxu0 0.0
    %3247 = vmatprep.mubr.f32.mxu0 0.0
    %3248 = vmatmul.mubr.f32.gmra.mxu0 %v3171
    %v3249 = vpop.f32.mrf.mxu0
    %v3250 = vadd.f32 %v3176, %v3249
    %v3251 = vpop.f32.mrf.mxu0
    %3252 = vdwg.mxu0
    %v3253 = vtanh.pop %v3250
    %3254 = vmatprep.subr.mxu0 0.0
    %3255 = vmatpush1.msra.mxu0 %v226
    %3256 = vmatprep.subr.mxu0 0.0
    %3257 = vmatpush1.msra.mxu0 %v225
    %3258 = vmatprep.subr.mxu0 0.0
    %3259 = vmatpush1.msra.mxu0 %v224
    %3260 = vmatprep.subr.mxu0 0.0
    %3261 = vmatpush1.msra.mxu0 %v223
    %3262 = vmatprep.subr.mxu0 0.0
    %3263 = vmatpush1.msra.mxu0 %v222
    %3264 = vmatprep.subr.mxu0 0.0
    %3265 = vmatpush1.msra.mxu0 %v221
    %3266 = vmatprep.subr.mxu0 0.0
    %3267 = vmatpush1.msra.mxu0 %v220
    %3268 = vmatprep.subr.mxu0 0.0
    %3269 = vmatpush1.msra.mxu0 %v219
    %3270 = vmatprep.subr.mxu0 0.0
    %3271 = vmatpush1.msra.mxu0 %v218
    %3272 = vmatprep.subr.mxu0 0.0
    %3273 = vmatpush1.msra.mxu0 %v217
    %3274 = vmatprep.subr.mxu0 0.0
    %3275 = vmatpush1.msra.mxu0 %v216
    %3276 = vmatprep.subr.mxu0 0.0
    %3277 = vmatpush1.msra.mxu0 %v215
    %3278 = vmatprep.subr.mxu0 0.0
    %3279 = vmatpush1.msra.mxu0 %v214
    %3280 = vmatprep.subr.mxu0 0.0
    %3281 = vmatpush1.msra.mxu0 %v213
    %3282 = vmatprep.subr.mxu0 0.0
    %3283 = vmatpush1.msra.mxu0 %v212
    %3284 = vmatprep.subr.mxu0 0.0
    %3285 = vmatpush1.msra.mxu0 %v211
    %3286 = vmatprep.subr.mxu0 0.0
    %3287 = vmatpush2.msra.mxu0 0.0
    %3288 = vmatprep.subr.mxu0 0.0
    %3289 = vmatpush2.msra.mxu0 0.0
    %3290 = vmatprep.subr.mxu0 0.0
    %3291 = vmatpush2.msra.mxu0 0.0
    %3292 = vmatprep.subr.mxu0 0.0
    %3293 = vmatpush2.msra.mxu0 0.0
    %3294 = vmatprep.subr.mxu0 0.0
    %3295 = vmatpush2.msra.mxu0 0.0
    %3296 = vmatprep.subr.mxu0 0.0
    %3297 = vmatpush2.msra.mxu0 0.0
    %3298 = vmatprep.subr.mxu0 0.0
    %3299 = vmatpush2.msra.mxu0 0.0
    %3300 = vmatprep.subr.mxu0 0.0
    %3301 = vmatpush2.msra.mxu0 0.0
    %3302 = vmatprep.subr.mxu0 0.0
    %3303 = vmatpush2.msra.mxu0 0.0
    %3304 = vmatprep.subr.mxu0 0.0
    %3305 = vmatpush2.msra.mxu0 0.0
    %3306 = vmatprep.subr.mxu0 0.0
    %3307 = vmatpush2.msra.mxu0 0.0
    %3308 = vmatprep.subr.mxu0 0.0
    %3309 = vmatpush2.msra.mxu0 0.0
    %3310 = vmatprep.subr.mxu0 0.0
    %3311 = vmatpush2.msra.mxu0 0.0
    %3312 = vmatprep.subr.mxu0 0.0
    %3313 = vmatpush2.msra.mxu0 0.0
    %3314 = vmatprep.subr.mxu0 0.0
    %3315 = vmatpush2.msra.mxu0 0.0
    %3316 = vmatprep.subr.mxu0 0.0
    %3317 = vmatpush2.msra.mxu0 0.0
    %3318 = vmatprep.mubr.f32.mxu0 0.0
    %3319 = vmatmul.mubr.f32.gmra.mxu0 %v3253
    %v3320 = vpop.f32.mrf.mxu0
    %v3321 = vadd.f32 0.0, %v3320
    %v3322 = vpop.f32.mrf.mxu0
    %3323 = vdwg.mxu0
    %v3324 = vmul.f32 %v376, %v3321
    %v3325 = vadd.f32 %v3171, %v3324
    %3326 = vmatprep.subr.mxu0 0.0
    %3327 = vmatpush1.msra.mxu0 %v210
    %3328 = vmatprep.subr.mxu0 0.0
    %3329 = vmatpush1.msra.mxu0 %v209
    %3330 = vmatprep.subr.mxu0 0.0
    %3331 = vmatpush1.msra.mxu0 %v208
    %3332 = vmatprep.subr.mxu0 0.0
    %3333 = vmatpush1.msra.mxu0 %v207
    %3334 = vmatprep.subr.mxu0 0.0
    %3335 = vmatpush1.msra.mxu0 %v206
    %3336 = vmatprep.subr.mxu0 0.0
    %3337 = vmatpush1.msra.mxu0 %v205
    %3338 = vmatprep.subr.mxu0 0.0
    %3339 = vmatpush1.msra.mxu0 %v204
    %3340 = vmatprep.subr.mxu0 0.0
    %3341 = vmatpush1.msra.mxu0 %v203
    %3342 = vmatprep.subr.mxu0 0.0
    %3343 = vmatpush1.msra.mxu0 %v202
    %3344 = vmatprep.subr.mxu0 0.0
    %3345 = vmatpush1.msra.mxu0 %v201
    %3346 = vmatprep.subr.mxu0 0.0
    %3347 = vmatpush1.msra.mxu0 %v200
    %3348 = vmatprep.subr.mxu0 0.0
    %3349 = vmatpush1.msra.mxu0 %v199
    %3350 = vmatprep.subr.mxu0 0.0
    %3351 = vmatpush1.msra.mxu0 %v198
    %3352 = vmatprep.subr.mxu0 0.0
    %3353 = vmatpush1.msra.mxu0 %v197
    %3354 = vmatprep.subr.mxu0 0.0
    %3355 = vmatpush1.msra.mxu0 %v196
    %3356 = vmatprep.subr.mxu0 0.0
    %3357 = vmatpush1.msra.mxu0 %v195
    %3358 = vmatprep.subr.mxu0 0.0
    %3359 = vmatpush2.msra.mxu0 0.0
    %3360 = vmatprep.subr.mxu0 0.0
    %3361 = vmatpush2.msra.mxu0 0.0
    %3362 = vmatprep.subr.mxu0 0.0
    %3363 = vmatpush2.msra.mxu0 0.0
    %3364 = vmatprep.subr.mxu0 0.0
    %3365 = vmatpush2.msra.mxu0 0.0
    %3366 = vmatprep.subr.mxu0 0.0
    %3367 = vmatpush2.msra.mxu0 0.0
    %3368 = vmatprep.subr.mxu0 0.0
    %3369 = vmatpush2.msra.mxu0 0.0
    %3370 = vmatprep.subr.mxu0 0.0
    %3371 = vmatpush2.msra.mxu0 0.0
    %3372 = vmatprep.subr.mxu0 0.0
    %3373 = vmatpush2.msra.mxu0 0.0
    %3374 = vmatprep.subr.mxu0 0.0
    %3375 = vmatpush2.msra.mxu0 0.0
    %3376 = vmatprep.subr.mxu0 0.0
    %3377 = vmatpush2.msra.mxu0 0.0
    %3378 = vmatprep.subr.mxu0 0.0
    %3379 = vmatpush2.msra.mxu0 0.0
    %3380 = vmatprep.subr.mxu0 0.0
    %3381 = vmatpush2.msra.mxu0 0.0
    %3382 = vmatprep.subr.mxu0 0.0
    %3383 = vmatpush2.msra.mxu0 0.0
    %3384 = vmatprep.subr.mxu0 0.0
    %3385 = vmatpush2.msra.mxu0 0.0
    %3386 = vmatprep.subr.mxu0 0.0
    %3387 = vmatpush2.msra.mxu0 0.0
    %3388 = vmatprep.subr.mxu0 0.0
    %3389 = vmatpush2.msra.mxu0 0.0
    %3390 = vmatprep.mubr.f32.mxu0 0.0
    %3391 = vmatmul.mubr.f32.gmra.mxu0 %v3325
    %v3392 = vpop.f32.mrf.mxu0
    %v3393 = vadd.f32 %v3179, %v3392
    %v3394 = vpop.f32.mrf.mxu0
    %3395 = vdwg.mxu0
    %v3396 = vtanh.pop %v3393
    %3397 = vmatprep.subr.mxu0 0.0
    %3398 = vmatpush1.msra.mxu0 %v226
    %3399 = vmatprep.subr.mxu0 0.0
    %3400 = vmatpush1.msra.mxu0 %v225
    %3401 = vmatprep.subr.mxu0 0.0
    %3402 = vmatpush1.msra.mxu0 %v224
    %3403 = vmatprep.subr.mxu0 0.0
    %3404 = vmatpush1.msra.mxu0 %v223
    %3405 = vmatprep.subr.mxu0 0.0
    %3406 = vmatpush1.msra.mxu0 %v222
    %3407 = vmatprep.subr.mxu0 0.0
    %3408 = vmatpush1.msra.mxu0 %v221
    %3409 = vmatprep.subr.mxu0 0.0
    %3410 = vmatpush1.msra.mxu0 %v220
    %3411 = vmatprep.subr.mxu0 0.0
    %3412 = vmatpush1.msra.mxu0 %v219
    %3413 = vmatprep.subr.mxu0 0.0
    %3414 = vmatpush1.msra.mxu0 %v218
    %3415 = vmatprep.subr.mxu0 0.0
    %3416 = vmatpush1.msra.mxu0 %v217
    %3417 = vmatprep.subr.mxu0 0.0
    %3418 = vmatpush1.msra.mxu0 %v216
    %3419 = vmatprep.subr.mxu0 0.0
    %3420 = vmatpush1.msra.mxu0 %v215
    %3421 = vmatprep.subr.mxu0 0.0
    %3422 = vmatpush1.msra.mxu0 %v214
    %3423 = vmatprep.subr.mxu0 0.0
    %3424 = vmatpush1.msra.mxu0 %v213
    %3425 = vmatprep.subr.mxu0 0.0
    %3426 = vmatpush1.msra.mxu0 %v212
    %3427 = vmatprep.subr.mxu0 0.0
    %3428 = vmatpush1.msra.mxu0 %v211
    %3429 = vmatprep.subr.mxu0 0.0
    %3430 = vmatpush2.msra.mxu0 0.0
    %3431 = vmatprep.subr.mxu0 0.0
    %3432 = vmatpush2.msra.mxu0 0.0
    %3433 = vmatprep.subr.mxu0 0.0
    %3434 = vmatpush2.msra.mxu0 0.0
    %3435 = vmatprep.subr.mxu0 0.0
    %3436 = vmatpush2.msra.mxu0 0.0
    %3437 = vmatprep.subr.mxu0 0.0
    %3438 = vmatpush2.msra.mxu0 0.0
    %3439 = vmatprep.subr.mxu0 0.0
    %3440 = vmatpush2.msra.mxu0 0.0
    %3441 = vmatprep.subr.mxu0 0.0
    %3442 = vmatpush2.msra.mxu0 0.0
    %3443 = vmatprep.subr.mxu0 0.0
    %3444 = vmatpush2.msra.mxu0 0.0
    %3445 = vmatprep.subr.mxu0 0.0
    %3446 = vmatpush2.msra.mxu0 0.0
    %3447 = vmatprep.subr.mxu0 0.0
    %3448 = vmatpush2.msra.mxu0 0.0
    %3449 = vmatprep.subr.mxu0 0.0
    %3450 = vmatpush2.msra.mxu0 0.0
    %3451 = vmatprep.subr.mxu0 0.0
    %3452 = vmatpush2.msra.mxu0 0.0
    %3453 = vmatprep.subr.mxu0 0.0
    %3454 = vmatpush2.msra.mxu0 0.0
    %3455 = vmatprep.subr.mxu0 0.0
    %3456 = vmatpush2.msra.mxu0 0.0
    %3457 = vmatprep.subr.mxu0 0.0
    %3458 = vmatpush2.msra.mxu0 0.0
    %3459 = vmatprep.subr.mxu0 0.0
    %3460 = vmatpush2.msra.mxu0 0.0
    %3461 = vmatprep.mubr.f32.mxu0 0.0
    %3462 = vmatmul.mubr.f32.gmra.mxu0 %v3396
    %v3463 = vpop.f32.mrf.mxu0
    %v3464 = vadd.f32 0.0, %v3463
    %v3465 = vpop.f32.mrf.mxu0
    %3466 = vdwg.mxu0
    %v3467 = vmul.f32 %v376, %v3464
    %v3468 = vadd.f32 %v3171, %v3467
    %3469 = vmatprep.subr.mxu0 0.0
    %3470 = vmatpush1.msra.mxu0 %v210
    %3471 = vmatprep.subr.mxu0 0.0
    %3472 = vmatpush1.msra.mxu0 %v209
    %3473 = vmatprep.subr.mxu0 0.0
    %3474 = vmatpush1.msra.mxu0 %v208
    %3475 = vmatprep.subr.mxu0 0.0
    %3476 = vmatpush1.msra.mxu0 %v207
    %3477 = vmatprep.subr.mxu0 0.0
    %3478 = vmatpush1.msra.mxu0 %v206
    %3479 = vmatprep.subr.mxu0 0.0
    %3480 = vmatpush1.msra.mxu0 %v205
    %3481 = vmatprep.subr.mxu0 0.0
    %3482 = vmatpush1.msra.mxu0 %v204
    %3483 = vmatprep.subr.mxu0 0.0
    %3484 = vmatpush1.msra.mxu0 %v203
    %3485 = vmatprep.subr.mxu0 0.0
    %3486 = vmatpush1.msra.mxu0 %v202
    %3487 = vmatprep.subr.mxu0 0.0
    %3488 = vmatpush1.msra.mxu0 %v201
    %3489 = vmatprep.subr.mxu0 0.0
    %3490 = vmatpush1.msra.mxu0 %v200
    %3491 = vmatprep.subr.mxu0 0.0
    %3492 = vmatpush1.msra.mxu0 %v199
    %3493 = vmatprep.subr.mxu0 0.0
    %3494 = vmatpush1.msra.mxu0 %v198
    %3495 = vmatprep.subr.mxu0 0.0
    %3496 = vmatpush1.msra.mxu0 %v197
    %3497 = vmatprep.subr.mxu0 0.0
    %3498 = vmatpush1.msra.mxu0 %v196
    %3499 = vmatprep.subr.mxu0 0.0
    %3500 = vmatpush1.msra.mxu0 %v195
    %3501 = vmatprep.subr.mxu0 0.0
    %3502 = vmatpush2.msra.mxu0 0.0
    %3503 = vmatprep.subr.mxu0 0.0
    %3504 = vmatpush2.msra.mxu0 0.0
    %3505 = vmatprep.subr.mxu0 0.0
    %3506 = vmatpush2.msra.mxu0 0.0
    %3507 = vmatprep.subr.mxu0 0.0
    %3508 = vmatpush2.msra.mxu0 0.0
    %3509 = vmatprep.subr.mxu0 0.0
    %3510 = vmatpush2.msra.mxu0 0.0
    %3511 = vmatprep.subr.mxu0 0.0
    %3512 = vmatpush2.msra.mxu0 0.0
    %3513 = vmatprep.subr.mxu0 0.0
    %3514 = vmatpush2.msra.mxu0 0.0
    %3515 = vmatprep.subr.mxu0 0.0
    %3516 = vmatpush2.msra.mxu0 0.0
    %3517 = vmatprep.subr.mxu0 0.0
    %3518 = vmatpush2.msra.mxu0 0.0
    %3519 = vmatprep.subr.mxu0 0.0
    %3520 = vmatpush2.msra.mxu0 0.0
    %3521 = vmatprep.subr.mxu0 0.0
    %3522 = vmatpush2.msra.mxu0 0.0
    %3523 = vmatprep.subr.mxu0 0.0
    %3524 = vmatpush2.msra.mxu0 0.0
    %3525 = vmatprep.subr.mxu0 0.0
    %3526 = vmatpush2.msra.mxu0 0.0
    %3527 = vmatprep.subr.mxu0 0.0
    %3528 = vmatpush2.msra.mxu0 0.0
    %3529 = vmatprep.subr.mxu0 0.0
    %3530 = vmatpush2.msra.mxu0 0.0
    %3531 = vmatprep.subr.mxu0 0.0
    %3532 = vmatpush2.msra.mxu0 0.0
    %3533 = vmatprep.mubr.f32.mxu0 0.0
    %3534 = vmatmul.mubr.f32.gmra.mxu0 %v3468
    %v3535 = vpop.f32.mrf.mxu0
    %v3536 = vadd.f32 %v3179, %v3535
    %v3537 = vpop.f32.mrf.mxu0
    %3538 = vdwg.mxu0
    %v3539 = vtanh.pop %v3536
    %3540 = vmatprep.subr.mxu0 0.0
    %3541 = vmatpush1.msra.mxu0 %v226
    %3542 = vmatprep.subr.mxu0 0.0
    %3543 = vmatpush1.msra.mxu0 %v225
    %3544 = vmatprep.subr.mxu0 0.0
    %3545 = vmatpush1.msra.mxu0 %v224
    %3546 = vmatprep.subr.mxu0 0.0
    %3547 = vmatpush1.msra.mxu0 %v223
    %3548 = vmatprep.subr.mxu0 0.0
    %3549 = vmatpush1.msra.mxu0 %v222
    %3550 = vmatprep.subr.mxu0 0.0
    %3551 = vmatpush1.msra.mxu0 %v221
    %3552 = vmatprep.subr.mxu0 0.0
    %3553 = vmatpush1.msra.mxu0 %v220
    %3554 = vmatprep.subr.mxu0 0.0
    %3555 = vmatpush1.msra.mxu0 %v219
    %3556 = vmatprep.subr.mxu0 0.0
    %3557 = vmatpush1.msra.mxu0 %v218
    %3558 = vmatprep.subr.mxu0 0.0
    %3559 = vmatpush1.msra.mxu0 %v217
    %3560 = vmatprep.subr.mxu0 0.0
    %3561 = vmatpush1.msra.mxu0 %v216
    %3562 = vmatprep.subr.mxu0 0.0
    %3563 = vmatpush1.msra.mxu0 %v215
    %3564 = vmatprep.subr.mxu0 0.0
    %3565 = vmatpush1.msra.mxu0 %v214
    %3566 = vmatprep.subr.mxu0 0.0
    %3567 = vmatpush1.msra.mxu0 %v213
    %3568 = vmatprep.subr.mxu0 0.0
    %3569 = vmatpush1.msra.mxu0 %v212
    %3570 = vmatprep.subr.mxu0 0.0
    %3571 = vmatpush1.msra.mxu0 %v211
    %3572 = vmatprep.subr.mxu0 0.0
    %3573 = vmatpush2.msra.mxu0 0.0
    %3574 = vmatprep.subr.mxu0 0.0
    %3575 = vmatpush2.msra.mxu0 0.0
    %3576 = vmatprep.subr.mxu0 0.0
    %3577 = vmatpush2.msra.mxu0 0.0
    %3578 = vmatprep.subr.mxu0 0.0
    %3579 = vmatpush2.msra.mxu0 0.0
    %3580 = vmatprep.subr.mxu0 0.0
    %3581 = vmatpush2.msra.mxu0 0.0
    %3582 = vmatprep.subr.mxu0 0.0
    %3583 = vmatpush2.msra.mxu0 0.0
    %3584 = vmatprep.subr.mxu0 0.0
    %3585 = vmatpush2.msra.mxu0 0.0
    %3586 = vmatprep.subr.mxu0 0.0
    %3587 = vmatpush2.msra.mxu0 0.0
    %3588 = vmatprep.subr.mxu0 0.0
    %3589 = vmatpush2.msra.mxu0 0.0
    %3590 = vmatprep.subr.mxu0 0.0
    %3591 = vmatpush2.msra.mxu0 0.0
    %3592 = vmatprep.subr.mxu0 0.0
    %3593 = vmatpush2.msra.mxu0 0.0
    %3594 = vmatprep.subr.mxu0 0.0
    %3595 = vmatpush2.msra.mxu0 0.0
    %3596 = vmatprep.subr.mxu0 0.0
    %3597 = vmatpush2.msra.mxu0 0.0
    %3598 = vmatprep.subr.mxu0 0.0
    %3599 = vmatpush2.msra.mxu0 0.0
    %3600 = vmatprep.subr.mxu0 0.0
    %3601 = vmatpush2.msra.mxu0 0.0
    %3602 = vmatprep.subr.mxu0 0.0
    %3603 = vmatpush2.msra.mxu0 0.0
    %3604 = vmatprep.mubr.f32.mxu0 0.0
    %3605 = vmatmul.mubr.f32.gmra.mxu0 %v3539
    %v3606 = vpop.f32.mrf.mxu0
    %v3607 = vadd.f32 0.0, %v3606
    %v3608 = vpop.f32.mrf.mxu0
    %3609 = vdwg.mxu0
    %v3610 = vmul.f32 %v663, %v3607
    %v3611 = vadd.f32 %v3171, %v3610
    %3612 = vmatprep.subr.mxu0 0.0
    %3613 = vmatpush1.msra.mxu0 %v210
    %3614 = vmatprep.subr.mxu0 0.0
    %3615 = vmatpush1.msra.mxu0 %v209
    %3616 = vmatprep.subr.mxu0 0.0
    %3617 = vmatpush1.msra.mxu0 %v208
    %3618 = vmatprep.subr.mxu0 0.0
    %3619 = vmatpush1.msra.mxu0 %v207
    %3620 = vmatprep.subr.mxu0 0.0
    %3621 = vmatpush1.msra.mxu0 %v206
    %3622 = vmatprep.subr.mxu0 0.0
    %3623 = vmatpush1.msra.mxu0 %v205
    %3624 = vmatprep.subr.mxu0 0.0
    %3625 = vmatpush1.msra.mxu0 %v204
    %3626 = vmatprep.subr.mxu0 0.0
    %3627 = vmatpush1.msra.mxu0 %v203
    %3628 = vmatprep.subr.mxu0 0.0
    %3629 = vmatpush1.msra.mxu0 %v202
    %3630 = vmatprep.subr.mxu0 0.0
    %3631 = vmatpush1.msra.mxu0 %v201
    %3632 = vmatprep.subr.mxu0 0.0
    %3633 = vmatpush1.msra.mxu0 %v200
    %3634 = vmatprep.subr.mxu0 0.0
    %3635 = vmatpush1.msra.mxu0 %v199
    %3636 = vmatprep.subr.mxu0 0.0
    %3637 = vmatpush1.msra.mxu0 %v198
    %3638 = vmatprep.subr.mxu0 0.0
    %3639 = vmatpush1.msra.mxu0 %v197
    %3640 = vmatprep.subr.mxu0 0.0
    %3641 = vmatpush1.msra.mxu0 %v196
    %3642 = vmatprep.subr.mxu0 0.0
    %3643 = vmatpush1.msra.mxu0 %v195
    %3644 = vmatprep.subr.mxu0 0.0
    %3645 = vmatpush2.msra.mxu0 0.0
    %3646 = vmatprep.subr.mxu0 0.0
    %3647 = vmatpush2.msra.mxu0 0.0
    %3648 = vmatprep.subr.mxu0 0.0
    %3649 = vmatpush2.msra.mxu0 0.0
    %3650 = vmatprep.subr.mxu0 0.0
    %3651 = vmatpush2.msra.mxu0 0.0
    %3652 = vmatprep.subr.mxu0 0.0
    %3653 = vmatpush2.msra.mxu0 0.0
    %3654 = vmatprep.subr.mxu0 0.0
    %3655 = vmatpush2.msra.mxu0 0.0
    %3656 = vmatprep.subr.mxu0 0.0
    %3657 = vmatpush2.msra.mxu0 0.0
    %3658 = vmatprep.subr.mxu0 0.0
    %3659 = vmatpush2.msra.mxu0 0.0
    %3660 = vmatprep.subr.mxu0 0.0
    %3661 = vmatpush2.msra.mxu0 0.0
    %3662 = vmatprep.subr.mxu0 0.0
    %3663 = vmatpush2.msra.mxu0 0.0
    %3664 = vmatprep.subr.mxu0 0.0
    %3665 = vmatpush2.msra.mxu0 0.0
    %3666 = vmatprep.subr.mxu0 0.0
    %3667 = vmatpush2.msra.mxu0 0.0
    %3668 = vmatprep.subr.mxu0 0.0
    %3669 = vmatpush2.msra.mxu0 0.0
    %3670 = vmatprep.subr.mxu0 0.0
    %3671 = vmatpush2.msra.mxu0 0.0
    %3672 = vmatprep.subr.mxu0 0.0
    %3673 = vmatpush2.msra.mxu0 0.0
    %3674 = vmatprep.subr.mxu0 0.0
    %3675 = vmatpush2.msra.mxu0 0.0
    %3676 = vmatprep.mubr.f32.mxu0 0.0
    %3677 = vmatmul.mubr.f32.gmra.mxu0 %v3611
    %v3678 = vpop.f32.mrf.mxu0
    %v3679 = vadd.f32 %v3182, %v3678
    %v3680 = vpop.f32.mrf.mxu0
    %3681 = vdwg.mxu0
    %v3682 = vtanh.pop %v3679
    %3683 = vmatprep.subr.mxu0 0.0
    %3684 = vmatpush1.msra.mxu0 %v226
    %3685 = vmatprep.subr.mxu0 0.0
    %3686 = vmatpush1.msra.mxu0 %v225
    %3687 = vmatprep.subr.mxu0 0.0
    %3688 = vmatpush1.msra.mxu0 %v224
    %3689 = vmatprep.subr.mxu0 0.0
    %3690 = vmatpush1.msra.mxu0 %v223
    %3691 = vmatprep.subr.mxu0 0.0
    %3692 = vmatpush1.msra.mxu0 %v222
    %3693 = vmatprep.subr.mxu0 0.0
    %3694 = vmatpush1.msra.mxu0 %v221
    %3695 = vmatprep.subr.mxu0 0.0
    %3696 = vmatpush1.msra.mxu0 %v220
    %3697 = vmatprep.subr.mxu0 0.0
    %3698 = vmatpush1.msra.mxu0 %v219
    %3699 = vmatprep.subr.mxu0 0.0
    %3700 = vmatpush1.msra.mxu0 %v218
    %3701 = vmatprep.subr.mxu0 0.0
    %3702 = vmatpush1.msra.mxu0 %v217
    %3703 = vmatprep.subr.mxu0 0.0
    %3704 = vmatpush1.msra.mxu0 %v216
    %3705 = vmatprep.subr.mxu0 0.0
    %3706 = vmatpush1.msra.mxu0 %v215
    %3707 = vmatprep.subr.mxu0 0.0
    %3708 = vmatpush1.msra.mxu0 %v214
    %3709 = vmatprep.subr.mxu0 0.0
    %3710 = vmatpush1.msra.mxu0 %v213
    %3711 = vmatprep.subr.mxu0 0.0
    %3712 = vmatpush1.msra.mxu0 %v212
    %3713 = vmatprep.subr.mxu0 0.0
    %3714 = vmatpush1.msra.mxu0 %v211
    %3715 = vmatprep.subr.mxu0 0.0
    %3716 = vmatpush2.msra.mxu0 0.0
    %3717 = vmatprep.subr.mxu0 0.0
    %3718 = vmatpush2.msra.mxu0 0.0
    %3719 = vmatprep.subr.mxu0 0.0
    %3720 = vmatpush2.msra.mxu0 0.0
    %3721 = vmatprep.subr.mxu0 0.0
    %3722 = vmatpush2.msra.mxu0 0.0
    %3723 = vmatprep.subr.mxu0 0.0
    %3724 = vmatpush2.msra.mxu0 0.0
    %3725 = vmatprep.subr.mxu0 0.0
    %3726 = vmatpush2.msra.mxu0 0.0
    %3727 = vmatprep.subr.mxu0 0.0
    %3728 = vmatpush2.msra.mxu0 0.0
    %3729 = vmatprep.subr.mxu0 0.0
    %3730 = vmatpush2.msra.mxu0 0.0
    %3731 = vmatprep.subr.mxu0 0.0
    %3732 = vmatpush2.msra.mxu0 0.0
    %3733 = vmatprep.subr.mxu0 0.0
    %3734 = vmatpush2.msra.mxu0 0.0
    %3735 = vmatprep.subr.mxu0 0.0
    %3736 = vmatpush2.msra.mxu0 0.0
    %3737 = vmatprep.subr.mxu0 0.0
    %3738 = vmatpush2.msra.mxu0 0.0
    %3739 = vmatprep.subr.mxu0 0.0
    %3740 = vmatpush2.msra.mxu0 0.0
    %3741 = vmatprep.subr.mxu0 0.0
    %3742 = vmatpush2.msra.mxu0 0.0
    %3743 = vmatprep.subr.mxu0 0.0
    %3744 = vmatpush2.msra.mxu0 0.0
    %3745 = vmatprep.subr.mxu0 0.0
    %3746 = vmatpush2.msra.mxu0 0.0
    %3747 = vmatprep.mubr.f32.mxu0 0.0
    %3748 = vmatmul.mubr.f32.gmra.mxu0 %v3682
    %v3749 = vpop.f32.mrf.mxu0
    %v3750 = vadd.f32 0.0, %v3749
    %v3751 = vpop.f32.mrf.mxu0
    %3752 = vdwg.mxu0
    %v3753 = vmul.f32 %v3464, 2.0
    %v3754 = vadd.f32 %v3321, %v3753
    %v3755 = vmul.f32 %v3607, 2.0
    %v3756 = vadd.f32 %v3754, %v3755
    %v3757 = vadd.f32 %v3756, %v3750
    %v3758 = vmul.f32 %v812, %v3757
    %v3759 = vadd.f32 %v3171, %v3758
    %v3760 = vtanh.pop %v3759
    %s3761 = scalar_lea.vmem [#allocation13], 48
    %3762 = vst [vmem:[%s3761] sm:$0xff] %v3760
    %s3763 = sld [smem:[#allocation3 + $0x6]]
    %v3764 = vstv %s3763
    %v3765 = vadd.f32 %v192, %v3764
    %s3766 = sadd.f32 %s3763, %s99
    %v3767 = vstv %s3766
    %v3768 = vadd.f32 %v192, %v3767
    %s3769 = sadd.f32 %s3763, %s98
    %v3770 = vstv %s3769
    %v3771 = vadd.f32 %v192, %v3770
    %3772 = vmatprep.subr.mxu0 0.0
    %3773 = vmatpush1.msra.mxu0 %v210
    %3774 = vmatprep.subr.mxu0 0.0
    %3775 = vmatpush1.msra.mxu0 %v209
    %3776 = vmatprep.subr.mxu0 0.0
    %3777 = vmatpush1.msra.mxu0 %v208
    %3778 = vmatprep.subr.mxu0 0.0
    %3779 = vmatpush1.msra.mxu0 %v207
    %3780 = vmatprep.subr.mxu0 0.0
    %3781 = vmatpush1.msra.mxu0 %v206
    %3782 = vmatprep.subr.mxu0 0.0
    %3783 = vmatpush1.msra.mxu0 %v205
    %3784 = vmatprep.subr.mxu0 0.0
    %3785 = vmatpush1.msra.mxu0 %v204
    %3786 = vmatprep.subr.mxu0 0.0
    %3787 = vmatpush1.msra.mxu0 %v203
    %3788 = vmatprep.subr.mxu0 0.0
    %3789 = vmatpush1.msra.mxu0 %v202
    %3790 = vmatprep.subr.mxu0 0.0
    %3791 = vmatpush1.msra.mxu0 %v201
    %3792 = vmatprep.subr.mxu0 0.0
    %3793 = vmatpush1.msra.mxu0 %v200
    %3794 = vmatprep.subr.mxu0 0.0
    %3795 = vmatpush1.msra.mxu0 %v199
    %3796 = vmatprep.subr.mxu0 0.0
    %3797 = vmatpush1.msra.mxu0 %v198
    %3798 = vmatprep.subr.mxu0 0.0
    %3799 = vmatpush1.msra.mxu0 %v197
    %3800 = vmatprep.subr.mxu0 0.0
    %3801 = vmatpush1.msra.mxu0 %v196
    %3802 = vmatprep.subr.mxu0 0.0
    %3803 = vmatpush1.msra.mxu0 %v195
    %3804 = vmatprep.subr.mxu0 0.0
    %3805 = vmatpush2.msra.mxu0 0.0
    %3806 = vmatprep.subr.mxu0 0.0
    %3807 = vmatpush2.msra.mxu0 0.0
    %3808 = vmatprep.subr.mxu0 0.0
    %3809 = vmatpush2.msra.mxu0 0.0
    %3810 = vmatprep.subr.mxu0 0.0
    %3811 = vmatpush2.msra.mxu0 0.0
    %3812 = vmatprep.subr.mxu0 0.0
    %3813 = vmatpush2.msra.mxu0 0.0
    %3814 = vmatprep.subr.mxu0 0.0
    %3815 = vmatpush2.msra.mxu0 0.0
    %3816 = vmatprep.subr.mxu0 0.0
    %3817 = vmatpush2.msra.mxu0 0.0
    %3818 = vmatprep.subr.mxu0 0.0
    %3819 = vmatpush2.msra.mxu0 0.0
    %3820 = vmatprep.subr.mxu0 0.0
    %3821 = vmatpush2.msra.mxu0 0.0
    %3822 = vmatprep.subr.mxu0 0.0
    %3823 = vmatpush2.msra.mxu0 0.0
    %3824 = vmatprep.subr.mxu0 0.0
    %3825 = vmatpush2.msra.mxu0 0.0
    %3826 = vmatprep.subr.mxu0 0.0
    %3827 = vmatpush2.msra.mxu0 0.0
    %3828 = vmatprep.subr.mxu0 0.0
    %3829 = vmatpush2.msra.mxu0 0.0
    %3830 = vmatprep.subr.mxu0 0.0
    %3831 = vmatpush2.msra.mxu0 0.0
    %3832 = vmatprep.subr.mxu0 0.0
    %3833 = vmatpush2.msra.mxu0 0.0
    %3834 = vmatprep.subr.mxu0 0.0
    %3835 = vmatpush2.msra.mxu0 0.0
    %3836 = vmatprep.mubr.f32.mxu0 0.0
    %3837 = vmatmul.mubr.f32.gmra.mxu0 %v3760
    %v3838 = vpop.f32.mrf.mxu0
    %v3839 = vadd.f32 %v3765, %v3838
    %v3840 = vpop.f32.mrf.mxu0
    %3841 = vdwg.mxu0
    %v3842 = vtanh.pop %v3839
    %3843 = vmatprep.subr.mxu0 0.0
    %3844 = vmatpush1.msra.mxu0 %v226
    %3845 = vmatprep.subr.mxu0 0.0
    %3846 = vmatpush1.msra.mxu0 %v225
    %3847 = vmatprep.subr.mxu0 0.0
    %3848 = vmatpush1.msra.mxu0 %v224
    %3849 = vmatprep.subr.mxu0 0.0
    %3850 = vmatpush1.msra.mxu0 %v223
    %3851 = vmatprep.subr.mxu0 0.0
    %3852 = vmatpush1.msra.mxu0 %v222
    %3853 = vmatprep.subr.mxu0 0.0
    %3854 = vmatpush1.msra.mxu0 %v221
    %3855 = vmatprep.subr.mxu0 0.0
    %3856 = vmatpush1.msra.mxu0 %v220
    %3857 = vmatprep.subr.mxu0 0.0
    %3858 = vmatpush1.msra.mxu0 %v219
    %3859 = vmatprep.subr.mxu0 0.0
    %3860 = vmatpush1.msra.mxu0 %v218
    %3861 = vmatprep.subr.mxu0 0.0
    %3862 = vmatpush1.msra.mxu0 %v217
    %3863 = vmatprep.subr.mxu0 0.0
    %3864 = vmatpush1.msra.mxu0 %v216
    %3865 = vmatprep.subr.mxu0 0.0
    %3866 = vmatpush1.msra.mxu0 %v215
    %3867 = vmatprep.subr.mxu0 0.0
    %3868 = vmatpush1.msra.mxu0 %v214
    %3869 = vmatprep.subr.mxu0 0.0
    %3870 = vmatpush1.msra.mxu0 %v213
    %3871 = vmatprep.subr.mxu0 0.0
    %3872 = vmatpush1.msra.mxu0 %v212
    %3873 = vmatprep.subr.mxu0 0.0
    %3874 = vmatpush1.msra.mxu0 %v211
    %3875 = vmatprep.subr.mxu0 0.0
    %3876 = vmatpush2.msra.mxu0 0.0
    %3877 = vmatprep.subr.mxu0 0.0
    %3878 = vmatpush2.msra.mxu0 0.0
    %3879 = vmatprep.subr.mxu0 0.0
    %3880 = vmatpush2.msra.mxu0 0.0
    %3881 = vmatprep.subr.mxu0 0.0
    %3882 = vmatpush2.msra.mxu0 0.0
    %3883 = vmatprep.subr.mxu0 0.0
    %3884 = vmatpush2.msra.mxu0 0.0
    %3885 = vmatprep.subr.mxu0 0.0
    %3886 = vmatpush2.msra.mxu0 0.0
    %3887 = vmatprep.subr.mxu0 0.0
    %3888 = vmatpush2.msra.mxu0 0.0
    %3889 = vmatprep.subr.mxu0 0.0
    %3890 = vmatpush2.msra.mxu0 0.0
    %3891 = vmatprep.subr.mxu0 0.0
    %3892 = vmatpush2.msra.mxu0 0.0
    %3893 = vmatprep.subr.mxu0 0.0
    %3894 = vmatpush2.msra.mxu0 0.0
    %3895 = vmatprep.subr.mxu0 0.0
    %3896 = vmatpush2.msra.mxu0 0.0
    %3897 = vmatprep.subr.mxu0 0.0
    %3898 = vmatpush2.msra.mxu0 0.0
    %3899 = vmatprep.subr.mxu0 0.0
    %3900 = vmatpush2.msra.mxu0 0.0
    %3901 = vmatprep.subr.mxu0 0.0
    %3902 = vmatpush2.msra.mxu0 0.0
    %3903 = vmatprep.subr.mxu0 0.0
    %3904 = vmatpush2.msra.mxu0 0.0
    %3905 = vmatprep.subr.mxu0 0.0
    %3906 = vmatpush2.msra.mxu0 0.0
    %3907 = vmatprep.mubr.f32.mxu0 0.0
    %3908 = vmatmul.mubr.f32.gmra.mxu0 %v3842
    %v3909 = vpop.f32.mrf.mxu0
    %v3910 = vadd.f32 0.0, %v3909
    %v3911 = vpop.f32.mrf.mxu0
    %3912 = vdwg.mxu0
    %v3913 = vmul.f32 %v376, %v3910
    %v3914 = vadd.f32 %v3760, %v3913
    %3915 = vmatprep.subr.mxu0 0.0
    %3916 = vmatpush1.msra.mxu0 %v210
    %3917 = vmatprep.subr.mxu0 0.0
    %3918 = vmatpush1.msra.mxu0 %v209
    %3919 = vmatprep.subr.mxu0 0.0
    %3920 = vmatpush1.msra.mxu0 %v208
    %3921 = vmatprep.subr.mxu0 0.0
    %3922 = vmatpush1.msra.mxu0 %v207
    %3923 = vmatprep.subr.mxu0 0.0
    %3924 = vmatpush1.msra.mxu0 %v206
    %3925 = vmatprep.subr.mxu0 0.0
    %3926 = vmatpush1.msra.mxu0 %v205
    %3927 = vmatprep.subr.mxu0 0.0
    %3928 = vmatpush1.msra.mxu0 %v204
    %3929 = vmatprep.subr.mxu0 0.0
    %3930 = vmatpush1.msra.mxu0 %v203
    %3931 = vmatprep.subr.mxu0 0.0
    %3932 = vmatpush1.msra.mxu0 %v202
    %3933 = vmatprep.subr.mxu0 0.0
    %3934 = vmatpush1.msra.mxu0 %v201
    %3935 = vmatprep.subr.mxu0 0.0
    %3936 = vmatpush1.msra.mxu0 %v200
    %3937 = vmatprep.subr.mxu0 0.0
    %3938 = vmatpush1.msra.mxu0 %v199
    %3939 = vmatprep.subr.mxu0 0.0
    %3940 = vmatpush1.msra.mxu0 %v198
    %3941 = vmatprep.subr.mxu0 0.0
    %3942 = vmatpush1.msra.mxu0 %v197
    %3943 = vmatprep.subr.mxu0 0.0
    %3944 = vmatpush1.msra.mxu0 %v196
    %3945 = vmatprep.subr.mxu0 0.0
    %3946 = vmatpush1.msra.mxu0 %v195
    %3947 = vmatprep.subr.mxu0 0.0
    %3948 = vmatpush2.msra.mxu0 0.0
    %3949 = vmatprep.subr.mxu0 0.0
    %3950 = vmatpush2.msra.mxu0 0.0
    %3951 = vmatprep.subr.mxu0 0.0
    %3952 = vmatpush2.msra.mxu0 0.0
    %3953 = vmatprep.subr.mxu0 0.0
    %3954 = vmatpush2.msra.mxu0 0.0
    %3955 = vmatprep.subr.mxu0 0.0
    %3956 = vmatpush2.msra.mxu0 0.0
    %3957 = vmatprep.subr.mxu0 0.0
    %3958 = vmatpush2.msra.mxu0 0.0
    %3959 = vmatprep.subr.mxu0 0.0
    %3960 = vmatpush2.msra.mxu0 0.0
    %3961 = vmatprep.subr.mxu0 0.0
    %3962 = vmatpush2.msra.mxu0 0.0
    %3963 = vmatprep.subr.mxu0 0.0
    %3964 = vmatpush2.msra.mxu0 0.0
    %3965 = vmatprep.subr.mxu0 0.0
    %3966 = vmatpush2.msra.mxu0 0.0
    %3967 = vmatprep.subr.mxu0 0.0
    %3968 = vmatpush2.msra.mxu0 0.0
    %3969 = vmatprep.subr.mxu0 0.0
    %3970 = vmatpush2.msra.mxu0 0.0
    %3971 = vmatprep.subr.mxu0 0.0
    %3972 = vmatpush2.msra.mxu0 0.0
    %3973 = vmatprep.subr.mxu0 0.0
    %3974 = vmatpush2.msra.mxu0 0.0
    %3975 = vmatprep.subr.mxu0 0.0
    %3976 = vmatpush2.msra.mxu0 0.0
    %3977 = vmatprep.subr.mxu0 0.0
    %3978 = vmatpush2.msra.mxu0 0.0
    %3979 = vmatprep.mubr.f32.mxu0 0.0
    %3980 = vmatmul.mubr.f32.gmra.mxu0 %v3914
    %v3981 = vpop.f32.mrf.mxu0
    %v3982 = vadd.f32 %v3768, %v3981
    %v3983 = vpop.f32.mrf.mxu0
    %3984 = vdwg.mxu0
    %v3985 = vtanh.pop %v3982
    %3986 = vmatprep.subr.mxu0 0.0
    %3987 = vmatpush1.msra.mxu0 %v226
    %3988 = vmatprep.subr.mxu0 0.0
    %3989 = vmatpush1.msra.mxu0 %v225
    %3990 = vmatprep.subr.mxu0 0.0
    %3991 = vmatpush1.msra.mxu0 %v224
    %3992 = vmatprep.subr.mxu0 0.0
    %3993 = vmatpush1.msra.mxu0 %v223
    %3994 = vmatprep.subr.mxu0 0.0
    %3995 = vmatpush1.msra.mxu0 %v222
    %3996 = vmatprep.subr.mxu0 0.0
    %3997 = vmatpush1.msra.mxu0 %v221
    %3998 = vmatprep.subr.mxu0 0.0
    %3999 = vmatpush1.msra.mxu0 %v220
    %4000 = vmatprep.subr.mxu0 0.0
    %4001 = vmatpush1.msra.mxu0 %v219
    %4002 = vmatprep.subr.mxu0 0.0
    %4003 = vmatpush1.msra.mxu0 %v218
    %4004 = vmatprep.subr.mxu0 0.0
    %4005 = vmatpush1.msra.mxu0 %v217
    %4006 = vmatprep.subr.mxu0 0.0
    %4007 = vmatpush1.msra.mxu0 %v216
    %4008 = vmatprep.subr.mxu0 0.0
    %4009 = vmatpush1.msra.mxu0 %v215
    %4010 = vmatprep.subr.mxu0 0.0
    %4011 = vmatpush1.msra.mxu0 %v214
    %4012 = vmatprep.subr.mxu0 0.0
    %4013 = vmatpush1.msra.mxu0 %v213
    %4014 = vmatprep.subr.mxu0 0.0
    %4015 = vmatpush1.msra.mxu0 %v212
    %4016 = vmatprep.subr.mxu0 0.0
    %4017 = vmatpush1.msra.mxu0 %v211
    %4018 = vmatprep.subr.mxu0 0.0
    %4019 = vmatpush2.msra.mxu0 0.0
    %4020 = vmatprep.subr.mxu0 0.0
    %4021 = vmatpush2.msra.mxu0 0.0
    %4022 = vmatprep.subr.mxu0 0.0
    %4023 = vmatpush2.msra.mxu0 0.0
    %4024 = vmatprep.subr.mxu0 0.0
    %4025 = vmatpush2.msra.mxu0 0.0
    %4026 = vmatprep.subr.mxu0 0.0
    %4027 = vmatpush2.msra.mxu0 0.0
    %4028 = vmatprep.subr.mxu0 0.0
    %4029 = vmatpush2.msra.mxu0 0.0
    %4030 = vmatprep.subr.mxu0 0.0
    %4031 = vmatpush2.msra.mxu0 0.0
    %4032 = vmatprep.subr.mxu0 0.0
    %4033 = vmatpush2.msra.mxu0 0.0
    %4034 = vmatprep.subr.mxu0 0.0
    %4035 = vmatpush2.msra.mxu0 0.0
    %4036 = vmatprep.subr.mxu0 0.0
    %4037 = vmatpush2.msra.mxu0 0.0
    %4038 = vmatprep.subr.mxu0 0.0
    %4039 = vmatpush2.msra.mxu0 0.0
    %4040 = vmatprep.subr.mxu0 0.0
    %4041 = vmatpush2.msra.mxu0 0.0
    %4042 = vmatprep.subr.mxu0 0.0
    %4043 = vmatpush2.msra.mxu0 0.0
    %4044 = vmatprep.subr.mxu0 0.0
    %4045 = vmatpush2.msra.mxu0 0.0
    %4046 = vmatprep.subr.mxu0 0.0
    %4047 = vmatpush2.msra.mxu0 0.0
    %4048 = vmatprep.subr.mxu0 0.0
    %4049 = vmatpush2.msra.mxu0 0.0
    %4050 = vmatprep.mubr.f32.mxu0 0.0
    %4051 = vmatmul.mubr.f32.gmra.mxu0 %v3985
    %v4052 = vpop.f32.mrf.mxu0
    %v4053 = vadd.f32 0.0, %v4052
    %v4054 = vpop.f32.mrf.mxu0
    %4055 = vdwg.mxu0
    %v4056 = vmul.f32 %v376, %v4053
    %v4057 = vadd.f32 %v3760, %v4056
    %4058 = vmatprep.subr.mxu0 0.0
    %4059 = vmatpush1.msra.mxu0 %v210
    %4060 = vmatprep.subr.mxu0 0.0
    %4061 = vmatpush1.msra.mxu0 %v209
    %4062 = vmatprep.subr.mxu0 0.0
    %4063 = vmatpush1.msra.mxu0 %v208
    %4064 = vmatprep.subr.mxu0 0.0
    %4065 = vmatpush1.msra.mxu0 %v207
    %4066 = vmatprep.subr.mxu0 0.0
    %4067 = vmatpush1.msra.mxu0 %v206
    %4068 = vmatprep.subr.mxu0 0.0
    %4069 = vmatpush1.msra.mxu0 %v205
    %4070 = vmatprep.subr.mxu0 0.0
    %4071 = vmatpush1.msra.mxu0 %v204
    %4072 = vmatprep.subr.mxu0 0.0
    %4073 = vmatpush1.msra.mxu0 %v203
    %4074 = vmatprep.subr.mxu0 0.0
    %4075 = vmatpush1.msra.mxu0 %v202
    %4076 = vmatprep.subr.mxu0 0.0
    %4077 = vmatpush1.msra.mxu0 %v201
    %4078 = vmatprep.subr.mxu0 0.0
    %4079 = vmatpush1.msra.mxu0 %v200
    %4080 = vmatprep.subr.mxu0 0.0
    %4081 = vmatpush1.msra.mxu0 %v199
    %4082 = vmatprep.subr.mxu0 0.0
    %4083 = vmatpush1.msra.mxu0 %v198
    %4084 = vmatprep.subr.mxu0 0.0
    %4085 = vmatpush1.msra.mxu0 %v197
    %4086 = vmatprep.subr.mxu0 0.0
    %4087 = vmatpush1.msra.mxu0 %v196
    %4088 = vmatprep.subr.mxu0 0.0
    %4089 = vmatpush1.msra.mxu0 %v195
    %4090 = vmatprep.subr.mxu0 0.0
    %4091 = vmatpush2.msra.mxu0 0.0
    %4092 = vmatprep.subr.mxu0 0.0
    %4093 = vmatpush2.msra.mxu0 0.0
    %4094 = vmatprep.subr.mxu0 0.0
    %4095 = vmatpush2.msra.mxu0 0.0
    %4096 = vmatprep.subr.mxu0 0.0
    %4097 = vmatpush2.msra.mxu0 0.0
    %4098 = vmatprep.subr.mxu0 0.0
    %4099 = vmatpush2.msra.mxu0 0.0
    %4100 = vmatprep.subr.mxu0 0.0
    %4101 = vmatpush2.msra.mxu0 0.0
    %4102 = vmatprep.subr.mxu0 0.0
    %4103 = vmatpush2.msra.mxu0 0.0
    %4104 = vmatprep.subr.mxu0 0.0
    %4105 = vmatpush2.msra.mxu0 0.0
    %4106 = vmatprep.subr.mxu0 0.0
    %4107 = vmatpush2.msra.mxu0 0.0
    %4108 = vmatprep.subr.mxu0 0.0
    %4109 = vmatpush2.msra.mxu0 0.0
    %4110 = vmatprep.subr.mxu0 0.0
    %4111 = vmatpush2.msra.mxu0 0.0
    %4112 = vmatprep.subr.mxu0 0.0
    %4113 = vmatpush2.msra.mxu0 0.0
    %4114 = vmatprep.subr.mxu0 0.0
    %4115 = vmatpush2.msra.mxu0 0.0
    %4116 = vmatprep.subr.mxu0 0.0
    %4117 = vmatpush2.msra.mxu0 0.0
    %4118 = vmatprep.subr.mxu0 0.0
    %4119 = vmatpush2.msra.mxu0 0.0
    %4120 = vmatprep.subr.mxu0 0.0
    %4121 = vmatpush2.msra.mxu0 0.0
    %4122 = vmatprep.mubr.f32.mxu0 0.0
    %4123 = vmatmul.mubr.f32.gmra.mxu0 %v4057
    %v4124 = vpop.f32.mrf.mxu0
    %v4125 = vadd.f32 %v3768, %v4124
    %v4126 = vpop.f32.mrf.mxu0
    %4127 = vdwg.mxu0
    %v4128 = vtanh.pop %v4125
    %4129 = vmatprep.subr.mxu0 0.0
    %4130 = vmatpush1.msra.mxu0 %v226
    %4131 = vmatprep.subr.mxu0 0.0
    %4132 = vmatpush1.msra.mxu0 %v225
    %4133 = vmatprep.subr.mxu0 0.0
    %4134 = vmatpush1.msra.mxu0 %v224
    %4135 = vmatprep.subr.mxu0 0.0
    %4136 = vmatpush1.msra.mxu0 %v223
    %4137 = vmatprep.subr.mxu0 0.0
    %4138 = vmatpush1.msra.mxu0 %v222
    %4139 = vmatprep.subr.mxu0 0.0
    %4140 = vmatpush1.msra.mxu0 %v221
    %4141 = vmatprep.subr.mxu0 0.0
    %4142 = vmatpush1.msra.mxu0 %v220
    %4143 = vmatprep.subr.mxu0 0.0
    %4144 = vmatpush1.msra.mxu0 %v219
    %4145 = vmatprep.subr.mxu0 0.0
    %4146 = vmatpush1.msra.mxu0 %v218
    %4147 = vmatprep.subr.mxu0 0.0
    %4148 = vmatpush1.msra.mxu0 %v217
    %4149 = vmatprep.subr.mxu0 0.0
    %4150 = vmatpush1.msra.mxu0 %v216
    %4151 = vmatprep.subr.mxu0 0.0
    %4152 = vmatpush1.msra.mxu0 %v215
    %4153 = vmatprep.subr.mxu0 0.0
    %4154 = vmatpush1.msra.mxu0 %v214
    %4155 = vmatprep.subr.mxu0 0.0
    %4156 = vmatpush1.msra.mxu0 %v213
    %4157 = vmatprep.subr.mxu0 0.0
    %4158 = vmatpush1.msra.mxu0 %v212
    %4159 = vmatprep.subr.mxu0 0.0
    %4160 = vmatpush1.msra.mxu0 %v211
    %4161 = vmatprep.subr.mxu0 0.0
    %4162 = vmatpush2.msra.mxu0 0.0
    %4163 = vmatprep.subr.mxu0 0.0
    %4164 = vmatpush2.msra.mxu0 0.0
    %4165 = vmatprep.subr.mxu0 0.0
    %4166 = vmatpush2.msra.mxu0 0.0
    %4167 = vmatprep.subr.mxu0 0.0
    %4168 = vmatpush2.msra.mxu0 0.0
    %4169 = vmatprep.subr.mxu0 0.0
    %4170 = vmatpush2.msra.mxu0 0.0
    %4171 = vmatprep.subr.mxu0 0.0
    %4172 = vmatpush2.msra.mxu0 0.0
    %4173 = vmatprep.subr.mxu0 0.0
    %4174 = vmatpush2.msra.mxu0 0.0
    %4175 = vmatprep.subr.mxu0 0.0
    %4176 = vmatpush2.msra.mxu0 0.0
    %4177 = vmatprep.subr.mxu0 0.0
    %4178 = vmatpush2.msra.mxu0 0.0
    %4179 = vmatprep.subr.mxu0 0.0
    %4180 = vmatpush2.msra.mxu0 0.0
    %4181 = vmatprep.subr.mxu0 0.0
    %4182 = vmatpush2.msra.mxu0 0.0
    %4183 = vmatprep.subr.mxu0 0.0
    %4184 = vmatpush2.msra.mxu0 0.0
    %4185 = vmatprep.subr.mxu0 0.0
    %4186 = vmatpush2.msra.mxu0 0.0
    %4187 = vmatprep.subr.mxu0 0.0
    %4188 = vmatpush2.msra.mxu0 0.0
    %4189 = vmatprep.subr.mxu0 0.0
    %4190 = vmatpush2.msra.mxu0 0.0
    %4191 = vmatprep.subr.mxu0 0.0
    %4192 = vmatpush2.msra.mxu0 0.0
    %4193 = vmatprep.mubr.f32.mxu0 0.0
    %4194 = vmatmul.mubr.f32.gmra.mxu0 %v4128
    %v4195 = vpop.f32.mrf.mxu0
    %v4196 = vadd.f32 0.0, %v4195
    %v4197 = vpop.f32.mrf.mxu0
    %4198 = vdwg.mxu0
    %v4199 = vmul.f32 %v663, %v4196
    %v4200 = vadd.f32 %v3760, %v4199
    %4201 = vmatprep.subr.mxu0 0.0
    %4202 = vmatpush1.msra.mxu0 %v210
    %4203 = vmatprep.subr.mxu0 0.0
    %4204 = vmatpush1.msra.mxu0 %v209
    %4205 = vmatprep.subr.mxu0 0.0
    %4206 = vmatpush1.msra.mxu0 %v208
    %4207 = vmatprep.subr.mxu0 0.0
    %4208 = vmatpush1.msra.mxu0 %v207
    %4209 = vmatprep.subr.mxu0 0.0
    %4210 = vmatpush1.msra.mxu0 %v206
    %4211 = vmatprep.subr.mxu0 0.0
    %4212 = vmatpush1.msra.mxu0 %v205
    %4213 = vmatprep.subr.mxu0 0.0
    %4214 = vmatpush1.msra.mxu0 %v204
    %4215 = vmatprep.subr.mxu0 0.0
    %4216 = vmatpush1.msra.mxu0 %v203
    %4217 = vmatprep.subr.mxu0 0.0
    %4218 = vmatpush1.msra.mxu0 %v202
    %4219 = vmatprep.subr.mxu0 0.0
    %4220 = vmatpush1.msra.mxu0 %v201
    %4221 = vmatprep.subr.mxu0 0.0
    %4222 = vmatpush1.msra.mxu0 %v200
    %4223 = vmatprep.subr.mxu0 0.0
    %4224 = vmatpush1.msra.mxu0 %v199
    %4225 = vmatprep.subr.mxu0 0.0
    %4226 = vmatpush1.msra.mxu0 %v198
    %4227 = vmatprep.subr.mxu0 0.0
    %4228 = vmatpush1.msra.mxu0 %v197
    %4229 = vmatprep.subr.mxu0 0.0
    %4230 = vmatpush1.msra.mxu0 %v196
    %4231 = vmatprep.subr.mxu0 0.0
    %4232 = vmatpush1.msra.mxu0 %v195
    %4233 = vmatprep.subr.mxu0 0.0
    %4234 = vmatpush2.msra.mxu0 0.0
    %4235 = vmatprep.subr.mxu0 0.0
    %4236 = vmatpush2.msra.mxu0 0.0
    %4237 = vmatprep.subr.mxu0 0.0
    %4238 = vmatpush2.msra.mxu0 0.0
    %4239 = vmatprep.subr.mxu0 0.0
    %4240 = vmatpush2.msra.mxu0 0.0
    %4241 = vmatprep.subr.mxu0 0.0
    %4242 = vmatpush2.msra.mxu0 0.0
    %4243 = vmatprep.subr.mxu0 0.0
    %4244 = vmatpush2.msra.mxu0 0.0
    %4245 = vmatprep.subr.mxu0 0.0
    %4246 = vmatpush2.msra.mxu0 0.0
    %4247 = vmatprep.subr.mxu0 0.0
    %4248 = vmatpush2.msra.mxu0 0.0
    %4249 = vmatprep.subr.mxu0 0.0
    %4250 = vmatpush2.msra.mxu0 0.0
    %4251 = vmatprep.subr.mxu0 0.0
    %4252 = vmatpush2.msra.mxu0 0.0
    %4253 = vmatprep.subr.mxu0 0.0
    %4254 = vmatpush2.msra.mxu0 0.0
    %4255 = vmatprep.subr.mxu0 0.0
    %4256 = vmatpush2.msra.mxu0 0.0
    %4257 = vmatprep.subr.mxu0 0.0
    %4258 = vmatpush2.msra.mxu0 0.0
    %4259 = vmatprep.subr.mxu0 0.0
    %4260 = vmatpush2.msra.mxu0 0.0
    %4261 = vmatprep.subr.mxu0 0.0
    %4262 = vmatpush2.msra.mxu0 0.0
    %4263 = vmatprep.subr.mxu0 0.0
    %4264 = vmatpush2.msra.mxu0 0.0
    %4265 = vmatprep.mubr.f32.mxu0 0.0
    %4266 = vmatmul.mubr.f32.gmra.mxu0 %v4200
    %v4267 = vpop.f32.mrf.mxu0
    %v4268 = vadd.f32 %v3771, %v4267
    %v4269 = vpop.f32.mrf.mxu0
    %4270 = vdwg.mxu0
    %v4271 = vtanh.pop %v4268
    %4272 = vmatprep.subr.mxu0 0.0
    %4273 = vmatpush1.msra.mxu0 %v226
    %4274 = vmatprep.subr.mxu0 0.0
    %4275 = vmatpush1.msra.mxu0 %v225
    %4276 = vmatprep.subr.mxu0 0.0
    %4277 = vmatpush1.msra.mxu0 %v224
    %4278 = vmatprep.subr.mxu0 0.0
    %4279 = vmatpush1.msra.mxu0 %v223
    %4280 = vmatprep.subr.mxu0 0.0
    %4281 = vmatpush1.msra.mxu0 %v222
    %4282 = vmatprep.subr.mxu0 0.0
    %4283 = vmatpush1.msra.mxu0 %v221
    %4284 = vmatprep.subr.mxu0 0.0
    %4285 = vmatpush1.msra.mxu0 %v220
    %4286 = vmatprep.subr.mxu0 0.0
    %4287 = vmatpush1.msra.mxu0 %v219
    %4288 = vmatprep.subr.mxu0 0.0
    %4289 = vmatpush1.msra.mxu0 %v218
    %4290 = vmatprep.subr.mxu0 0.0
    %4291 = vmatpush1.msra.mxu0 %v217
    %4292 = vmatprep.subr.mxu0 0.0
    %4293 = vmatpush1.msra.mxu0 %v216
    %4294 = vmatprep.subr.mxu0 0.0
    %4295 = vmatpush1.msra.mxu0 %v215
    %4296 = vmatprep.subr.mxu0 0.0
    %4297 = vmatpush1.msra.mxu0 %v214
    %4298 = vmatprep.subr.mxu0 0.0
    %4299 = vmatpush1.msra.mxu0 %v213
    %4300 = vmatprep.subr.mxu0 0.0
    %4301 = vmatpush1.msra.mxu0 %v212
    %4302 = vmatprep.subr.mxu0 0.0
    %4303 = vmatpush1.msra.mxu0 %v211
    %4304 = vmatprep.subr.mxu0 0.0
    %4305 = vmatpush2.msra.mxu0 0.0
    %4306 = vmatprep.subr.mxu0 0.0
    %4307 = vmatpush2.msra.mxu0 0.0
    %4308 = vmatprep.subr.mxu0 0.0
    %4309 = vmatpush2.msra.mxu0 0.0
    %4310 = vmatprep.subr.mxu0 0.0
    %4311 = vmatpush2.msra.mxu0 0.0
    %4312 = vmatprep.subr.mxu0 0.0
    %4313 = vmatpush2.msra.mxu0 0.0
    %4314 = vmatprep.subr.mxu0 0.0
    %4315 = vmatpush2.msra.mxu0 0.0
    %4316 = vmatprep.subr.mxu0 0.0
    %4317 = vmatpush2.msra.mxu0 0.0
    %4318 = vmatprep.subr.mxu0 0.0
    %4319 = vmatpush2.msra.mxu0 0.0
    %4320 = vmatprep.subr.mxu0 0.0
    %4321 = vmatpush2.msra.mxu0 0.0
    %4322 = vmatprep.subr.mxu0 0.0
    %4323 = vmatpush2.msra.mxu0 0.0
    %4324 = vmatprep.subr.mxu0 0.0
    %4325 = vmatpush2.msra.mxu0 0.0
    %4326 = vmatprep.subr.mxu0 0.0
    %4327 = vmatpush2.msra.mxu0 0.0
    %4328 = vmatprep.subr.mxu0 0.0
    %4329 = vmatpush2.msra.mxu0 0.0
    %4330 = vmatprep.subr.mxu0 0.0
    %4331 = vmatpush2.msra.mxu0 0.0
    %4332 = vmatprep.subr.mxu0 0.0
    %4333 = vmatpush2.msra.mxu0 0.0
    %4334 = vmatprep.subr.mxu0 0.0
    %4335 = vmatpush2.msra.mxu0 0.0
    %4336 = vmatprep.mubr.f32.mxu0 0.0
    %4337 = vmatmul.mubr.f32.gmra.mxu0 %v4271
    %v4338 = vpop.f32.mrf.mxu0
    %v4339 = vadd.f32 0.0, %v4338
    %v4340 = vpop.f32.mrf.mxu0
    %4341 = vdwg.mxu0
    %v4342 = vmul.f32 %v4053, 2.0
    %v4343 = vadd.f32 %v3910, %v4342
    %v4344 = vmul.f32 %v4196, 2.0
    %v4345 = vadd.f32 %v4343, %v4344
    %v4346 = vadd.f32 %v4345, %v4339
    %v4347 = vmul.f32 %v812, %v4346
    %v4348 = vadd.f32 %v3760, %v4347
    %v4349 = vtanh.pop %v4348
    %s4350 = scalar_lea.vmem [#allocation13], 56
    %4351 = vst [vmem:[%s4350] sm:$0xff] %v4349
    // Predicated region
    $region46: #{tpu_custom_call.1} parent=1 // pred_check
      _
    $region47: #{tpu_custom_call.1} parent=1 // pred_check_branch
      %4353 = sbr.rel (0) target = $region49
    $region48: #{tpu_custom_call.1} parent=1 // pred_region
      %s4355 = ssub.s32 1024, 1024
      %4356 = vsyncadd [#allocation6], %s4355
      %s4357 = sshll.u32 [#allocation13], 4
      %s4358 = int_to_ptr.vmem [resolvable:$true] %s4357
      %4363 = dma.vmem_to_hbm [thread:$0]  %s4358, 1024, %s7, [#allocation6], 128, 128, 8
    $region49: #{tpu_custom_call.1} parent=1 // pred_fallthru
      _
    // Predicated region
    $region50: #{tpu_custom_call.1} parent=1 // pred_check
      _
    $region51: #{tpu_custom_call.1} parent=1 // pred_check_branch
      %4365 = sbr.rel (0) target = $region53
    $region52: #{tpu_custom_call.1} parent=1 // pred_region
      %4366 = dma.done [#allocation6], 1024
    $region53: #{tpu_custom_call.1} parent=1 // pred_fallthru
      _
    %4367 = vsyncpa [#allocation5], 1
    %4368 = vsyncpa [#allocation8], 1
    %4369 = vsyncpa [#allocation11], 1
    %4370 = vsyncpa [#allocation6], 1

</llo_original>
